<compile_context>
chip_gen: v7x
topology: tpu7x:2x2x1
jax: 0.10.0
libtpu: 0.0.40
codegen_flags: <defaults>
</compile_context>

<pallas_src>
import functools
import math

import jax
import jax.numpy as jnp
from jax.experimental import pallas as pl
from jax.experimental.pallas import tpu as pltpu

EMB = 100                      # true embedding / hidden size (fixed by the torch module)
P = 128                        # lane-padded feature size (multiple of 128-lane vreg)
G3 = 3 * P                     # padded width of the 3 stacked GRU gates
SCALE = 1.0 / math.sqrt(EMB)   # attention scale uses the true dim (padding cols are zero)
MM_DTYPE = jnp.bfloat16        # MXU operand dtype (f32 accumulation)


# ------------------------------ fused kernel --------------------------------
def _fused_kernel(x_ref, wx_ref, bgi_ref, whh_ref, bhn_ref, auxw_ref, auxb_ref,
                  wqkv2_ref, noise_ref, out_ref, gru_sc, *, is_train: bool):
    B, T, Pd = x_ref.shape
    G = 3 * Pd
    f32 = jnp.float32

    # ---- 1) one fused x-side projection: GRU input gates (r|z|n) + aux Q|K|V ----
    xf = x_ref[...].reshape(B * T, Pd).astype(MM_DTYPE)
    proj = jnp.dot(xf, wx_ref[...], preferred_element_type=f32)           # (B*T, 6P)
    gi = (proj[:, :G] + bgi_ref[...]).reshape(B, T, G)                    # gates + folded biases
    q_a = proj[:, G + 0 * Pd:G + 1 * Pd].reshape(B, T, Pd)
    k_a = proj[:, G + 1 * Pd:G + 2 * Pd].reshape(B, T, Pd)
    v_a = proj[:, G + 2 * Pd:G + 3 * Pd].reshape(B, T, Pd)

    # ---- 2) GRU recurrence, fully unrolled (T small & static) ------------------
    # Only h @ W_hh + the VPU/EUP gate math sits on the serial dependence chain.
    whh = whh_ref[...]
    b_hn = bhn_ref[...]
    h = jnp.zeros((B, Pd), f32)
    for t in range(T):                                    # static unroll
        gh = jnp.dot(h.astype(MM_DTYPE), whh, preferred_element_type=f32)  # (B, 3P)
        gi_t = gi[:, t, :]
        r = jax.nn.sigmoid(gi_t[:, :Pd] + gh[:, :Pd])
        z = jax.nn.sigmoid(gi_t[:, Pd:2 * Pd] + gh[:, Pd:2 * Pd])
        n = jnp.tanh(gi_t[:, 2 * Pd:] + r * (gh[:, 2 * Pd:] + b_hn))
        h = (1.0 - z) * n + z * h
        gru_sc[:, t:t + 1, :] = h[:, None, :]             # lane-dense VMEM store
    gru_out = gru_sc[...]                                 # (B, T, P), stays in VMEM

    # ---- shared single-head scaled-dot-product attention -----------------------
    def _attn(q, k, v):
        s = jnp.einsum('btd,bsd->bts', q, k, preferred_element_type=f32) * SCALE
        m = jnp.max(s, axis=-1, keepdims=True)
        e = jnp.exp(s - m)
        den = jnp.sum(e, axis=-1, keepdims=True)
        w = e * pl.reciprocal(den, approx=True)           # EUP reciprocal
        return jnp.einsum('bts,bsd->btd', w, v, preferred_element_type=f32)

    # ---- 3) AuxiliaryNet: attn(x) -> Linear -> sigmoid -> gumbel gate ----------
    aux_out = _attn(q_a, k_a, v_a)                                        # (B, T, P)
    logit = jnp.sum(aux_out * auxw_ref[...], axis=-1, keepdims=True) + auxb_ref[...]
    p = jax.nn.sigmoid(logit)                                             # (B, T, 1)
    noise = noise_ref[...]
    if is_train:
        # softmax([1-p, p] + gumbel, tau=1)[..., 1] == sigmoid(2p - 1 + (G1 - G0))
        g = jax.nn.sigmoid(2.0 * p - 1.0 + noise)
    else:
        g = (noise < p).astype(f32)                       # Bernoulli(p) via uniform noise
    g_t = jnp.where(g > 0.2, 1.0, 0.0)                    # (B, T, 1)

    # ---- 4) gated self-attention over GRU outputs (fused Q|K|V matmul) ---------
    qkv2 = jnp.dot(gru_out.reshape(B * T, Pd).astype(MM_DTYPE), wqkv2_ref[...],
                   preferred_element_type=f32)                            # (B*T, 3P)
    q2 = qkv2[:, :Pd].reshape(B, T, Pd)
    k2 = qkv2[:, Pd:2 * Pd].reshape(B, T, Pd)
    v2 = qkv2[:, 2 * Pd:].reshape(B, T, Pd) * g_t
    out_ref[...] = _attn(q2, k2, v2).astype(out_ref.dtype)


# --------------------------- parameter handling ------------------------------
def _pad2(a, rows, cols):
    return jnp.pad(a, ((0, rows - a.shape[0]), (0, cols - a.shape[1])))


def _pad1(v):
    return jnp.pad(v, (0, P - v.shape[0]))


def init_params(key):
    """PyTorch-layout parameters (as torch.nn.GRU / Linear / attention hold them)."""
    ks = jax.random.split(key, 12)
    H = EMB

    def u(k, shape, fan):
        bound = 1.0 / math.sqrt(fan)
        return jax.random.uniform(k, shape, jnp.float32, -bound, bound)

    return {
        'gru_w_ih': u(ks[0], (3 * H, H), H), 'gru_w_hh': u(ks[1], (3 * H, H), H),
        'gru_b_ih': u(ks[2], (3 * H,), H), 'gru_b_hh': u(ks[3], (3 * H,), H),
        'aux_wq': u(ks[4], (H, H), H), 'aux_wk': u(ks[5], (H, H), H), 'aux_wv': u(ks[6], (H, H), H),
        'aux_lin_w': u(ks[7], (1, H), H), 'aux_lin_b': u(ks[8], (1,), H),
        'att_wq': u(ks[9], (H, H), H), 'att_wk': u(ks[10], (H, H), H), 'att_wv': u(ks[11], (H, H), H),
    }


def pack_params(params):
    """One-time conversion to the padded/fused kernel layout (call once, reuse)."""
    H = EMB
    w_ih_t = params['gru_w_ih'].T        # (D, 3H), PyTorch gate order r|z|n
    w_hh_t = params['gru_w_hh'].T        # (H, 3H)
    ih_gates = [_pad2(w_ih_t[:, g * H:(g + 1) * H], P, P) for g in range(3)]
    hh_gates = [_pad2(w_hh_t[:, g * H:(g + 1) * H], P, P) for g in range(3)]
    aux_qkv = [_pad2(params[k], P, P) for k in ('aux_wq', 'aux_wk', 'aux_wv')]
    att_qkv = [_pad2(params[k], P, P) for k in ('att_wq', 'att_wk', 'att_wv')]

    b_ih, b_hh = params['gru_b_ih'], params['gru_b_hh']
    # Fold r/z hidden biases into the hoisted input-projection bias; only the
    # n-gate hidden bias must remain inside the recurrence (it is scaled by r).
    b_gi = jnp.concatenate([_pad1(b_ih[:H] + b_hh[:H]),
                            _pad1(b_ih[H:2 * H] + b_hh[H:2 * H]),
                            _pad1(b_ih[2 * H:])]).reshape(1, G3)

    return {
        'w_x': jnp.concatenate(ih_gates + aux_qkv, axis=1).astype(MM_DTYPE),   # (P, 6P)
        'w_hh': jnp.concatenate(hh_gates, axis=1).astype(MM_DTYPE),            # (P, 3P)
        'w_qkv2': jnp.concatenate(att_qkv, axis=1).astype(MM_DTYPE),           # (P, 3P)
        'b_gi': b_gi.astype(jnp.float32),                                      # (1, 3P)
        'b_hh_n': _pad1(b_hh[2 * H:]).reshape(1, P).astype(jnp.float32),       # (1, P)
        'aux_lin_w': _pad2(params['aux_lin_w'], 1, P).astype(jnp.float32),     # (1, P)
        'aux_lin_b': params['aux_lin_b'].reshape(1, 1).astype(jnp.float32),    # (1, 1)
    }


# --------------------------------- forward -----------------------------------
def gru_module_forward(packed, x, key, *, is_train=True, batch_blocks=1):
    """Whole-module forward in ONE pallas_call.

    batch_blocks: set to 2 on v7x to shard the batch across its two TensorCores
    ("parallel" grid axis); keep 1 on v5e/v6e (single core), where splitting
    would run the weight-push-bound recurrence twice sequentially.
    """
    B, T, D = x.shape
    assert D == EMB and B % batch_blocks == 0
    Bb = B // batch_blocks

    xp = jnp.pad(x, ((0, 0), (0, 0), (0, P - D)))          # lane-pad features to 128
    if is_train:
        g01 = jax.random.gumbel(key, (B, T, 2), jnp.float32)
        noise = g01[..., 1:2] - g01[..., 0:1]              # G1 - G0
    else:
        noise = jax.random.uniform(key, (B, T, 1), jnp.float32)

    def rep(shape):                                        # replicated (non-batch) operand
        return pl.BlockSpec(shape, lambda b: (0,) * len(shape))

    grid_spec = pltpu.PrefetchScalarGridSpec(
        num_scalar_prefetch=0,
        grid=(batch_blocks,),
        in_specs=[
            pl.BlockSpec((Bb, T, P), lambda b: (b, 0, 0)),     # x (padded)
            rep((P, 6 * P)),                                   # [W_ih_r|z|n | Wq|Wk|Wv]_aux
            rep((1, G3)),                                      # folded input-gate biases
            rep((P, G3)),                                      # W_hh (r|z|n)
            rep((1, P)),                                       # b_hh_n
            rep((1, P)),                                       # aux linear weight
            rep((1, 1)),                                       # aux linear bias
            rep((P, G3)),                                      # [Wq|Wk|Wv] gated attention
            pl.BlockSpec((Bb, T, 1), lambda b: (b, 0, 0)),     # gumbel/uniform noise
        ],
        out_specs=pl.BlockSpec((Bb, T, P), lambda b: (b, 0, 0)),
        scratch_shapes=[pltpu.VMEM((Bb, T, P), jnp.float32)],  # GRU outputs stay in VMEM
    )

    out = pl.pallas_call(
        functools.partial(_fused_kernel, is_train=is_train),
        out_shape=jax.ShapeDtypeStruct((B, T, P), jnp.float32),
        grid_spec=grid_spec,
        compiler_params=pltpu.CompilerParams(dimension_semantics=("parallel",)),
    )(xp, packed['w_x'], packed['b_gi'], packed['w_hh'], packed['b_hh_n'],
      packed['aux_lin_w'], packed['aux_lin_b'], packed['w_qkv2'], noise)

    return out[:, :, :D]                                   # drop lane padding -> (B, T, 100)


if __name__ == "__main__":
    key = jax.random.PRNGKey(0)
    pkey, xkey, gkey = jax.random.split(key, 3)
    params = init_params(pkey)
    packed = pack_params(params)

    B, T = 2, 8
    x = jax.random.normal(xkey, (B, T, EMB), jnp.float32)   # batch-first GRU input

    out = gru_module_forward(packed, x, gkey, is_train=True)
    out = jax.block_until_ready(out)
    assert out.shape == (B, T, EMB) and out.dtype == jnp.float32
    print("KERNEL_OK")
</pallas_src>

<mosaic_0001>
module attributes {stable_mosaic.version = 11 : i64} {
  func.func @_fused_kernel(%arg0: i32, %arg1: memref<2x8x128xf32, #tpu.memory_space<vmem>>, %arg2: memref<128x768xbf16, #tpu.memory_space<vmem>>, %arg3: memref<1x384xf32, #tpu.memory_space<vmem>>, %arg4: memref<128x384xbf16, #tpu.memory_space<vmem>>, %arg5: memref<1x128xf32, #tpu.memory_space<vmem>>, %arg6: memref<1x128xf32, #tpu.memory_space<vmem>>, %arg7: memref<1x1xf32, #tpu.memory_space<vmem>>, %arg8: memref<128x384xbf16, #tpu.memory_space<vmem>>, %arg9: memref<2x8x1xf32, #tpu.memory_space<vmem>>, %arg10: memref<2x8x128xf32, #tpu.memory_space<vmem>>, %arg11: memref<2x8x128xf32, #tpu.memory_space<vmem>>) attributes {dimension_semantics = [#tpu.dimension_semantics<parallel>], iteration_bounds = array<i64: 1>, scalar_prefetch = 0 : i64, scratch_operands = 1 : i64, tpu.core_type = #tpu.core_type<tc>, window_params = [{transform_indices = @transform_0, window_bounds = array<i64: 2, 8, 128>}, {pipeline_mode = #tpu.pipeline_mode<synchronous>, transform_indices = @transform_1, window_bounds = array<i64: 128, 768>}, {pipeline_mode = #tpu.pipeline_mode<synchronous>, transform_indices = @transform_2, window_bounds = array<i64: 1, 384>}, {pipeline_mode = #tpu.pipeline_mode<synchronous>, transform_indices = @transform_3, window_bounds = array<i64: 128, 384>}, {pipeline_mode = #tpu.pipeline_mode<synchronous>, transform_indices = @transform_4, window_bounds = array<i64: 1, 128>}, {pipeline_mode = #tpu.pipeline_mode<synchronous>, transform_indices = @transform_5, window_bounds = array<i64: 1, 128>}, {pipeline_mode = #tpu.pipeline_mode<synchronous>, transform_indices = @transform_6, window_bounds = array<i64: 1, 1>}, {pipeline_mode = #tpu.pipeline_mode<synchronous>, transform_indices = @transform_7, window_bounds = array<i64: 128, 384>}, {transform_indices = @transform_8, window_bounds = array<i64: 2, 8, 1>}, {transform_indices = @transform_9, window_bounds = array<i64: 2, 8, 128>}]} {
    %c0 = arith.constant 0 : index
    %c0_0 = arith.constant 0 : index
    %c0_1 = arith.constant 0 : index
    %0 = vector.load %arg1[%c0, %c0_0, %c0_1] : memref<2x8x128xf32, #tpu.memory_space<vmem>>, vector<2x8x128xf32>
    %1 = vector.shape_cast %0 : vector<2x8x128xf32> to vector<16x128xf32>
    %2 = arith.truncf %1 : vector<16x128xf32> to vector<16x128xbf16>
    %c0_2 = arith.constant 0 : index
    %c0_3 = arith.constant 0 : index
    %3 = vector.load %arg2[%c0_2, %c0_3] : memref<128x768xbf16, #tpu.memory_space<vmem>>, vector<128x768xbf16>
    %cst = arith.constant dense<0.000000e+00> : vector<16x768xf32>
    %4 = tpu.matmul %2, %3, %cst {dimension_numbers = #tpu.dot_dimension_numbers<[1], [0], [0], [1], [0, 0, 1, 1], [], []>} : vector<16x128xbf16>, vector<128x768xbf16>, vector<16x768xf32> -> vector<16x768xf32>
    %5 = vector.extract_strided_slice %4 {offsets = [0, 0], sizes = [16, 384], strides = [1, 1]} : vector<16x768xf32> to vector<16x384xf32>
    %c0_4 = arith.constant 0 : index
    %c0_5 = arith.constant 0 : index
    %6 = vector.load %arg3[%c0_4, %c0_5] : memref<1x384xf32, #tpu.memory_space<vmem>>, vector<1x384xf32>
    %7 = vector.broadcast %6 : vector<1x384xf32> to vector<16x384xf32>
    %8 = arith.addf %5, %7 : vector<16x384xf32>
    %9 = vector.shape_cast %8 : vector<16x384xf32> to vector<2x8x384xf32>
    %10 = vector.extract_strided_slice %4 {offsets = [0, 384], sizes = [16, 128], strides = [1, 1]} : vector<16x768xf32> to vector<16x128xf32>
    %11 = vector.shape_cast %10 : vector<16x128xf32> to vector<2x8x128xf32>
    %12 = vector.extract_strided_slice %4 {offsets = [0, 512], sizes = [16, 128], strides = [1, 1]} : vector<16x768xf32> to vector<16x128xf32>
    %13 = vector.shape_cast %12 : vector<16x128xf32> to vector<2x8x128xf32>
    %14 = vector.extract_strided_slice %4 {offsets = [0, 640], sizes = [16, 128], strides = [1, 1]} : vector<16x768xf32> to vector<16x128xf32>
    %15 = vector.shape_cast %14 : vector<16x128xf32> to vector<2x8x128xf32>
    %c0_6 = arith.constant 0 : index
    %c0_7 = arith.constant 0 : index
    %16 = vector.load %arg4[%c0_6, %c0_7] : memref<128x384xbf16, #tpu.memory_space<vmem>>, vector<128x384xbf16>
    %c0_8 = arith.constant 0 : index
    %c0_9 = arith.constant 0 : index
    %17 = vector.load %arg5[%c0_8, %c0_9] : memref<1x128xf32, #tpu.memory_space<vmem>>, vector<1x128xf32>
    %cst_10 = arith.constant 0.000000e+00 : f32
    %18 = vector.broadcast %cst_10 : f32 to vector<2x128xf32>
    %19 = arith.truncf %18 : vector<2x128xf32> to vector<2x128xbf16>
    %cst_11 = arith.constant dense<0.000000e+00> : vector<2x384xf32>
    %20 = tpu.matmul %19, %16, %cst_11 {dimension_numbers = #tpu.dot_dimension_numbers<[1], [0], [0], [1], [0, 0, 1, 1], [], []>} : vector<2x128xbf16>, vector<128x384xbf16>, vector<2x384xf32> -> vector<2x384xf32>
    %21 = vector.extract_strided_slice %9 {offsets = [0, 0, 0], sizes = [2, 1, 384], strides = [1, 1, 1]} : vector<2x8x384xf32> to vector<2x1x384xf32>
    %22 = vector.shape_cast %21 : vector<2x1x384xf32> to vector<2x384xf32>
    %23 = vector.extract_strided_slice %22 {offsets = [0, 0], sizes = [2, 128], strides = [1, 1]} : vector<2x384xf32> to vector<2x128xf32>
    %24 = vector.extract_strided_slice %20 {offsets = [0, 0], sizes = [2, 128], strides = [1, 1]} : vector<2x384xf32> to vector<2x128xf32>
    %25 = arith.addf %23, %24 : vector<2x128xf32>
    %26 = arith.negf %25 : vector<2x128xf32>
    %27 = math.exp %26 : vector<2x128xf32>
    %cst_12 = arith.constant 1.000000e+00 : f32
    %28 = vector.broadcast %cst_12 : f32 to vector<2x128xf32>
    %29 = arith.addf %28, %27 : vector<2x128xf32>
    %30 = arith.divf %28, %29 : vector<2x128xf32>
    %31 = vector.extract_strided_slice %22 {offsets = [0, 128], sizes = [2, 128], strides = [1, 1]} : vector<2x384xf32> to vector<2x128xf32>
    %32 = vector.extract_strided_slice %20 {offsets = [0, 128], sizes = [2, 128], strides = [1, 1]} : vector<2x384xf32> to vector<2x128xf32>
    %33 = arith.addf %31, %32 : vector<2x128xf32>
    %34 = arith.negf %33 : vector<2x128xf32>
    %35 = math.exp %34 : vector<2x128xf32>
    %cst_13 = arith.constant 1.000000e+00 : f32
    %36 = vector.broadcast %cst_13 : f32 to vector<2x128xf32>
    %37 = arith.addf %36, %35 : vector<2x128xf32>
    %38 = arith.divf %36, %37 : vector<2x128xf32>
    %39 = vector.extract_strided_slice %22 {offsets = [0, 256], sizes = [2, 128], strides = [1, 1]} : vector<2x384xf32> to vector<2x128xf32>
    %40 = vector.extract_strided_slice %20 {offsets = [0, 256], sizes = [2, 128], strides = [1, 1]} : vector<2x384xf32> to vector<2x128xf32>
    %41 = vector.broadcast %17 : vector<1x128xf32> to vector<2x128xf32>
    %42 = arith.addf %40, %41 : vector<2x128xf32>
    %43 = arith.mulf %30, %42 : vector<2x128xf32>
    %44 = arith.addf %39, %43 : vector<2x128xf32>
    %45 = math.tanh %44 : vector<2x128xf32>
    %cst_14 = arith.constant 1.000000e+00 : f32
    %46 = vector.broadcast %cst_14 : f32 to vector<2x128xf32>
    %47 = arith.subf %46, %38 : vector<2x128xf32>
    %48 = arith.mulf %47, %45 : vector<2x128xf32>
    %49 = arith.mulf %38, %18 : vector<2x128xf32>
    %50 = arith.addf %48, %49 : vector<2x128xf32>
    %51 = vector.shape_cast %50 : vector<2x128xf32> to vector<2x1x128xf32>
    %c0_15 = arith.constant 0 : index
    %c0_16 = arith.constant 0 : index
    %c0_17 = arith.constant 0 : index
    %52 = vector.load %arg11[%c0_15, %c0_16, %c0_17] : memref<2x8x128xf32, #tpu.memory_space<vmem>>, vector<2x1x128xf32>
    tpu.vector_store %arg11[%c0_15, %c0_16, %c0_17], %51 {strides = array<i32>} : memref<2x8x128xf32, #tpu.memory_space<vmem>>, vector<2x1x128xf32>,
    %53 = arith.truncf %50 : vector<2x128xf32> to vector<2x128xbf16>
    %cst_18 = arith.constant dense<0.000000e+00> : vector<2x384xf32>
    %54 = tpu.matmul %53, %16, %cst_18 {dimension_numbers = #tpu.dot_dimension_numbers<[1], [0], [0], [1], [0, 0, 1, 1], [], []>} : vector<2x128xbf16>, vector<128x384xbf16>, vector<2x384xf32> -> vector<2x384xf32>
    %55 = vector.extract_strided_slice %9 {offsets = [0, 1, 0], sizes = [2, 1, 384], strides = [1, 1, 1]} : vector<2x8x384xf32> to vector<2x1x384xf32>
    %56 = vector.shape_cast %55 : vector<2x1x384xf32> to vector<2x384xf32>
    %57 = vector.extract_strided_slice %56 {offsets = [0, 0], sizes = [2, 128], strides = [1, 1]} : vector<2x384xf32> to vector<2x128xf32>
    %58 = vector.extract_strided_slice %54 {offsets = [0, 0], sizes = [2, 128], strides = [1, 1]} : vector<2x384xf32> to vector<2x128xf32>
    %59 = arith.addf %57, %58 : vector<2x128xf32>
    %60 = arith.negf %59 : vector<2x128xf32>
    %61 = math.exp %60 : vector<2x128xf32>
    %cst_19 = arith.constant 1.000000e+00 : f32
    %62 = vector.broadcast %cst_19 : f32 to vector<2x128xf32>
    %63 = arith.addf %62, %61 : vector<2x128xf32>
    %64 = arith.divf %62, %63 : vector<2x128xf32>
    %65 = vector.extract_strided_slice %56 {offsets = [0, 128], sizes = [2, 128], strides = [1, 1]} : vector<2x384xf32> to vector<2x128xf32>
    %66 = vector.extract_strided_slice %54 {offsets = [0, 128], sizes = [2, 128], strides = [1, 1]} : vector<2x384xf32> to vector<2x128xf32>
    %67 = arith.addf %65, %66 : vector<2x128xf32>
    %68 = arith.negf %67 : vector<2x128xf32>
    %69 = math.exp %68 : vector<2x128xf32>
    %cst_20 = arith.constant 1.000000e+00 : f32
    %70 = vector.broadcast %cst_20 : f32 to vector<2x128xf32>
    %71 = arith.addf %70, %69 : vector<2x128xf32>
    %72 = arith.divf %70, %71 : vector<2x128xf32>
    %73 = vector.extract_strided_slice %56 {offsets = [0, 256], sizes = [2, 128], strides = [1, 1]} : vector<2x384xf32> to vector<2x128xf32>
    %74 = vector.extract_strided_slice %54 {offsets = [0, 256], sizes = [2, 128], strides = [1, 1]} : vector<2x384xf32> to vector<2x128xf32>
    %75 = vector.broadcast %17 : vector<1x128xf32> to vector<2x128xf32>
    %76 = arith.addf %74, %75 : vector<2x128xf32>
    %77 = arith.mulf %64, %76 : vector<2x128xf32>
    %78 = arith.addf %73, %77 : vector<2x128xf32>
    %79 = math.tanh %78 : vector<2x128xf32>
    %cst_21 = arith.constant 1.000000e+00 : f32
    %80 = vector.broadcast %cst_21 : f32 to vector<2x128xf32>
    %81 = arith.subf %80, %72 : vector<2x128xf32>
    %82 = arith.mulf %81, %79 : vector<2x128xf32>
    %83 = arith.mulf %72, %50 : vector<2x128xf32>
    %84 = arith.addf %82, %83 : vector<2x128xf32>
    %85 = vector.shape_cast %84 : vector<2x128xf32> to vector<2x1x128xf32>
    %c0_22 = arith.constant 0 : index
    %c1 = arith.constant 1 : index
    %c0_23 = arith.constant 0 : index
    %86 = vector.load %arg11[%c0_22, %c1, %c0_23] : memref<2x8x128xf32, #tpu.memory_space<vmem>>, vector<2x1x128xf32>
    tpu.vector_store %arg11[%c0_22, %c1, %c0_23], %85 {strides = array<i32>} : memref<2x8x128xf32, #tpu.memory_space<vmem>>, vector<2x1x128xf32>,
    %87 = arith.truncf %84 : vector<2x128xf32> to vector<2x128xbf16>
    %cst_24 = arith.constant dense<0.000000e+00> : vector<2x384xf32>
    %88 = tpu.matmul %87, %16, %cst_24 {dimension_numbers = #tpu.dot_dimension_numbers<[1], [0], [0], [1], [0, 0, 1, 1], [], []>} : vector<2x128xbf16>, vector<128x384xbf16>, vector<2x384xf32> -> vector<2x384xf32>
    %89 = vector.extract_strided_slice %9 {offsets = [0, 2, 0], sizes = [2, 1, 384], strides = [1, 1, 1]} : vector<2x8x384xf32> to vector<2x1x384xf32>
    %90 = vector.shape_cast %89 : vector<2x1x384xf32> to vector<2x384xf32>
    %91 = vector.extract_strided_slice %90 {offsets = [0, 0], sizes = [2, 128], strides = [1, 1]} : vector<2x384xf32> to vector<2x128xf32>
    %92 = vector.extract_strided_slice %88 {offsets = [0, 0], sizes = [2, 128], strides = [1, 1]} : vector<2x384xf32> to vector<2x128xf32>
    %93 = arith.addf %91, %92 : vector<2x128xf32>
    %94 = arith.negf %93 : vector<2x128xf32>
    %95 = math.exp %94 : vector<2x128xf32>
    %cst_25 = arith.constant 1.000000e+00 : f32
    %96 = vector.broadcast %cst_25 : f32 to vector<2x128xf32>
    %97 = arith.addf %96, %95 : vector<2x128xf32>
    %98 = arith.divf %96, %97 : vector<2x128xf32>
    %99 = vector.extract_strided_slice %90 {offsets = [0, 128], sizes = [2, 128], strides = [1, 1]} : vector<2x384xf32> to vector<2x128xf32>
    %100 = vector.extract_strided_slice %88 {offsets = [0, 128], sizes = [2, 128], strides = [1, 1]} : vector<2x384xf32> to vector<2x128xf32>
    %101 = arith.addf %99, %100 : vector<2x128xf32>
    %102 = arith.negf %101 : vector<2x128xf32>
    %103 = math.exp %102 : vector<2x128xf32>
    %cst_26 = arith.constant 1.000000e+00 : f32
    %104 = vector.broadcast %cst_26 : f32 to vector<2x128xf32>
    %105 = arith.addf %104, %103 : vector<2x128xf32>
    %106 = arith.divf %104, %105 : vector<2x128xf32>
    %107 = vector.extract_strided_slice %90 {offsets = [0, 256], sizes = [2, 128], strides = [1, 1]} : vector<2x384xf32> to vector<2x128xf32>
    %108 = vector.extract_strided_slice %88 {offsets = [0, 256], sizes = [2, 128], strides = [1, 1]} : vector<2x384xf32> to vector<2x128xf32>
    %109 = vector.broadcast %17 : vector<1x128xf32> to vector<2x128xf32>
    %110 = arith.addf %108, %109 : vector<2x128xf32>
    %111 = arith.mulf %98, %110 : vector<2x128xf32>
    %112 = arith.addf %107, %111 : vector<2x128xf32>
    %113 = math.tanh %112 : vector<2x128xf32>
    %cst_27 = arith.constant 1.000000e+00 : f32
    %114 = vector.broadcast %cst_27 : f32 to vector<2x128xf32>
    %115 = arith.subf %114, %106 : vector<2x128xf32>
    %116 = arith.mulf %115, %113 : vector<2x128xf32>
    %117 = arith.mulf %106, %84 : vector<2x128xf32>
    %118 = arith.addf %116, %117 : vector<2x128xf32>
    %119 = vector.shape_cast %118 : vector<2x128xf32> to vector<2x1x128xf32>
    %c0_28 = arith.constant 0 : index
    %c2 = arith.constant 2 : index
    %c0_29 = arith.constant 0 : index
    %120 = vector.load %arg11[%c0_28, %c2, %c0_29] : memref<2x8x128xf32, #tpu.memory_space<vmem>>, vector<2x1x128xf32>
    tpu.vector_store %arg11[%c0_28, %c2, %c0_29], %119 {strides = array<i32>} : memref<2x8x128xf32, #tpu.memory_space<vmem>>, vector<2x1x128xf32>,
    %121 = arith.truncf %118 : vector<2x128xf32> to vector<2x128xbf16>
    %cst_30 = arith.constant dense<0.000000e+00> : vector<2x384xf32>
    %122 = tpu.matmul %121, %16, %cst_30 {dimension_numbers = #tpu.dot_dimension_numbers<[1], [0], [0], [1], [0, 0, 1, 1], [], []>} : vector<2x128xbf16>, vector<128x384xbf16>, vector<2x384xf32> -> vector<2x384xf32>
    %123 = vector.extract_strided_slice %9 {offsets = [0, 3, 0], sizes = [2, 1, 384], strides = [1, 1, 1]} : vector<2x8x384xf32> to vector<2x1x384xf32>
    %124 = vector.shape_cast %123 : vector<2x1x384xf32> to vector<2x384xf32>
    %125 = vector.extract_strided_slice %124 {offsets = [0, 0], sizes = [2, 128], strides = [1, 1]} : vector<2x384xf32> to vector<2x128xf32>
    %126 = vector.extract_strided_slice %122 {offsets = [0, 0], sizes = [2, 128], strides = [1, 1]} : vector<2x384xf32> to vector<2x128xf32>
    %127 = arith.addf %125, %126 : vector<2x128xf32>
    %128 = arith.negf %127 : vector<2x128xf32>
    %129 = math.exp %128 : vector<2x128xf32>
    %cst_31 = arith.constant 1.000000e+00 : f32
    %130 = vector.broadcast %cst_31 : f32 to vector<2x128xf32>
    %131 = arith.addf %130, %129 : vector<2x128xf32>
    %132 = arith.divf %130, %131 : vector<2x128xf32>
    %133 = vector.extract_strided_slice %124 {offsets = [0, 128], sizes = [2, 128], strides = [1, 1]} : vector<2x384xf32> to vector<2x128xf32>
    %134 = vector.extract_strided_slice %122 {offsets = [0, 128], sizes = [2, 128], strides = [1, 1]} : vector<2x384xf32> to vector<2x128xf32>
    %135 = arith.addf %133, %134 : vector<2x128xf32>
    %136 = arith.negf %135 : vector<2x128xf32>
    %137 = math.exp %136 : vector<2x128xf32>
    %cst_32 = arith.constant 1.000000e+00 : f32
    %138 = vector.broadcast %cst_32 : f32 to vector<2x128xf32>
    %139 = arith.addf %138, %137 : vector<2x128xf32>
    %140 = arith.divf %138, %139 : vector<2x128xf32>
    %141 = vector.extract_strided_slice %124 {offsets = [0, 256], sizes = [2, 128], strides = [1, 1]} : vector<2x384xf32> to vector<2x128xf32>
    %142 = vector.extract_strided_slice %122 {offsets = [0, 256], sizes = [2, 128], strides = [1, 1]} : vector<2x384xf32> to vector<2x128xf32>
    %143 = vector.broadcast %17 : vector<1x128xf32> to vector<2x128xf32>
    %144 = arith.addf %142, %143 : vector<2x128xf32>
    %145 = arith.mulf %132, %144 : vector<2x128xf32>
    %146 = arith.addf %141, %145 : vector<2x128xf32>
    %147 = math.tanh %146 : vector<2x128xf32>
    %cst_33 = arith.constant 1.000000e+00 : f32
    %148 = vector.broadcast %cst_33 : f32 to vector<2x128xf32>
    %149 = arith.subf %148, %140 : vector<2x128xf32>
    %150 = arith.mulf %149, %147 : vector<2x128xf32>
    %151 = arith.mulf %140, %118 : vector<2x128xf32>
    %152 = arith.addf %150, %151 : vector<2x128xf32>
    %153 = vector.shape_cast %152 : vector<2x128xf32> to vector<2x1x128xf32>
    %c0_34 = arith.constant 0 : index
    %c3 = arith.constant 3 : index
    %c0_35 = arith.constant 0 : index
    %154 = vector.load %arg11[%c0_34, %c3, %c0_35] : memref<2x8x128xf32, #tpu.memory_space<vmem>>, vector<2x1x128xf32>
    tpu.vector_store %arg11[%c0_34, %c3, %c0_35], %153 {strides = array<i32>} : memref<2x8x128xf32, #tpu.memory_space<vmem>>, vector<2x1x128xf32>,
    %155 = arith.truncf %152 : vector<2x128xf32> to vector<2x128xbf16>
    %cst_36 = arith.constant dense<0.000000e+00> : vector<2x384xf32>
    %156 = tpu.matmul %155, %16, %cst_36 {dimension_numbers = #tpu.dot_dimension_numbers<[1], [0], [0], [1], [0, 0, 1, 1], [], []>} : vector<2x128xbf16>, vector<128x384xbf16>, vector<2x384xf32> -> vector<2x384xf32>
    %157 = vector.extract_strided_slice %9 {offsets = [0, 4, 0], sizes = [2, 1, 384], strides = [1, 1, 1]} : vector<2x8x384xf32> to vector<2x1x384xf32>
    %158 = vector.shape_cast %157 : vector<2x1x384xf32> to vector<2x384xf32>
    %159 = vector.extract_strided_slice %158 {offsets = [0, 0], sizes = [2, 128], strides = [1, 1]} : vector<2x384xf32> to vector<2x128xf32>
    %160 = vector.extract_strided_slice %156 {offsets = [0, 0], sizes = [2, 128], strides = [1, 1]} : vector<2x384xf32> to vector<2x128xf32>
    %161 = arith.addf %159, %160 : vector<2x128xf32>
    %162 = arith.negf %161 : vector<2x128xf32>
    %163 = math.exp %162 : vector<2x128xf32>
    %cst_37 = arith.constant 1.000000e+00 : f32
    %164 = vector.broadcast %cst_37 : f32 to vector<2x128xf32>
    %165 = arith.addf %164, %163 : vector<2x128xf32>
    %166 = arith.divf %164, %165 : vector<2x128xf32>
    %167 = vector.extract_strided_slice %158 {offsets = [0, 128], sizes = [2, 128], strides = [1, 1]} : vector<2x384xf32> to vector<2x128xf32>
    %168 = vector.extract_strided_slice %156 {offsets = [0, 128], sizes = [2, 128], strides = [1, 1]} : vector<2x384xf32> to vector<2x128xf32>
    %169 = arith.addf %167, %168 : vector<2x128xf32>
    %170 = arith.negf %169 : vector<2x128xf32>
    %171 = math.exp %170 : vector<2x128xf32>
    %cst_38 = arith.constant 1.000000e+00 : f32
    %172 = vector.broadcast %cst_38 : f32 to vector<2x128xf32>
    %173 = arith.addf %172, %171 : vector<2x128xf32>
    %174 = arith.divf %172, %173 : vector<2x128xf32>
    %175 = vector.extract_strided_slice %158 {offsets = [0, 256], sizes = [2, 128], strides = [1, 1]} : vector<2x384xf32> to vector<2x128xf32>
    %176 = vector.extract_strided_slice %156 {offsets = [0, 256], sizes = [2, 128], strides = [1, 1]} : vector<2x384xf32> to vector<2x128xf32>
    %177 = vector.broadcast %17 : vector<1x128xf32> to vector<2x128xf32>
    %178 = arith.addf %176, %177 : vector<2x128xf32>
    %179 = arith.mulf %166, %178 : vector<2x128xf32>
    %180 = arith.addf %175, %179 : vector<2x128xf32>
    %181 = math.tanh %180 : vector<2x128xf32>
    %cst_39 = arith.constant 1.000000e+00 : f32
    %182 = vector.broadcast %cst_39 : f32 to vector<2x128xf32>
    %183 = arith.subf %182, %174 : vector<2x128xf32>
    %184 = arith.mulf %183, %181 : vector<2x128xf32>
    %185 = arith.mulf %174, %152 : vector<2x128xf32>
    %186 = arith.addf %184, %185 : vector<2x128xf32>
    %187 = vector.shape_cast %186 : vector<2x128xf32> to vector<2x1x128xf32>
    %c0_40 = arith.constant 0 : index
    %c4 = arith.constant 4 : index
    %c0_41 = arith.constant 0 : index
    %188 = vector.load %arg11[%c0_40, %c4, %c0_41] : memref<2x8x128xf32, #tpu.memory_space<vmem>>, vector<2x1x128xf32>
    tpu.vector_store %arg11[%c0_40, %c4, %c0_41], %187 {strides = array<i32>} : memref<2x8x128xf32, #tpu.memory_space<vmem>>, vector<2x1x128xf32>,
    %189 = arith.truncf %186 : vector<2x128xf32> to vector<2x128xbf16>
    %cst_42 = arith.constant dense<0.000000e+00> : vector<2x384xf32>
    %190 = tpu.matmul %189, %16, %cst_42 {dimension_numbers = #tpu.dot_dimension_numbers<[1], [0], [0], [1], [0, 0, 1, 1], [], []>} : vector<2x128xbf16>, vector<128x384xbf16>, vector<2x384xf32> -> vector<2x384xf32>
    %191 = vector.extract_strided_slice %9 {offsets = [0, 5, 0], sizes = [2, 1, 384], strides = [1, 1, 1]} : vector<2x8x384xf32> to vector<2x1x384xf32>
    %192 = vector.shape_cast %191 : vector<2x1x384xf32> to vector<2x384xf32>
    %193 = vector.extract_strided_slice %192 {offsets = [0, 0], sizes = [2, 128], strides = [1, 1]} : vector<2x384xf32> to vector<2x128xf32>
    %194 = vector.extract_strided_slice %190 {offsets = [0, 0], sizes = [2, 128], strides = [1, 1]} : vector<2x384xf32> to vector<2x128xf32>
    %195 = arith.addf %193, %194 : vector<2x128xf32>
    %196 = arith.negf %195 : vector<2x128xf32>
    %197 = math.exp %196 : vector<2x128xf32>
    %cst_43 = arith.constant 1.000000e+00 : f32
    %198 = vector.broadcast %cst_43 : f32 to vector<2x128xf32>
    %199 = arith.addf %198, %197 : vector<2x128xf32>
    %200 = arith.divf %198, %199 : vector<2x128xf32>
    %201 = vector.extract_strided_slice %192 {offsets = [0, 128], sizes = [2, 128], strides = [1, 1]} : vector<2x384xf32> to vector<2x128xf32>
    %202 = vector.extract_strided_slice %190 {offsets = [0, 128], sizes = [2, 128], strides = [1, 1]} : vector<2x384xf32> to vector<2x128xf32>
    %203 = arith.addf %201, %202 : vector<2x128xf32>
    %204 = arith.negf %203 : vector<2x128xf32>
    %205 = math.exp %204 : vector<2x128xf32>
    %cst_44 = arith.constant 1.000000e+00 : f32
    %206 = vector.broadcast %cst_44 : f32 to vector<2x128xf32>
    %207 = arith.addf %206, %205 : vector<2x128xf32>
    %208 = arith.divf %206, %207 : vector<2x128xf32>
    %209 = vector.extract_strided_slice %192 {offsets = [0, 256], sizes = [2, 128], strides = [1, 1]} : vector<2x384xf32> to vector<2x128xf32>
    %210 = vector.extract_strided_slice %190 {offsets = [0, 256], sizes = [2, 128], strides = [1, 1]} : vector<2x384xf32> to vector<2x128xf32>
    %211 = vector.broadcast %17 : vector<1x128xf32> to vector<2x128xf32>
    %212 = arith.addf %210, %211 : vector<2x128xf32>
    %213 = arith.mulf %200, %212 : vector<2x128xf32>
    %214 = arith.addf %209, %213 : vector<2x128xf32>
    %215 = math.tanh %214 : vector<2x128xf32>
    %cst_45 = arith.constant 1.000000e+00 : f32
    %216 = vector.broadcast %cst_45 : f32 to vector<2x128xf32>
    %217 = arith.subf %216, %208 : vector<2x128xf32>
    %218 = arith.mulf %217, %215 : vector<2x128xf32>
    %219 = arith.mulf %208, %186 : vector<2x128xf32>
    %220 = arith.addf %218, %219 : vector<2x128xf32>
    %221 = vector.shape_cast %220 : vector<2x128xf32> to vector<2x1x128xf32>
    %c0_46 = arith.constant 0 : index
    %c5 = arith.constant 5 : index
    %c0_47 = arith.constant 0 : index
    %222 = vector.load %arg11[%c0_46, %c5, %c0_47] : memref<2x8x128xf32, #tpu.memory_space<vmem>>, vector<2x1x128xf32>
    tpu.vector_store %arg11[%c0_46, %c5, %c0_47], %221 {strides = array<i32>} : memref<2x8x128xf32, #tpu.memory_space<vmem>>, vector<2x1x128xf32>,
    %223 = arith.truncf %220 : vector<2x128xf32> to vector<2x128xbf16>
    %cst_48 = arith.constant dense<0.000000e+00> : vector<2x384xf32>
    %224 = tpu.matmul %223, %16, %cst_48 {dimension_numbers = #tpu.dot_dimension_numbers<[1], [0], [0], [1], [0, 0, 1, 1], [], []>} : vector<2x128xbf16>, vector<128x384xbf16>, vector<2x384xf32> -> vector<2x384xf32>
    %225 = vector.extract_strided_slice %9 {offsets = [0, 6, 0], sizes = [2, 1, 384], strides = [1, 1, 1]} : vector<2x8x384xf32> to vector<2x1x384xf32>
    %226 = vector.shape_cast %225 : vector<2x1x384xf32> to vector<2x384xf32>
    %227 = vector.extract_strided_slice %226 {offsets = [0, 0], sizes = [2, 128], strides = [1, 1]} : vector<2x384xf32> to vector<2x128xf32>
    %228 = vector.extract_strided_slice %224 {offsets = [0, 0], sizes = [2, 128], strides = [1, 1]} : vector<2x384xf32> to vector<2x128xf32>
    %229 = arith.addf %227, %228 : vector<2x128xf32>
    %230 = arith.negf %229 : vector<2x128xf32>
    %231 = math.exp %230 : vector<2x128xf32>
    %cst_49 = arith.constant 1.000000e+00 : f32
    %232 = vector.broadcast %cst_49 : f32 to vector<2x128xf32>
    %233 = arith.addf %232, %231 : vector<2x128xf32>
    %234 = arith.divf %232, %233 : vector<2x128xf32>
    %235 = vector.extract_strided_slice %226 {offsets = [0, 128], sizes = [2, 128], strides = [1, 1]} : vector<2x384xf32> to vector<2x128xf32>
    %236 = vector.extract_strided_slice %224 {offsets = [0, 128], sizes = [2, 128], strides = [1, 1]} : vector<2x384xf32> to vector<2x128xf32>
    %237 = arith.addf %235, %236 : vector<2x128xf32>
    %238 = arith.negf %237 : vector<2x128xf32>
    %239 = math.exp %238 : vector<2x128xf32>
    %cst_50 = arith.constant 1.000000e+00 : f32
    %240 = vector.broadcast %cst_50 : f32 to vector<2x128xf32>
    %241 = arith.addf %240, %239 : vector<2x128xf32>
    %242 = arith.divf %240, %241 : vector<2x128xf32>
    %243 = vector.extract_strided_slice %226 {offsets = [0, 256], sizes = [2, 128], strides = [1, 1]} : vector<2x384xf32> to vector<2x128xf32>
    %244 = vector.extract_strided_slice %224 {offsets = [0, 256], sizes = [2, 128], strides = [1, 1]} : vector<2x384xf32> to vector<2x128xf32>
    %245 = vector.broadcast %17 : vector<1x128xf32> to vector<2x128xf32>
    %246 = arith.addf %244, %245 : vector<2x128xf32>
    %247 = arith.mulf %234, %246 : vector<2x128xf32>
    %248 = arith.addf %243, %247 : vector<2x128xf32>
    %249 = math.tanh %248 : vector<2x128xf32>
    %cst_51 = arith.constant 1.000000e+00 : f32
    %250 = vector.broadcast %cst_51 : f32 to vector<2x128xf32>
    %251 = arith.subf %250, %242 : vector<2x128xf32>
    %252 = arith.mulf %251, %249 : vector<2x128xf32>
    %253 = arith.mulf %242, %220 : vector<2x128xf32>
    %254 = arith.addf %252, %253 : vector<2x128xf32>
    %255 = vector.shape_cast %254 : vector<2x128xf32> to vector<2x1x128xf32>
    %c0_52 = arith.constant 0 : index
    %c6 = arith.constant 6 : index
    %c0_53 = arith.constant 0 : index
    %256 = vector.load %arg11[%c0_52, %c6, %c0_53] : memref<2x8x128xf32, #tpu.memory_space<vmem>>, vector<2x1x128xf32>
    tpu.vector_store %arg11[%c0_52, %c6, %c0_53], %255 {strides = array<i32>} : memref<2x8x128xf32, #tpu.memory_space<vmem>>, vector<2x1x128xf32>,
    %257 = arith.truncf %254 : vector<2x128xf32> to vector<2x128xbf16>
    %cst_54 = arith.constant dense<0.000000e+00> : vector<2x384xf32>
    %258 = tpu.matmul %257, %16, %cst_54 {dimension_numbers = #tpu.dot_dimension_numbers<[1], [0], [0], [1], [0, 0, 1, 1], [], []>} : vector<2x128xbf16>, vector<128x384xbf16>, vector<2x384xf32> -> vector<2x384xf32>
    %259 = vector.extract_strided_slice %9 {offsets = [0, 7, 0], sizes = [2, 1, 384], strides = [1, 1, 1]} : vector<2x8x384xf32> to vector<2x1x384xf32>
    %260 = vector.shape_cast %259 : vector<2x1x384xf32> to vector<2x384xf32>
    %261 = vector.extract_strided_slice %260 {offsets = [0, 0], sizes = [2, 128], strides = [1, 1]} : vector<2x384xf32> to vector<2x128xf32>
    %262 = vector.extract_strided_slice %258 {offsets = [0, 0], sizes = [2, 128], strides = [1, 1]} : vector<2x384xf32> to vector<2x128xf32>
    %263 = arith.addf %261, %262 : vector<2x128xf32>
    %264 = arith.negf %263 : vector<2x128xf32>
    %265 = math.exp %264 : vector<2x128xf32>
    %cst_55 = arith.constant 1.000000e+00 : f32
    %266 = vector.broadcast %cst_55 : f32 to vector<2x128xf32>
    %267 = arith.addf %266, %265 : vector<2x128xf32>
    %268 = arith.divf %266, %267 : vector<2x128xf32>
    %269 = vector.extract_strided_slice %260 {offsets = [0, 128], sizes = [2, 128], strides = [1, 1]} : vector<2x384xf32> to vector<2x128xf32>
    %270 = vector.extract_strided_slice %258 {offsets = [0, 128], sizes = [2, 128], strides = [1, 1]} : vector<2x384xf32> to vector<2x128xf32>
    %271 = arith.addf %269, %270 : vector<2x128xf32>
    %272 = arith.negf %271 : vector<2x128xf32>
    %273 = math.exp %272 : vector<2x128xf32>
    %cst_56 = arith.constant 1.000000e+00 : f32
    %274 = vector.broadcast %cst_56 : f32 to vector<2x128xf32>
    %275 = arith.addf %274, %273 : vector<2x128xf32>
    %276 = arith.divf %274, %275 : vector<2x128xf32>
    %277 = vector.extract_strided_slice %260 {offsets = [0, 256], sizes = [2, 128], strides = [1, 1]} : vector<2x384xf32> to vector<2x128xf32>
    %278 = vector.extract_strided_slice %258 {offsets = [0, 256], sizes = [2, 128], strides = [1, 1]} : vector<2x384xf32> to vector<2x128xf32>
    %279 = vector.broadcast %17 : vector<1x128xf32> to vector<2x128xf32>
    %280 = arith.addf %278, %279 : vector<2x128xf32>
    %281 = arith.mulf %268, %280 : vector<2x128xf32>
    %282 = arith.addf %277, %281 : vector<2x128xf32>
    %283 = math.tanh %282 : vector<2x128xf32>
    %cst_57 = arith.constant 1.000000e+00 : f32
    %284 = vector.broadcast %cst_57 : f32 to vector<2x128xf32>
    %285 = arith.subf %284, %276 : vector<2x128xf32>
    %286 = arith.mulf %285, %283 : vector<2x128xf32>
    %287 = arith.mulf %276, %254 : vector<2x128xf32>
    %288 = arith.addf %286, %287 : vector<2x128xf32>
    %289 = vector.shape_cast %288 : vector<2x128xf32> to vector<2x1x128xf32>
    %c0_58 = arith.constant 0 : index
    %c7 = arith.constant 7 : index
    %c0_59 = arith.constant 0 : index
    %290 = vector.load %arg11[%c0_58, %c7, %c0_59] : memref<2x8x128xf32, #tpu.memory_space<vmem>>, vector<2x1x128xf32>
    tpu.vector_store %arg11[%c0_58, %c7, %c0_59], %289 {strides = array<i32>} : memref<2x8x128xf32, #tpu.memory_space<vmem>>, vector<2x1x128xf32>,
    %c0_60 = arith.constant 0 : index
    %c0_61 = arith.constant 0 : index
    %c0_62 = arith.constant 0 : index
    %291 = vector.load %arg11[%c0_60, %c0_61, %c0_62] : memref<2x8x128xf32, #tpu.memory_space<vmem>>, vector<2x8x128xf32>
    "tpu.trace_start"() <{level = 10 : i32, message = "btd,bsd->bts"}> : () -> ()
    %cst_63 = arith.constant dense<0.000000e+00> : vector<2x8x8xf32>
    %292 = tpu.matmul %11, %13, %cst_63 {dimension_numbers = #tpu.dot_dimension_numbers<[2], [2], [1], [1], [0, 0, 0, 1, 1, 1], [0], [0]>} : vector<2x8x128xf32>, vector<2x8x128xf32>, vector<2x8x8xf32> -> vector<2x8x8xf32>
    "tpu.trace_stop"() : () -> ()
    %cst_64 = arith.constant 1.000000e-01 : f32
    %293 = vector.broadcast %cst_64 : f32 to vector<2x8x8xf32>
    %294 = arith.mulf %292, %293 : vector<2x8x8xf32>
    %cst_65 = arith.constant dense<0xFF800000> : vector<2x8xf32>
    %295 = vector.multi_reduction <maximumf>, %294, %cst_65 [2] : vector<2x8x8xf32> to vector<2x8xf32>
    %296 = vector.shape_cast %295 : vector<2x8xf32> to vector<2x8x1xf32>
    %297 = vector.broadcast %296 : vector<2x8x1xf32> to vector<2x8x8xf32>
    %298 = arith.subf %294, %297 : vector<2x8x8xf32>
    %299 = math.exp %298 : vector<2x8x8xf32>
    %cst_66 = arith.constant dense<0.000000e+00> : vector<2x8xf32>
    %300 = vector.multi_reduction <add>, %299, %cst_66 [2] : vector<2x8x8xf32> to vector<2x8xf32>
    %301 = vector.shape_cast %300 : vector<2x8xf32> to vector<2x8x1xf32>
    %302 = tpu.reciprocal %301 {approx = true} : vector<2x8x1xf32> -> vector<2x8x1xf32>
    %303 = vector.broadcast %302 : vector<2x8x1xf32> to vector<2x8x8xf32>
    %304 = arith.mulf %299, %303 : vector<2x8x8xf32>
    "tpu.trace_start"() <{level = 10 : i32, message = "bts,bsd->btd"}> : () -> ()
    %cst_67 = arith.constant dense<0.000000e+00> : vector<2x8x128xf32>
    %305 = tpu.matmul %304, %15, %cst_67 {dimension_numbers = #tpu.dot_dimension_numbers<[2], [1], [1], [2], [0, 0, 0, 1, 1, 2], [0], [0]>} : vector<2x8x8xf32>, vector<2x8x128xf32>, vector<2x8x128xf32> -> vector<2x8x128xf32>
    "tpu.trace_stop"() : () -> ()
    %c0_68 = arith.constant 0 : index
    %c0_69 = arith.constant 0 : index
    %306 = vector.load %arg6[%c0_68, %c0_69] : memref<1x128xf32, #tpu.memory_space<vmem>>, vector<1x128xf32>
    %307 = vector.shape_cast %306 : vector<1x128xf32> to vector<1x1x128xf32>
    %308 = vector.broadcast %307 : vector<1x1x128xf32> to vector<2x8x128xf32>
    %309 = arith.mulf %305, %308 : vector<2x8x128xf32>
    %cst_70 = arith.constant dense<0.000000e+00> : vector<2x8xf32>
    %310 = vector.multi_reduction <add>, %309, %cst_70 [2] : vector<2x8x128xf32> to vector<2x8xf32>
    %311 = vector.shape_cast %310 : vector<2x8xf32> to vector<2x8x1xf32>
    %c0_71 = arith.constant 0 : index
    %c0_72 = arith.constant 0 : index
    %312 = vector.load %arg7[%c0_71, %c0_72] : memref<1x1xf32, #tpu.memory_space<vmem>>, vector<1x1xf32>
    %313 = vector.shape_cast %312 : vector<1x1xf32> to vector<1x1x1xf32>
    %314 = vector.broadcast %313 : vector<1x1x1xf32> to vector<2x8x1xf32>
    %315 = arith.addf %311, %314 : vector<2x8x1xf32>
    %316 = arith.negf %315 : vector<2x8x1xf32>
    %317 = math.exp %316 : vector<2x8x1xf32>
    %cst_73 = arith.constant 1.000000e+00 : f32
    %318 = vector.broadcast %cst_73 : f32 to vector<2x8x1xf32>
    %319 = arith.addf %318, %317 : vector<2x8x1xf32>
    %320 = arith.divf %318, %319 : vector<2x8x1xf32>
    %c0_74 = arith.constant 0 : index
    %c0_75 = arith.constant 0 : index
    %c0_76 = arith.constant 0 : index
    %321 = vector.load %arg9[%c0_74, %c0_75, %c0_76] : memref<2x8x1xf32, #tpu.memory_space<vmem>>, vector<2x8x1xf32>
    %cst_77 = arith.constant 2.000000e+00 : f32
    %322 = vector.broadcast %cst_77 : f32 to vector<2x8x1xf32>
    %323 = arith.mulf %322, %320 : vector<2x8x1xf32>
    %cst_78 = arith.constant 1.000000e+00 : f32
    %324 = vector.broadcast %cst_78 : f32 to vector<2x8x1xf32>
    %325 = arith.subf %323, %324 : vector<2x8x1xf32>
    %326 = arith.addf %325, %321 : vector<2x8x1xf32>
    %327 = arith.negf %326 : vector<2x8x1xf32>
    %328 = math.exp %327 : vector<2x8x1xf32>
    %cst_79 = arith.constant 1.000000e+00 : f32
    %329 = vector.broadcast %cst_79 : f32 to vector<2x8x1xf32>
    %330 = arith.addf %329, %328 : vector<2x8x1xf32>
    %331 = arith.divf %329, %330 : vector<2x8x1xf32>
    %cst_80 = arith.constant 2.000000e-01 : f32
    %332 = vector.broadcast %cst_80 : f32 to vector<2x8x1xf32>
    %333 = arith.cmpf ogt, %331, %332 : vector<2x8x1xf32>
    %cst_81 = arith.constant 1.000000e+00 : f32
    %cst_82 = arith.constant 0.000000e+00 : f32
    %334 = vector.broadcast %cst_81 : f32 to vector<2x8x1xf32>
    %335 = vector.broadcast %cst_82 : f32 to vector<2x8x1xf32>
    %336 = arith.select %333, %334, %335 : vector<2x8x1xi1>, vector<2x8x1xf32>
    %337 = vector.shape_cast %291 : vector<2x8x128xf32> to vector<16x128xf32>
    %338 = arith.truncf %337 : vector<16x128xf32> to vector<16x128xbf16>
    %c0_83 = arith.constant 0 : index
    %c0_84 = arith.constant 0 : index
    %339 = vector.load %arg8[%c0_83, %c0_84] : memref<128x384xbf16, #tpu.memory_space<vmem>>, vector<128x384xbf16>
    %cst_85 = arith.constant dense<0.000000e+00> : vector<16x384xf32>
    %340 = tpu.matmul %338, %339, %cst_85 {dimension_numbers = #tpu.dot_dimension_numbers<[1], [0], [0], [1], [0, 0, 1, 1], [], []>} : vector<16x128xbf16>, vector<128x384xbf16>, vector<16x384xf32> -> vector<16x384xf32>
    %341 = vector.extract_strided_slice %340 {offsets = [0, 0], sizes = [16, 128], strides = [1, 1]} : vector<16x384xf32> to vector<16x128xf32>
    %342 = vector.shape_cast %341 : vector<16x128xf32> to vector<2x8x128xf32>
    %343 = vector.extract_strided_slice %340 {offsets = [0, 128], sizes = [16, 128], strides = [1, 1]} : vector<16x384xf32> to vector<16x128xf32>
    %344 = vector.shape_cast %343 : vector<16x128xf32> to vector<2x8x128xf32>
    %345 = vector.extract_strided_slice %340 {offsets = [0, 256], sizes = [16, 128], strides = [1, 1]} : vector<16x384xf32> to vector<16x128xf32>
    %346 = vector.shape_cast %345 : vector<16x128xf32> to vector<2x8x128xf32>
    %347 = vector.broadcast %336 : vector<2x8x1xf32> to vector<2x8x128xf32>
    %348 = arith.mulf %346, %347 : vector<2x8x128xf32>
    "tpu.trace_start"() <{level = 10 : i32, message = "btd,bsd->bts"}> : () -> ()
    %cst_86 = arith.constant dense<0.000000e+00> : vector<2x8x8xf32>
    %349 = tpu.matmul %342, %344, %cst_86 {dimension_numbers = #tpu.dot_dimension_numbers<[2], [2], [1], [1], [0, 0, 0, 1, 1, 1], [0], [0]>} : vector<2x8x128xf32>, vector<2x8x128xf32>, vector<2x8x8xf32> -> vector<2x8x8xf32>
    "tpu.trace_stop"() : () -> ()
    %cst_87 = arith.constant 1.000000e-01 : f32
    %350 = vector.broadcast %cst_87 : f32 to vector<2x8x8xf32>
    %351 = arith.mulf %349, %350 : vector<2x8x8xf32>
    %cst_88 = arith.constant dense<0xFF800000> : vector<2x8xf32>
    %352 = vector.multi_reduction <maximumf>, %351, %cst_88 [2] : vector<2x8x8xf32> to vector<2x8xf32>
    %353 = vector.shape_cast %352 : vector<2x8xf32> to vector<2x8x1xf32>
    %354 = vector.broadcast %353 : vector<2x8x1xf32> to vector<2x8x8xf32>
    %355 = arith.subf %351, %354 : vector<2x8x8xf32>
    %356 = math.exp %355 : vector<2x8x8xf32>
    %cst_89 = arith.constant dense<0.000000e+00> : vector<2x8xf32>
    %357 = vector.multi_reduction <add>, %356, %cst_89 [2] : vector<2x8x8xf32> to vector<2x8xf32>
    %358 = vector.shape_cast %357 : vector<2x8xf32> to vector<2x8x1xf32>
    %359 = tpu.reciprocal %358 {approx = true} : vector<2x8x1xf32> -> vector<2x8x1xf32>
    %360 = vector.broadcast %359 : vector<2x8x1xf32> to vector<2x8x8xf32>
    %361 = arith.mulf %356, %360 : vector<2x8x8xf32>
    "tpu.trace_start"() <{level = 10 : i32, message = "bts,bsd->btd"}> : () -> ()
    %cst_90 = arith.constant dense<0.000000e+00> : vector<2x8x128xf32>
    %362 = tpu.matmul %361, %348, %cst_90 {dimension_numbers = #tpu.dot_dimension_numbers<[2], [1], [1], [2], [0, 0, 0, 1, 1, 2], [0], [0]>} : vector<2x8x8xf32>, vector<2x8x128xf32>, vector<2x8x128xf32> -> vector<2x8x128xf32>
    "tpu.trace_stop"() : () -> ()
    %c0_91 = arith.constant 0 : index
    %c0_92 = arith.constant 0 : index
    %c0_93 = arith.constant 0 : index
    %363 = vector.load %arg10[%c0_91, %c0_92, %c0_93] : memref<2x8x128xf32, #tpu.memory_space<vmem>>, vector<2x8x128xf32>
    tpu.vector_store %arg10[%c0_91, %c0_92, %c0_93], %362 {strides = array<i32>} : memref<2x8x128xf32, #tpu.memory_space<vmem>>, vector<2x8x128xf32>,
    return
  }
  func.func @transform_0(%arg0: i32) -> (i32, i32, i32) {
    %c0_i32 = arith.constant 0 : i32
    %c0_i32_0 = arith.constant 0 : i32
    %c0_i32_1 = arith.constant 0 : i32
    return %arg0, %c0_i32, %c0_i32_0 : i32, i32, i32
  }
  func.func @transform_1(%arg0: i32) -> (i32, i32) {
    %c0_i32 = arith.constant 0 : i32
    %c0_i32_0 = arith.constant 0 : i32
    %c0_i32_1 = arith.constant 0 : i32
    return %c0_i32, %c0_i32_0 : i32, i32
  }
  func.func @transform_2(%arg0: i32) -> (i32, i32) {
    %c0_i32 = arith.constant 0 : i32
    %c0_i32_0 = arith.constant 0 : i32
    %c0_i32_1 = arith.constant 0 : i32
    return %c0_i32, %c0_i32_0 : i32, i32
  }
  func.func @transform_3(%arg0: i32) -> (i32, i32) {
    %c0_i32 = arith.constant 0 : i32
    %c0_i32_0 = arith.constant 0 : i32
    %c0_i32_1 = arith.constant 0 : i32
    return %c0_i32, %c0_i32_0 : i32, i32
  }
  func.func @transform_4(%arg0: i32) -> (i32, i32) {
    %c0_i32 = arith.constant 0 : i32
    %c0_i32_0 = arith.constant 0 : i32
    %c0_i32_1 = arith.constant 0 : i32
    return %c0_i32, %c0_i32_0 : i32, i32
  }
  func.func @transform_5(%arg0: i32) -> (i32, i32) {
    %c0_i32 = arith.constant 0 : i32
    %c0_i32_0 = arith.constant 0 : i32
    %c0_i32_1 = arith.constant 0 : i32
    return %c0_i32, %c0_i32_0 : i32, i32
  }
  func.func @transform_6(%arg0: i32) -> (i32, i32) {
    %c0_i32 = arith.constant 0 : i32
    %c0_i32_0 = arith.constant 0 : i32
    %c0_i32_1 = arith.constant 0 : i32
    return %c0_i32, %c0_i32_0 : i32, i32
  }
  func.func @transform_7(%arg0: i32) -> (i32, i32) {
    %c0_i32 = arith.constant 0 : i32
    %c0_i32_0 = arith.constant 0 : i32
    %c0_i32_1 = arith.constant 0 : i32
    return %c0_i32, %c0_i32_0 : i32, i32
  }
  func.func @transform_8(%arg0: i32) -> (i32, i32, i32) {
    %c0_i32 = arith.constant 0 : i32
    %c0_i32_0 = arith.constant 0 : i32
    %c0_i32_1 = arith.constant 0 : i32
    return %arg0, %c0_i32, %c0_i32_0 : i32, i32, i32
  }
  func.func @transform_9(%arg0: i32) -> (i32, i32, i32) {
    %c0_i32 = arith.constant 0 : i32
    %c0_i32_0 = arith.constant 0 : i32
    %c0_i32_1 = arith.constant 0 : i32
    return %arg0, %c0_i32, %c0_i32_0 : i32, i32, i32
  }
}

</mosaic_0001>

<llo_original>
// kernel: tpu_custom_call.1
$region0: #{tpu_custom_call.1}
  #allocation0 [shape = 'u32[]', space=smem, size = 0x4, offset = 0x4, fixed_abs, tag = 'smem constant byte address 0x4 - core index']
  #allocation1 [shape = 'u32[144,128]{1,0:T(1,128)}', space=vmem, size = 0x12000, scoped, tag = 'internal scratch']
  #allocation2 [shape = 'f32[2,8,128]{2,1,0:T(8,128)}', space=vmem, size = 0x2000, scoped, tag = 'scratch operand']
  #allocation3 [shape = 'f32[1,1]{1,0:T(1,128)S(1)}', space=vmem, size = 0x200, scoped, tag = 'scoped memory for tpu_custom_call.1']
  %s0 = inlined_call_operand.vmem [shape: f32[2,8,128], index: 0, kind: input, shape index: {}]
  %s1 = inlined_call_operand.hbm [shape: bf16[128,768], index: 1, kind: input, shape index: {}]
  %s2 = inlined_call_operand.vmem [shape: f32[1,384], index: 2, kind: input, shape index: {}]
  %s3 = inlined_call_operand.hbm [shape: bf16[128,384], index: 3, kind: input, shape index: {}]
  %s4 = inlined_call_operand.vmem [shape: f32[1,128], index: 4, kind: input, shape index: {}]
  %s5 = inlined_call_operand.vmem [shape: f32[1,128], index: 5, kind: input, shape index: {}]
  %s6 = inlined_call_operand.<no memory space> [shape: f32[1,1], index: 6, kind: input, shape index: {}]
  %s7 = inlined_call_operand.hbm [shape: bf16[128,384], index: 7, kind: input, shape index: {}]
  %s8 = inlined_call_operand.vmem [shape: f32[2,8,1], index: 8, kind: input, shape index: {}]
  %s9 = inlined_call_operand.hbm [shape: f32[2,8,128], index: 9, kind: output, shape index: {}]
  %s10 = sld [smem:[#allocation0]]
  $region58: #{tpu_custom_call.1} parent=0
    _
  %s12 = ssub.s32 1, %s10
  %s13 = scalar_select 0, %s12, %s10
  %v14 = vstv %s6
  %15 = vst [vmem:[#allocation3] sm:$0x1] %v14
  $region1: #{tpu_custom_call.1} parent=0
    #allocation4 [shape = 'u8[196608]{0}', space=vmem, size = 0x30000, scoped, tag = 'input window, operand 1, single buffered']
    #allocation5 [shape = 's32[1]{0}', space=sflag, size = 0x4, scoped, tag = 'scoped memory for tpu_custom_call.1']
    #allocation6 [shape = 's32[1]{0}', space=sflag, size = 0x4, scoped, tag = 'scoped memory for tpu_custom_call.1']
    #allocation7 [shape = 'u8[98304]{0}', space=vmem, size = 0x18000, scoped, tag = 'input window, operand 3, single buffered']
    #allocation8 [shape = 's32[1]{0}', space=sflag, size = 0x4, scoped, tag = 'scoped memory for tpu_custom_call.1']
    #allocation9 [shape = 'u8[98304]{0}', space=vmem, size = 0x18000, scoped, tag = 'input window, operand 7, single buffered']
    #allocation10 [shape = 'u8[8192]{0}', space=vmem, size = 0x2000, scoped, tag = 'output window, operand 0, single buffered']
    %16 = vsyncpa [#allocation5], 0
    %17 = vsyncpa [#allocation8], 0
    %18 = vsyncpa [#allocation6], 0
    // Predicated region
    $region2: #{tpu_custom_call.1} parent=1 // pred_check
      _
    $region3: #{tpu_custom_call.1} parent=1 // pred_check_branch
      %20 = sbr.rel (0) target = $region5
    $region4: #{tpu_custom_call.1} parent=1 // pred_region
      _
    $region5: #{tpu_custom_call.1} parent=1 // pred_fallthru
      _
    // Predicated region
    $region6: #{tpu_custom_call.1} parent=1 // pred_check
      _
    $region7: #{tpu_custom_call.1} parent=1 // pred_check_branch
      %22 = sbr.rel (0) target = $region9
    $region8: #{tpu_custom_call.1} parent=1 // pred_region
      %s24 = ssub.s32 6144, 6144
      %25 = vsyncadd [#allocation5], %s24
      %s26 = sshll.u32 [#allocation4], 4
      %s27 = int_to_ptr.vmem [resolvable:$true] %s26
      %32 = dma.hbm_to_vmem [thread:$0]  %s1, 6144, %s27, [#allocation5], 384, 384, 24
    $region9: #{tpu_custom_call.1} parent=1 // pred_fallthru
      _
    // Predicated region
    $region10: #{tpu_custom_call.1} parent=1 // pred_check
      _
    $region11: #{tpu_custom_call.1} parent=1 // pred_check_branch
      %34 = sbr.rel (0) target = $region13
    $region12: #{tpu_custom_call.1} parent=1 // pred_region
      _
    $region13: #{tpu_custom_call.1} parent=1 // pred_fallthru
      _
    // Predicated region
    $region14: #{tpu_custom_call.1} parent=1 // pred_check
      _
    $region15: #{tpu_custom_call.1} parent=1 // pred_check_branch
      %36 = sbr.rel (0) target = $region17
    $region16: #{tpu_custom_call.1} parent=1 // pred_region
      %s38 = ssub.s32 3072, 3072
      %39 = vsyncadd [#allocation8], %s38
      %s40 = sshll.u32 [#allocation7], 4
      %s41 = int_to_ptr.vmem [resolvable:$true] %s40
      %46 = dma.hbm_to_vmem [thread:$0]  %s3, 3072, %s41, [#allocation8], 192, 192, 12
    $region17: #{tpu_custom_call.1} parent=1 // pred_fallthru
      _
    // Predicated region
    $region18: #{tpu_custom_call.1} parent=1 // pred_check
      _
    $region19: #{tpu_custom_call.1} parent=1 // pred_check_branch
      %48 = sbr.rel (0) target = $region21
    $region20: #{tpu_custom_call.1} parent=1 // pred_region
      _
    $region21: #{tpu_custom_call.1} parent=1 // pred_fallthru
      _
    // Predicated region
    $region22: #{tpu_custom_call.1} parent=1 // pred_check
      _
    $region23: #{tpu_custom_call.1} parent=1 // pred_check_branch
      %50 = sbr.rel (0) target = $region25
    $region24: #{tpu_custom_call.1} parent=1 // pred_region
      _
    $region25: #{tpu_custom_call.1} parent=1 // pred_fallthru
      _
    // Predicated region
    $region26: #{tpu_custom_call.1} parent=1 // pred_check
      _
    $region27: #{tpu_custom_call.1} parent=1 // pred_check_branch
      %52 = sbr.rel (0) target = $region29
    $region28: #{tpu_custom_call.1} parent=1 // pred_region
      _
    $region29: #{tpu_custom_call.1} parent=1 // pred_fallthru
      _
    // Predicated region
    $region30: #{tpu_custom_call.1} parent=1 // pred_check
      _
    $region31: #{tpu_custom_call.1} parent=1 // pred_check_branch
      %54 = sbr.rel (0) target = $region33
    $region32: #{tpu_custom_call.1} parent=1 // pred_region
      %s56 = ssub.s32 3072, 3072
      %57 = vsyncadd [#allocation8], %s56
      %s58 = sshll.u32 [#allocation9], 4
      %s59 = int_to_ptr.vmem [resolvable:$true] %s58
      %64 = dma.hbm_to_vmem [thread:$0]  %s7, 3072, %s59, [#allocation8], 192, 192, 12
    $region33: #{tpu_custom_call.1} parent=1 // pred_fallthru
      _
    // Predicated region
    $region34: #{tpu_custom_call.1} parent=1 // pred_check
      _
    $region35: #{tpu_custom_call.1} parent=1 // pred_check_branch
      %66 = sbr.rel (0) target = $region37
    $region36: #{tpu_custom_call.1} parent=1 // pred_region
      _
    $region37: #{tpu_custom_call.1} parent=1 // pred_fallthru
      _
    // Predicated region
    $region38: #{tpu_custom_call.1} parent=1 // pred_check
      _
    $region39: #{tpu_custom_call.1} parent=1 // pred_check_branch
      %68 = sbr.rel (0) target = $region41
    $region40: #{tpu_custom_call.1} parent=1 // pred_region
      %69 = dma.done [#allocation5], 6144
    $region41: #{tpu_custom_call.1} parent=1 // pred_fallthru
      _
    // Predicated region
    $region42: #{tpu_custom_call.1} parent=1 // pred_check
      _
    $region43: #{tpu_custom_call.1} parent=1 // pred_check_branch
      %71 = sbr.rel (0) target = $region45
    $region44: #{tpu_custom_call.1} parent=1 // pred_region
      %72 = dma.done [#allocation8], 3072
    $region45: #{tpu_custom_call.1} parent=1 // pred_fallthru
      _
    // Predicated region
    $region46: #{tpu_custom_call.1} parent=1 // pred_check
      _
    $region47: #{tpu_custom_call.1} parent=1 // pred_check_branch
      %74 = sbr.rel (0) target = $region49
    $region48: #{tpu_custom_call.1} parent=1 // pred_region
      %75 = dma.done [#allocation8], 3072
    $region49: #{tpu_custom_call.1} parent=1 // pred_fallthru
      _
    %v77 = vld [vmem:[%s0] sm:$0xff]
    %v78 = vld [vmem:[%s0 + $0x8] sm:$0xff]
    %v79 = vpack.c.bf16 %v78, %v77
    %v80 = vld [vmem:[#allocation4] sm:$0xff]
    %v81 = vld [vmem:[#allocation4 + $0x8] sm:$0xff]
    %v82 = vld [vmem:[#allocation4 + $0x10] sm:$0xff]
    %v83 = vld [vmem:[#allocation4 + $0x18] sm:$0xff]
    %v84 = vld [vmem:[#allocation4 + $0x20] sm:$0xff]
    %v85 = vld [vmem:[#allocation4 + $0x28] sm:$0xff]
    %v86 = vld [vmem:[#allocation4 + $0x30] sm:$0xff]
    %v87 = vld [vmem:[#allocation4 + $0x38] sm:$0xff]
    %v88 = vld [vmem:[#allocation4 + $0x40] sm:$0xff]
    %v89 = vld [vmem:[#allocation4 + $0x48] sm:$0xff]
    %v90 = vld [vmem:[#allocation4 + $0x50] sm:$0xff]
    %v91 = vld [vmem:[#allocation4 + $0x58] sm:$0xff]
    %v92 = vld [vmem:[#allocation4 + $0x60] sm:$0xff]
    %v93 = vld [vmem:[#allocation4 + $0x68] sm:$0xff]
    %v94 = vld [vmem:[#allocation4 + $0x70] sm:$0xff]
    %v95 = vld [vmem:[#allocation4 + $0x78] sm:$0xff]
    %v96 = vld [vmem:[#allocation4 + $0x80] sm:$0xff]
    %v97 = vld [vmem:[#allocation4 + $0x88] sm:$0xff]
    %v98 = vld [vmem:[#allocation4 + $0x90] sm:$0xff]
    %v99 = vld [vmem:[#allocation4 + $0x98] sm:$0xff]
    %v100 = vld [vmem:[#allocation4 + $0xa0] sm:$0xff]
    %v101 = vld [vmem:[#allocation4 + $0xa8] sm:$0xff]
    %v102 = vld [vmem:[#allocation4 + $0xb0] sm:$0xff]
    %v103 = vld [vmem:[#allocation4 + $0xb8] sm:$0xff]
    %v104 = vld [vmem:[#allocation4 + $0xc0] sm:$0xff]
    %v105 = vld [vmem:[#allocation4 + $0xc8] sm:$0xff]
    %v106 = vld [vmem:[#allocation4 + $0xd0] sm:$0xff]
    %v107 = vld [vmem:[#allocation4 + $0xd8] sm:$0xff]
    %v108 = vld [vmem:[#allocation4 + $0xe0] sm:$0xff]
    %v109 = vld [vmem:[#allocation4 + $0xe8] sm:$0xff]
    %v110 = vld [vmem:[#allocation4 + $0xf0] sm:$0xff]
    %v111 = vld [vmem:[#allocation4 + $0xf8] sm:$0xff]
    %v112 = vld [vmem:[#allocation4 + $0x100] sm:$0xff]
    %v113 = vld [vmem:[#allocation4 + $0x108] sm:$0xff]
    %v114 = vld [vmem:[#allocation4 + $0x110] sm:$0xff]
    %v115 = vld [vmem:[#allocation4 + $0x118] sm:$0xff]
    %v116 = vld [vmem:[#allocation4 + $0x120] sm:$0xff]
    %v117 = vld [vmem:[#allocation4 + $0x128] sm:$0xff]
    %v118 = vld [vmem:[#allocation4 + $0x130] sm:$0xff]
    %v119 = vld [vmem:[#allocation4 + $0x138] sm:$0xff]
    %v120 = vld [vmem:[#allocation4 + $0x140] sm:$0xff]
    %v121 = vld [vmem:[#allocation4 + $0x148] sm:$0xff]
    %v122 = vld [vmem:[#allocation4 + $0x150] sm:$0xff]
    %v123 = vld [vmem:[#allocation4 + $0x158] sm:$0xff]
    %v124 = vld [vmem:[#allocation4 + $0x160] sm:$0xff]
    %v125 = vld [vmem:[#allocation4 + $0x168] sm:$0xff]
    %v126 = vld [vmem:[#allocation4 + $0x170] sm:$0xff]
    %v127 = vld [vmem:[#allocation4 + $0x178] sm:$0xff]
    %v176 = vunpack.c.l.b16 %v80
    %v177 = vunpack.c.h.b16 %v80
    %v178 = vunpack.c.l.b16 %v81
    %v179 = vunpack.c.h.b16 %v81
    %v180 = vunpack.c.l.b16 %v82
    %v181 = vunpack.c.h.b16 %v82
    %v182 = vunpack.c.l.b16 %v83
    %v183 = vunpack.c.h.b16 %v83
    %v184 = vunpack.c.l.b16 %v84
    %v185 = vunpack.c.h.b16 %v84
    %v186 = vunpack.c.l.b16 %v85
    %v187 = vunpack.c.h.b16 %v85
    %v188 = vunpack.c.l.b16 %v86
    %v189 = vunpack.c.h.b16 %v86
    %v190 = vunpack.c.l.b16 %v87
    %v191 = vunpack.c.h.b16 %v87
    %v192 = vunpack.c.l.b16 %v88
    %v193 = vunpack.c.h.b16 %v88
    %v194 = vunpack.c.l.b16 %v89
    %v195 = vunpack.c.h.b16 %v89
    %v196 = vunpack.c.l.b16 %v90
    %v197 = vunpack.c.h.b16 %v90
    %v198 = vunpack.c.l.b16 %v91
    %v199 = vunpack.c.h.b16 %v91
    %v200 = vunpack.c.l.b16 %v92
    %v201 = vunpack.c.h.b16 %v92
    %v202 = vunpack.c.l.b16 %v93
    %v203 = vunpack.c.h.b16 %v93
    %v204 = vunpack.c.l.b16 %v94
    %v205 = vunpack.c.h.b16 %v94
    %v206 = vunpack.c.l.b16 %v95
    %v207 = vunpack.c.h.b16 %v95
    %v208 = vunpack.c.l.b16 %v96
    %v209 = vunpack.c.h.b16 %v96
    %v210 = vunpack.c.l.b16 %v97
    %v211 = vunpack.c.h.b16 %v97
    %v212 = vunpack.c.l.b16 %v98
    %v213 = vunpack.c.h.b16 %v98
    %v214 = vunpack.c.l.b16 %v99
    %v215 = vunpack.c.h.b16 %v99
    %v216 = vunpack.c.l.b16 %v100
    %v217 = vunpack.c.h.b16 %v100
    %v218 = vunpack.c.l.b16 %v101
    %v219 = vunpack.c.h.b16 %v101
    %v220 = vunpack.c.l.b16 %v102
    %v221 = vunpack.c.h.b16 %v102
    %v222 = vunpack.c.l.b16 %v103
    %v223 = vunpack.c.h.b16 %v103
    %v224 = vunpack.c.l.b16 %v104
    %v225 = vunpack.c.h.b16 %v104
    %v226 = vunpack.c.l.b16 %v105
    %v227 = vunpack.c.h.b16 %v105
    %v228 = vunpack.c.l.b16 %v106
    %v229 = vunpack.c.h.b16 %v106
    %v230 = vunpack.c.l.b16 %v107
    %v231 = vunpack.c.h.b16 %v107
    %v232 = vunpack.c.l.b16 %v108
    %v233 = vunpack.c.h.b16 %v108
    %v234 = vunpack.c.l.b16 %v109
    %v235 = vunpack.c.h.b16 %v109
    %v236 = vunpack.c.l.b16 %v110
    %v237 = vunpack.c.h.b16 %v110
    %v238 = vunpack.c.l.b16 %v111
    %v239 = vunpack.c.h.b16 %v111
    %v240 = vunpack.c.l.b16 %v112
    %v241 = vunpack.c.h.b16 %v112
    %v242 = vunpack.c.l.b16 %v113
    %v243 = vunpack.c.h.b16 %v113
    %v244 = vunpack.c.l.b16 %v114
    %v245 = vunpack.c.h.b16 %v114
    %v246 = vunpack.c.l.b16 %v115
    %v247 = vunpack.c.h.b16 %v115
    %v248 = vunpack.c.l.b16 %v116
    %v249 = vunpack.c.h.b16 %v116
    %v250 = vunpack.c.l.b16 %v117
    %v251 = vunpack.c.h.b16 %v117
    %v252 = vunpack.c.l.b16 %v118
    %v253 = vunpack.c.h.b16 %v118
    %v254 = vunpack.c.l.b16 %v119
    %v255 = vunpack.c.h.b16 %v119
    %v256 = vunpack.c.l.b16 %v120
    %v257 = vunpack.c.h.b16 %v120
    %v258 = vunpack.c.l.b16 %v121
    %v259 = vunpack.c.h.b16 %v121
    %v260 = vunpack.c.l.b16 %v122
    %v261 = vunpack.c.h.b16 %v122
    %v262 = vunpack.c.l.b16 %v123
    %v263 = vunpack.c.h.b16 %v123
    %v264 = vunpack.c.l.b16 %v124
    %v265 = vunpack.c.h.b16 %v124
    %v266 = vunpack.c.l.b16 %v125
    %v267 = vunpack.c.h.b16 %v125
    %v268 = vunpack.c.l.b16 %v126
    %v269 = vunpack.c.h.b16 %v126
    %v270 = vunpack.c.l.b16 %v127
    %v271 = vunpack.c.h.b16 %v127
    %v272 = vpack.c.b16 %v182, %v176
    %v273 = vpack.c.b16 %v183, %v177
    %v274 = vpack.c.b16 %v184, %v178
    %v275 = vpack.c.b16 %v185, %v179
    %v276 = vpack.c.b16 %v186, %v180
    %v277 = vpack.c.b16 %v187, %v181
    %v278 = vpack.c.b16 %v194, %v188
    %v279 = vpack.c.b16 %v195, %v189
    %v280 = vpack.c.b16 %v196, %v190
    %v281 = vpack.c.b16 %v197, %v191
    %v282 = vpack.c.b16 %v198, %v192
    %v283 = vpack.c.b16 %v199, %v193
    %v284 = vpack.c.b16 %v206, %v200
    %v285 = vpack.c.b16 %v207, %v201
    %v286 = vpack.c.b16 %v208, %v202
    %v287 = vpack.c.b16 %v209, %v203
    %v288 = vpack.c.b16 %v210, %v204
    %v289 = vpack.c.b16 %v211, %v205
    %v290 = vpack.c.b16 %v218, %v212
    %v291 = vpack.c.b16 %v219, %v213
    %v292 = vpack.c.b16 %v220, %v214
    %v293 = vpack.c.b16 %v221, %v215
    %v294 = vpack.c.b16 %v222, %v216
    %v295 = vpack.c.b16 %v223, %v217
    %v296 = vpack.c.b16 %v230, %v224
    %v297 = vpack.c.b16 %v231, %v225
    %v298 = vpack.c.b16 %v232, %v226
    %v299 = vpack.c.b16 %v233, %v227
    %v300 = vpack.c.b16 %v234, %v228
    %v301 = vpack.c.b16 %v235, %v229
    %v302 = vpack.c.b16 %v242, %v236
    %v303 = vpack.c.b16 %v243, %v237
    %v304 = vpack.c.b16 %v244, %v238
    %v305 = vpack.c.b16 %v245, %v239
    %v306 = vpack.c.b16 %v246, %v240
    %v307 = vpack.c.b16 %v247, %v241
    %v308 = vpack.c.b16 %v254, %v248
    %v309 = vpack.c.b16 %v255, %v249
    %v310 = vpack.c.b16 %v256, %v250
    %v311 = vpack.c.b16 %v257, %v251
    %v312 = vpack.c.b16 %v258, %v252
    %v313 = vpack.c.b16 %v259, %v253
    %v314 = vpack.c.b16 %v266, %v260
    %v315 = vpack.c.b16 %v267, %v261
    %v316 = vpack.c.b16 %v268, %v262
    %v317 = vpack.c.b16 %v269, %v263
    %v318 = vpack.c.b16 %v270, %v264
    %v319 = vpack.c.b16 %v271, %v265
    %368 = vmatprep.subr.bf16.mxu0 %v273
    %369 = vmatpush1.bf16.msra.mxu0 %v272
    %370 = vmatprep.subr.bf16.mxu0 %v279
    %371 = vmatpush1.bf16.msra.mxu0 %v278
    %372 = vmatprep.subr.bf16.mxu0 %v285
    %373 = vmatpush1.bf16.msra.mxu0 %v284
    %374 = vmatprep.subr.bf16.mxu0 %v291
    %375 = vmatpush1.bf16.msra.mxu0 %v290
    %376 = vmatprep.subr.bf16.mxu0 %v297
    %377 = vmatpush1.bf16.msra.mxu0 %v296
    %378 = vmatprep.subr.bf16.mxu0 %v303
    %379 = vmatpush1.bf16.msra.mxu0 %v302
    %380 = vmatprep.subr.bf16.mxu0 %v309
    %381 = vmatpush1.bf16.msra.mxu0 %v308
    %382 = vmatprep.subr.bf16.mxu0 %v315
    %383 = vmatpush1.bf16.msra.mxu0 %v314
    %384 = vmatprep.subr.bf16.mxu0 0
    %385 = vmatpush1.bf16.msra.mxu0 0
    %386 = vmatprep.subr.bf16.mxu0 0
    %387 = vmatpush1.bf16.msra.mxu0 0
    %388 = vmatprep.subr.bf16.mxu0 0
    %389 = vmatpush1.bf16.msra.mxu0 0
    %390 = vmatprep.subr.bf16.mxu0 0
    %391 = vmatpush1.bf16.msra.mxu0 0
    %392 = vmatprep.subr.bf16.mxu0 0
    %393 = vmatpush1.bf16.msra.mxu0 0
    %394 = vmatprep.subr.bf16.mxu0 0
    %395 = vmatpush1.bf16.msra.mxu0 0
    %396 = vmatprep.subr.bf16.mxu0 0
    %397 = vmatpush1.bf16.msra.mxu0 0
    %398 = vmatprep.subr.bf16.mxu0 0
    %399 = vmatpush1.bf16.msra.mxu0 0
    %400 = vmatprep.mubr.bf16.mxu0 0
    %401 = vmatmul.mubr.bf16.gmra.mrb[0].mxu0 %v79
    %v402 = vpop.f32.mrb[0].mxu0
    %v403 = vadd.f32 0.0, %v402
    %v404 = vpop.f32.mrb[0].mxu0
    %v405 = vadd.f32 0.0, %v404
    %v406 = vpop.f32.mrb[0].mxu0
    %v407 = vadd.f32 0.0, %v406
    %v408 = vpop.f32.mrb[0].mxu0
    %v409 = vadd.f32 0.0, %v408
    %410 = vdwg.mxu0
    %411 = vmatprep.subr.bf16.mxu0 %v275
    %412 = vmatpush1.bf16.msra.mxu0 %v274
    %413 = vmatprep.subr.bf16.mxu0 %v281
    %414 = vmatpush1.bf16.msra.mxu0 %v280
    %415 = vmatprep.subr.bf16.mxu0 %v287
    %416 = vmatpush1.bf16.msra.mxu0 %v286
    %417 = vmatprep.subr.bf16.mxu0 %v293
    %418 = vmatpush1.bf16.msra.mxu0 %v292
    %419 = vmatprep.subr.bf16.mxu0 %v299
    %420 = vmatpush1.bf16.msra.mxu0 %v298
    %421 = vmatprep.subr.bf16.mxu0 %v305
    %422 = vmatpush1.bf16.msra.mxu0 %v304
    %423 = vmatprep.subr.bf16.mxu0 %v311
    %424 = vmatpush1.bf16.msra.mxu0 %v310
    %425 = vmatprep.subr.bf16.mxu0 %v317
    %426 = vmatpush1.bf16.msra.mxu0 %v316
    %427 = vmatprep.subr.bf16.mxu0 0
    %428 = vmatpush1.bf16.msra.mxu0 0
    %429 = vmatprep.subr.bf16.mxu0 0
    %430 = vmatpush1.bf16.msra.mxu0 0
    %431 = vmatprep.subr.bf16.mxu0 0
    %432 = vmatpush1.bf16.msra.mxu0 0
    %433 = vmatprep.subr.bf16.mxu0 0
    %434 = vmatpush1.bf16.msra.mxu0 0
    %435 = vmatprep.subr.bf16.mxu0 0
    %436 = vmatpush1.bf16.msra.mxu0 0
    %437 = vmatprep.subr.bf16.mxu0 0
    %438 = vmatpush1.bf16.msra.mxu0 0
    %439 = vmatprep.subr.bf16.mxu0 0
    %440 = vmatpush1.bf16.msra.mxu0 0
    %441 = vmatprep.subr.bf16.mxu0 0
    %442 = vmatpush1.bf16.msra.mxu0 0
    %443 = vmatprep.mubr.bf16.mxu0 0
    %444 = vmatmul.mubr.bf16.gmra.mrb[0].mxu0 %v79
    %v445 = vpop.f32.mrb[0].mxu0
    %v446 = vadd.f32 0.0, %v445
    %v447 = vpop.f32.mrb[0].mxu0
    %v448 = vadd.f32 0.0, %v447
    %v449 = vpop.f32.mrb[0].mxu0
    %v450 = vadd.f32 0.0, %v449
    %v451 = vpop.f32.mrb[0].mxu0
    %v452 = vadd.f32 0.0, %v451
    %453 = vdwg.mxu0
    %454 = vmatprep.subr.bf16.mxu0 %v277
    %455 = vmatpush1.bf16.msra.mxu0 %v276
    %456 = vmatprep.subr.bf16.mxu0 %v283
    %457 = vmatpush1.bf16.msra.mxu0 %v282
    %458 = vmatprep.subr.bf16.mxu0 %v289
    %459 = vmatpush1.bf16.msra.mxu0 %v288
    %460 = vmatprep.subr.bf16.mxu0 %v295
    %461 = vmatpush1.bf16.msra.mxu0 %v294
    %462 = vmatprep.subr.bf16.mxu0 %v301
    %463 = vmatpush1.bf16.msra.mxu0 %v300
    %464 = vmatprep.subr.bf16.mxu0 %v307
    %465 = vmatpush1.bf16.msra.mxu0 %v306
    %466 = vmatprep.subr.bf16.mxu0 %v313
    %467 = vmatpush1.bf16.msra.mxu0 %v312
    %468 = vmatprep.subr.bf16.mxu0 %v319
    %469 = vmatpush1.bf16.msra.mxu0 %v318
    %470 = vmatprep.subr.bf16.mxu0 0
    %471 = vmatpush1.bf16.msra.mxu0 0
    %472 = vmatprep.subr.bf16.mxu0 0
    %473 = vmatpush1.bf16.msra.mxu0 0
    %474 = vmatprep.subr.bf16.mxu0 0
    %475 = vmatpush1.bf16.msra.mxu0 0
    %476 = vmatprep.subr.bf16.mxu0 0
    %477 = vmatpush1.bf16.msra.mxu0 0
    %478 = vmatprep.subr.bf16.mxu0 0
    %479 = vmatpush1.bf16.msra.mxu0 0
    %480 = vmatprep.subr.bf16.mxu0 0
    %481 = vmatpush1.bf16.msra.mxu0 0
    %482 = vmatprep.subr.bf16.mxu0 0
    %483 = vmatpush1.bf16.msra.mxu0 0
    %484 = vmatprep.subr.bf16.mxu0 0
    %485 = vmatpush1.bf16.msra.mxu0 0
    %486 = vmatprep.mubr.bf16.mxu0 0
    %487 = vmatmul.mubr.bf16.gmra.mrb[0].mxu0 %v79
    %v488 = vpop.f32.mrb[0].mxu0
    %v489 = vadd.f32 0.0, %v488
    %v490 = vpop.f32.mrb[0].mxu0
    %v491 = vadd.f32 0.0, %v490
    %v492 = vpop.f32.mrb[0].mxu0
    %v493 = vadd.f32 0.0, %v492
    %v494 = vpop.f32.mrb[0].mxu0
    %v495 = vadd.f32 0.0, %v494
    %496 = vdwg.mxu0
    %v497 = vld [vmem:[%s2] sm:$0x7]
    %v499 = vlaneseq
    %v500 = vshrl.u32 %v499, 7
    %v501 = vsub.s32 0, %v500
    %v502 = vrot.slane %v497, %v501
    %v503 = vlaneseq
    %v504 = vshrl.u32 %v503, 7
    %v505 = vsub.s32 1, %v504
    %v506 = vrot.slane %v497, %v505
    %v507 = vlaneseq
    %v508 = vshrl.u32 %v507, 7
    %v509 = vsub.s32 2, %v508
    %v510 = vrot.slane %v497, %v509
    %v514 = vadd.f32 %v403, %v502
    %v515 = vadd.f32 %v405, %v506
    %v516 = vadd.f32 %v446, %v510
    %v517 = vadd.f32 %v407, %v502
    %v518 = vadd.f32 %v409, %v506
    %v519 = vadd.f32 %v450, %v510
    %v520 = vld [vmem:[#allocation7] sm:$0xff]
    %v521 = vld [vmem:[#allocation7 + $0x8] sm:$0xf]
    %v522 = vld [vmem:[#allocation7 + $0xc] sm:$0xff]
    %v523 = vld [vmem:[#allocation7 + $0x14] sm:$0xf]
    %v524 = vld [vmem:[#allocation7 + $0x18] sm:$0xff]
    %v525 = vld [vmem:[#allocation7 + $0x20] sm:$0xf]
    %v526 = vld [vmem:[#allocation7 + $0x24] sm:$0xff]
    %v527 = vld [vmem:[#allocation7 + $0x2c] sm:$0xf]
    %v528 = vld [vmem:[#allocation7 + $0x30] sm:$0xff]
    %v529 = vld [vmem:[#allocation7 + $0x38] sm:$0xf]
    %v530 = vld [vmem:[#allocation7 + $0x3c] sm:$0xff]
    %v531 = vld [vmem:[#allocation7 + $0x44] sm:$0xf]
    %v532 = vld [vmem:[#allocation7 + $0x48] sm:$0xff]
    %v533 = vld [vmem:[#allocation7 + $0x50] sm:$0xf]
    %v534 = vld [vmem:[#allocation7 + $0x54] sm:$0xff]
    %v535 = vld [vmem:[#allocation7 + $0x5c] sm:$0xf]
    %v536 = vld [vmem:[#allocation7 + $0x60] sm:$0xff]
    %v537 = vld [vmem:[#allocation7 + $0x68] sm:$0xf]
    %v538 = vld [vmem:[#allocation7 + $0x6c] sm:$0xff]
    %v539 = vld [vmem:[#allocation7 + $0x74] sm:$0xf]
    %v540 = vld [vmem:[#allocation7 + $0x78] sm:$0xff]
    %v541 = vld [vmem:[#allocation7 + $0x80] sm:$0xf]
    %v542 = vld [vmem:[#allocation7 + $0x84] sm:$0xff]
    %v543 = vld [vmem:[#allocation7 + $0x8c] sm:$0xf]
    %v544 = vld [vmem:[#allocation7 + $0x90] sm:$0xff]
    %v545 = vld [vmem:[#allocation7 + $0x98] sm:$0xf]
    %v546 = vld [vmem:[#allocation7 + $0x9c] sm:$0xff]
    %v547 = vld [vmem:[#allocation7 + $0xa4] sm:$0xf]
    %v548 = vld [vmem:[#allocation7 + $0xa8] sm:$0xff]
    %v549 = vld [vmem:[#allocation7 + $0xb0] sm:$0xf]
    %v550 = vld [vmem:[#allocation7 + $0xb4] sm:$0xff]
    %v551 = vld [vmem:[#allocation7 + $0xbc] sm:$0xf]
    %v552 = vld [vmem:[%s4] sm:$0x1]
    %v585 = vunpack.c.l.b16 %v520
    %v586 = vunpack.c.h.b16 %v520
    %v587 = vunpack.c.l.b16 %v521
    %v588 = vunpack.c.l.b16 %v522
    %v589 = vunpack.c.h.b16 %v522
    %v590 = vunpack.c.l.b16 %v523
    %v591 = vunpack.c.l.b16 %v524
    %v592 = vunpack.c.h.b16 %v524
    %v593 = vunpack.c.l.b16 %v525
    %v594 = vunpack.c.l.b16 %v526
    %v595 = vunpack.c.h.b16 %v526
    %v596 = vunpack.c.l.b16 %v527
    %v597 = vunpack.c.l.b16 %v528
    %v598 = vunpack.c.h.b16 %v528
    %v599 = vunpack.c.l.b16 %v529
    %v600 = vunpack.c.l.b16 %v530
    %v601 = vunpack.c.h.b16 %v530
    %v602 = vunpack.c.l.b16 %v531
    %v603 = vunpack.c.l.b16 %v532
    %v604 = vunpack.c.h.b16 %v532
    %v605 = vunpack.c.l.b16 %v533
    %v606 = vunpack.c.l.b16 %v534
    %v607 = vunpack.c.h.b16 %v534
    %v608 = vunpack.c.l.b16 %v535
    %v609 = vunpack.c.l.b16 %v536
    %v610 = vunpack.c.h.b16 %v536
    %v611 = vunpack.c.l.b16 %v537
    %v612 = vunpack.c.l.b16 %v538
    %v613 = vunpack.c.h.b16 %v538
    %v614 = vunpack.c.l.b16 %v539
    %v615 = vunpack.c.l.b16 %v540
    %v616 = vunpack.c.h.b16 %v540
    %v617 = vunpack.c.l.b16 %v541
    %v618 = vunpack.c.l.b16 %v542
    %v619 = vunpack.c.h.b16 %v542
    %v620 = vunpack.c.l.b16 %v543
    %v621 = vunpack.c.l.b16 %v544
    %v622 = vunpack.c.h.b16 %v544
    %v623 = vunpack.c.l.b16 %v545
    %v624 = vunpack.c.l.b16 %v546
    %v625 = vunpack.c.h.b16 %v546
    %v626 = vunpack.c.l.b16 %v547
    %v627 = vunpack.c.l.b16 %v548
    %v628 = vunpack.c.h.b16 %v548
    %v629 = vunpack.c.l.b16 %v549
    %v630 = vunpack.c.l.b16 %v550
    %v631 = vunpack.c.h.b16 %v550
    %v632 = vunpack.c.l.b16 %v551
    %v633 = vpack.c.b16 %v588, %v585
    %v634 = vpack.c.b16 %v589, %v586
    %v635 = vpack.c.b16 %v590, %v587
    %v636 = vpack.c.b16 %v594, %v591
    %v637 = vpack.c.b16 %v595, %v592
    %v638 = vpack.c.b16 %v596, %v593
    %v639 = vpack.c.b16 %v600, %v597
    %v640 = vpack.c.b16 %v601, %v598
    %v641 = vpack.c.b16 %v602, %v599
    %v642 = vpack.c.b16 %v606, %v603
    %v643 = vpack.c.b16 %v607, %v604
    %v644 = vpack.c.b16 %v608, %v605
    %v645 = vpack.c.b16 %v612, %v609
    %v646 = vpack.c.b16 %v613, %v610
    %v647 = vpack.c.b16 %v614, %v611
    %v648 = vpack.c.b16 %v618, %v615
    %v649 = vpack.c.b16 %v619, %v616
    %v650 = vpack.c.b16 %v620, %v617
    %v651 = vpack.c.b16 %v624, %v621
    %v652 = vpack.c.b16 %v625, %v622
    %v653 = vpack.c.b16 %v626, %v623
    %v654 = vpack.c.b16 %v630, %v627
    %v655 = vpack.c.b16 %v631, %v628
    %v656 = vpack.c.b16 %v632, %v629
    %681 = vmatprep.subr.bf16.mxu0 %v634
    %682 = vmatpush1.bf16.msra.mxu0 %v633
    %683 = vmatprep.subr.bf16.mxu0 %v637
    %684 = vmatpush1.bf16.msra.mxu0 %v636
    %685 = vmatprep.subr.bf16.mxu0 %v640
    %686 = vmatpush1.bf16.msra.mxu0 %v639
    %687 = vmatprep.subr.bf16.mxu0 %v643
    %688 = vmatpush1.bf16.msra.mxu0 %v642
    %689 = vmatprep.subr.bf16.mxu0 %v646
    %690 = vmatpush1.bf16.msra.mxu0 %v645
    %691 = vmatprep.subr.bf16.mxu0 %v649
    %692 = vmatpush1.bf16.msra.mxu0 %v648
    %693 = vmatprep.subr.bf16.mxu0 %v652
    %694 = vmatpush1.bf16.msra.mxu0 %v651
    %695 = vmatprep.subr.bf16.mxu0 %v655
    %696 = vmatpush1.bf16.msra.mxu0 %v654
    %697 = vmatprep.subr.bf16.mxu0 0
    %698 = vmatpush1.bf16.msra.mxu0 0
    %699 = vmatprep.subr.bf16.mxu0 0
    %700 = vmatpush1.bf16.msra.mxu0 0
    %701 = vmatprep.subr.bf16.mxu0 0
    %702 = vmatpush1.bf16.msra.mxu0 0
    %703 = vmatprep.subr.bf16.mxu0 0
    %704 = vmatpush1.bf16.msra.mxu0 0
    %705 = vmatprep.subr.bf16.mxu0 0
    %706 = vmatpush1.bf16.msra.mxu0 0
    %707 = vmatprep.subr.bf16.mxu0 0
    %708 = vmatpush1.bf16.msra.mxu0 0
    %709 = vmatprep.subr.bf16.mxu0 0
    %710 = vmatpush1.bf16.msra.mxu0 0
    %711 = vmatprep.subr.bf16.mxu0 0
    %712 = vmatpush1.bf16.msra.mxu0 0
    %713 = vmatprep.mubr.bf16.mxu0 0
    %714 = vmatmul.mubr.bf16.gmra.mrb[0].mxu0 0
    %v715 = vpop.f32.mrb[0].mxu0
    %v716 = vadd.f32 0.0, %v715
    %v717 = vpop.f32.mrb[0].mxu0
    %v718 = vadd.f32 0.0, %v717
    %v719 = vpop.f32.mrb[0].mxu0
    %v720 = vpop.f32.mrb[0].mxu0
    %721 = vdwg.mxu0
    %722 = vmatprep.subr.bf16.mxu0 0
    %723 = vmatpush1.bf16.msra.mxu0 %v635
    %724 = vmatprep.subr.bf16.mxu0 0
    %725 = vmatpush1.bf16.msra.mxu0 %v638
    %726 = vmatprep.subr.bf16.mxu0 0
    %727 = vmatpush1.bf16.msra.mxu0 %v641
    %728 = vmatprep.subr.bf16.mxu0 0
    %729 = vmatpush1.bf16.msra.mxu0 %v644
    %730 = vmatprep.subr.bf16.mxu0 0
    %731 = vmatpush1.bf16.msra.mxu0 %v647
    %732 = vmatprep.subr.bf16.mxu0 0
    %733 = vmatpush1.bf16.msra.mxu0 %v650
    %734 = vmatprep.subr.bf16.mxu0 0
    %735 = vmatpush1.bf16.msra.mxu0 %v653
    %736 = vmatprep.subr.bf16.mxu0 0
    %737 = vmatpush1.bf16.msra.mxu0 %v656
    %738 = vmatprep.subr.bf16.mxu0 0
    %739 = vmatpush1.bf16.msra.mxu0 0
    %740 = vmatprep.subr.bf16.mxu0 0
    %741 = vmatpush1.bf16.msra.mxu0 0
    %742 = vmatprep.subr.bf16.mxu0 0
    %743 = vmatpush1.bf16.msra.mxu0 0
    %744 = vmatprep.subr.bf16.mxu0 0
    %745 = vmatpush1.bf16.msra.mxu0 0
    %746 = vmatprep.subr.bf16.mxu0 0
    %747 = vmatpush1.bf16.msra.mxu0 0
    %748 = vmatprep.subr.bf16.mxu0 0
    %749 = vmatpush1.bf16.msra.mxu0 0
    %750 = vmatprep.subr.bf16.mxu0 0
    %751 = vmatpush1.bf16.msra.mxu0 0
    %752 = vmatprep.subr.bf16.mxu0 0
    %753 = vmatpush1.bf16.msra.mxu0 0
    %754 = vmatprep.mubr.bf16.mxu0 0
    %755 = vmatmul.mubr.bf16.gmra.mrb[0].mxu0 0
    %v756 = vpop.f32.mrb[0].mxu0
    %v757 = vadd.f32 0.0, %v756
    %v758 = vpop.f32.mrb[0].mxu0
    %v759 = vpop.f32.mrb[0].mxu0
    %v760 = vpop.f32.mrb[0].mxu0
    %761 = vdwg.mxu0
    %v763 = vrot.slane %v716, 1
    %v766 = vadd.f32 %v514, %v716
    %v767 = vadd.f32 %v517, %v763
    %v768 = vxor.u32 %v766, 2147483648
    %v769 = vxor.u32 %v767, 2147483648
    %v770 = vmul.f32 %v768, 1.442695
    %v771 = vpow.pop %v770
    %v772 = vmul.f32 %v769, 1.442695
    %v773 = vpow.pop %v772
    %v774 = vadd.f32 %v771, 1.0
    %v775 = vadd.f32 %v773, 1.0
    %v776 = vrcp.pop %v774
    %v777 = vmul.f32 1.0, %v776
    %v778 = vrcp.pop %v775
    %v779 = vmul.f32 1.0, %v778
    %v781 = vrot.slane %v718, 1
    %v784 = vadd.f32 %v515, %v718
    %v785 = vadd.f32 %v518, %v781
    %v786 = vxor.u32 %v784, 2147483648
    %v787 = vxor.u32 %v785, 2147483648
    %v788 = vmul.f32 %v786, 1.442695
    %v789 = vpow.pop %v788
    %v790 = vmul.f32 %v787, 1.442695
    %v791 = vpow.pop %v790
    %v792 = vadd.f32 %v789, 1.0
    %v793 = vadd.f32 %v791, 1.0
    %v794 = vrcp.pop %v792
    %v795 = vmul.f32 1.0, %v794
    %v796 = vrcp.pop %v793
    %v797 = vmul.f32 1.0, %v796
    %v799 = vlaneseq
    %v800 = vshrl.u32 %v799, 7
    %v801 = vsub.s32 0, %v800
    %v802 = vrot.slane %v552, %v801
    %v804 = vadd.f32 %v757, %v802
    %v806 = vrot.slane %v804, 1
    %v809 = vmul.f32 %v777, %v804
    %v810 = vmul.f32 %v779, %v806
    %v811 = vadd.f32 %v516, %v809
    %v812 = vadd.f32 %v519, %v810
    %v813 = vtanh.pop %v811
    %v814 = vtanh.pop %v812
    %v815 = vsub.f32 1.0, %v795
    %v816 = vsub.f32 1.0, %v797
    %v817 = vmul.f32 %v815, %v813
    %v818 = vmul.f32 %v816, %v814
    %v819 = vmul.f32 %v795, 0.0
    %v820 = vmul.f32 %v797, 0.0
    %v821 = vadd.f32 %v817, %v819
    %v822 = vadd.f32 %v818, %v820
    %823 = vst [vmem:[#allocation2] sm:$0x1] %v821
    %824 = vst [vmem:[#allocation2 + $0x8] sm:$0x1] %v822
    %v825 = vpack.c.bf16 %v821, %v821
    %v826 = vpack.c.bf16 %v822, %v822
    %v829 = vunpack.c.l.b16 %v825
    %v830 = vunpack.c.l.b16 %v826
    %v831 = vrot.slane %v830, 7
    %vm832 = vcmask 1041409
    %v833 = vsel %vm832, %v831, %v829
    %v834 = vpack.c.b16 %v833, %v833
    %836 = vmatprep.subr.bf16.mxu0 %v634
    %837 = vmatpush1.bf16.msra.mxu0 %v633
    %838 = vmatprep.subr.bf16.mxu0 %v637
    %839 = vmatpush1.bf16.msra.mxu0 %v636
    %840 = vmatprep.subr.bf16.mxu0 %v640
    %841 = vmatpush1.bf16.msra.mxu0 %v639
    %842 = vmatprep.subr.bf16.mxu0 %v643
    %843 = vmatpush1.bf16.msra.mxu0 %v642
    %844 = vmatprep.subr.bf16.mxu0 %v646
    %845 = vmatpush1.bf16.msra.mxu0 %v645
    %846 = vmatprep.subr.bf16.mxu0 %v649
    %847 = vmatpush1.bf16.msra.mxu0 %v648
    %848 = vmatprep.subr.bf16.mxu0 %v652
    %849 = vmatpush1.bf16.msra.mxu0 %v651
    %850 = vmatprep.subr.bf16.mxu0 %v655
    %851 = vmatpush1.bf16.msra.mxu0 %v654
    %852 = vmatprep.subr.bf16.mxu0 0
    %853 = vmatpush1.bf16.msra.mxu0 0
    %854 = vmatprep.subr.bf16.mxu0 0
    %855 = vmatpush1.bf16.msra.mxu0 0
    %856 = vmatprep.subr.bf16.mxu0 0
    %857 = vmatpush1.bf16.msra.mxu0 0
    %858 = vmatprep.subr.bf16.mxu0 0
    %859 = vmatpush1.bf16.msra.mxu0 0
    %860 = vmatprep.subr.bf16.mxu0 0
    %861 = vmatpush1.bf16.msra.mxu0 0
    %862 = vmatprep.subr.bf16.mxu0 0
    %863 = vmatpush1.bf16.msra.mxu0 0
    %864 = vmatprep.subr.bf16.mxu0 0
    %865 = vmatpush1.bf16.msra.mxu0 0
    %866 = vmatprep.subr.bf16.mxu0 0
    %867 = vmatpush1.bf16.msra.mxu0 0
    %868 = vmatprep.mubr.bf16.mxu0 0
    %869 = vmatmul.mubr.bf16.gmra.mrb[0].mxu0 %v834
    %v870 = vpop.f32.mrb[0].mxu0
    %v871 = vadd.f32 0.0, %v870
    %v872 = vpop.f32.mrb[0].mxu0
    %v873 = vadd.f32 0.0, %v872
    %v874 = vpop.f32.mrb[0].mxu0
    %v875 = vpop.f32.mrb[0].mxu0
    %876 = vdwg.mxu0
    %877 = vmatprep.subr.bf16.mxu0 0
    %878 = vmatpush1.bf16.msra.mxu0 %v635
    %879 = vmatprep.subr.bf16.mxu0 0
    %880 = vmatpush1.bf16.msra.mxu0 %v638
    %881 = vmatprep.subr.bf16.mxu0 0
    %882 = vmatpush1.bf16.msra.mxu0 %v641
    %883 = vmatprep.subr.bf16.mxu0 0
    %884 = vmatpush1.bf16.msra.mxu0 %v644
    %885 = vmatprep.subr.bf16.mxu0 0
    %886 = vmatpush1.bf16.msra.mxu0 %v647
    %887 = vmatprep.subr.bf16.mxu0 0
    %888 = vmatpush1.bf16.msra.mxu0 %v650
    %889 = vmatprep.subr.bf16.mxu0 0
    %890 = vmatpush1.bf16.msra.mxu0 %v653
    %891 = vmatprep.subr.bf16.mxu0 0
    %892 = vmatpush1.bf16.msra.mxu0 %v656
    %893 = vmatprep.subr.bf16.mxu0 0
    %894 = vmatpush1.bf16.msra.mxu0 0
    %895 = vmatprep.subr.bf16.mxu0 0
    %896 = vmatpush1.bf16.msra.mxu0 0
    %897 = vmatprep.subr.bf16.mxu0 0
    %898 = vmatpush1.bf16.msra.mxu0 0
    %899 = vmatprep.subr.bf16.mxu0 0
    %900 = vmatpush1.bf16.msra.mxu0 0
    %901 = vmatprep.subr.bf16.mxu0 0
    %902 = vmatpush1.bf16.msra.mxu0 0
    %903 = vmatprep.subr.bf16.mxu0 0
    %904 = vmatpush1.bf16.msra.mxu0 0
    %905 = vmatprep.subr.bf16.mxu0 0
    %906 = vmatpush1.bf16.msra.mxu0 0
    %907 = vmatprep.subr.bf16.mxu0 0
    %908 = vmatpush1.bf16.msra.mxu0 0
    %909 = vmatprep.mubr.bf16.mxu0 0
    %910 = vmatmul.mubr.bf16.gmra.mrb[0].mxu0 %v834
    %v911 = vpop.f32.mrb[0].mxu0
    %v912 = vadd.f32 0.0, %v911
    %v913 = vpop.f32.mrb[0].mxu0
    %v914 = vpop.f32.mrb[0].mxu0
    %v915 = vpop.f32.mrb[0].mxu0
    %916 = vdwg.mxu0
    %v918 = vrot.slane %v871, 7
    %v921 = vadd.f32 %v514, %v918
    %v922 = vadd.f32 %v517, %v871
    %v923 = vxor.u32 %v921, 2147483648
    %v924 = vxor.u32 %v922, 2147483648
    %v925 = vmul.f32 %v923, 1.442695
    %v926 = vpow.pop %v925
    %v927 = vmul.f32 %v924, 1.442695
    %v928 = vpow.pop %v927
    %v929 = vadd.f32 %v926, 1.0
    %v930 = vadd.f32 %v928, 1.0
    %v931 = vrcp.pop %v929
    %v932 = vmul.f32 1.0, %v931
    %v933 = vrcp.pop %v930
    %v934 = vmul.f32 1.0, %v933
    %v936 = vrot.slane %v873, 7
    %v939 = vadd.f32 %v515, %v936
    %v940 = vadd.f32 %v518, %v873
    %v941 = vxor.u32 %v939, 2147483648
    %v942 = vxor.u32 %v940, 2147483648
    %v943 = vmul.f32 %v941, 1.442695
    %v944 = vpow.pop %v943
    %v945 = vmul.f32 %v942, 1.442695
    %v946 = vpow.pop %v945
    %v947 = vadd.f32 %v944, 1.0
    %v948 = vadd.f32 %v946, 1.0
    %v949 = vrcp.pop %v947
    %v950 = vmul.f32 1.0, %v949
    %v951 = vrcp.pop %v948
    %v952 = vmul.f32 1.0, %v951
    %v953 = vadd.f32 %v912, %v802
    %v955 = vrot.slane %v953, 7
    %v958 = vmul.f32 %v932, %v955
    %v959 = vmul.f32 %v934, %v953
    %v960 = vadd.f32 %v516, %v958
    %v961 = vadd.f32 %v519, %v959
    %v962 = vtanh.pop %v960
    %v963 = vtanh.pop %v961
    %v964 = vsub.f32 1.0, %v950
    %v965 = vsub.f32 1.0, %v952
    %v966 = vmul.f32 %v964, %v962
    %v967 = vmul.f32 %v965, %v963
    %v970 = vrot.slane %v821, 7
    %v971 = vrot.slane %v822, 7
    %v974 = vmul.f32 %v950, %v970
    %v975 = vmul.f32 %v952, %v971
    %v976 = vadd.f32 %v966, %v974
    %v977 = vadd.f32 %v967, %v975
    %978 = vst [vmem:[#allocation2] sm:$0x2] %v976
    %979 = vst [vmem:[#allocation2 + $0x8] sm:$0x2] %v977
    %v980 = vpack.c.bf16 %v976, %v976
    %v981 = vpack.c.bf16 %v977, %v977
    %v984 = vunpack.c.l.b16 %v980
    %v985 = vunpack.c.l.b16 %v981
    %v986 = vrot.slane %v984, 1
    %v987 = vsel %vm832, %v985, %v986
    %v988 = vpack.c.b16 %v987, %v987
    %990 = vmatprep.subr.bf16.mxu0 %v634
    %991 = vmatpush1.bf16.msra.mxu0 %v633
    %992 = vmatprep.subr.bf16.mxu0 %v637
    %993 = vmatpush1.bf16.msra.mxu0 %v636
    %994 = vmatprep.subr.bf16.mxu0 %v640
    %995 = vmatpush1.bf16.msra.mxu0 %v639
    %996 = vmatprep.subr.bf16.mxu0 %v643
    %997 = vmatpush1.bf16.msra.mxu0 %v642
    %998 = vmatprep.subr.bf16.mxu0 %v646
    %999 = vmatpush1.bf16.msra.mxu0 %v645
    %1000 = vmatprep.subr.bf16.mxu0 %v649
    %1001 = vmatpush1.bf16.msra.mxu0 %v648
    %1002 = vmatprep.subr.bf16.mxu0 %v652
    %1003 = vmatpush1.bf16.msra.mxu0 %v651
    %1004 = vmatprep.subr.bf16.mxu0 %v655
    %1005 = vmatpush1.bf16.msra.mxu0 %v654
    %1006 = vmatprep.subr.bf16.mxu0 0
    %1007 = vmatpush1.bf16.msra.mxu0 0
    %1008 = vmatprep.subr.bf16.mxu0 0
    %1009 = vmatpush1.bf16.msra.mxu0 0
    %1010 = vmatprep.subr.bf16.mxu0 0
    %1011 = vmatpush1.bf16.msra.mxu0 0
    %1012 = vmatprep.subr.bf16.mxu0 0
    %1013 = vmatpush1.bf16.msra.mxu0 0
    %1014 = vmatprep.subr.bf16.mxu0 0
    %1015 = vmatpush1.bf16.msra.mxu0 0
    %1016 = vmatprep.subr.bf16.mxu0 0
    %1017 = vmatpush1.bf16.msra.mxu0 0
    %1018 = vmatprep.subr.bf16.mxu0 0
    %1019 = vmatpush1.bf16.msra.mxu0 0
    %1020 = vmatprep.subr.bf16.mxu0 0
    %1021 = vmatpush1.bf16.msra.mxu0 0
    %1022 = vmatprep.mubr.bf16.mxu0 0
    %1023 = vmatmul.mubr.bf16.gmra.mrb[0].mxu0 %v988
    %v1024 = vpop.f32.mrb[0].mxu0
    %v1025 = vadd.f32 0.0, %v1024
    %v1026 = vpop.f32.mrb[0].mxu0
    %v1027 = vadd.f32 0.0, %v1026
    %v1028 = vpop.f32.mrb[0].mxu0
    %v1029 = vpop.f32.mrb[0].mxu0
    %1030 = vdwg.mxu0
    %1031 = vmatprep.subr.bf16.mxu0 0
    %1032 = vmatpush1.bf16.msra.mxu0 %v635
    %1033 = vmatprep.subr.bf16.mxu0 0
    %1034 = vmatpush1.bf16.msra.mxu0 %v638
    %1035 = vmatprep.subr.bf16.mxu0 0
    %1036 = vmatpush1.bf16.msra.mxu0 %v641
    %1037 = vmatprep.subr.bf16.mxu0 0
    %1038 = vmatpush1.bf16.msra.mxu0 %v644
    %1039 = vmatprep.subr.bf16.mxu0 0
    %1040 = vmatpush1.bf16.msra.mxu0 %v647
    %1041 = vmatprep.subr.bf16.mxu0 0
    %1042 = vmatpush1.bf16.msra.mxu0 %v650
    %1043 = vmatprep.subr.bf16.mxu0 0
    %1044 = vmatpush1.bf16.msra.mxu0 %v653
    %1045 = vmatprep.subr.bf16.mxu0 0
    %1046 = vmatpush1.bf16.msra.mxu0 %v656
    %1047 = vmatprep.subr.bf16.mxu0 0
    %1048 = vmatpush1.bf16.msra.mxu0 0
    %1049 = vmatprep.subr.bf16.mxu0 0
    %1050 = vmatpush1.bf16.msra.mxu0 0
    %1051 = vmatprep.subr.bf16.mxu0 0
    %1052 = vmatpush1.bf16.msra.mxu0 0
    %1053 = vmatprep.subr.bf16.mxu0 0
    %1054 = vmatpush1.bf16.msra.mxu0 0
    %1055 = vmatprep.subr.bf16.mxu0 0
    %1056 = vmatpush1.bf16.msra.mxu0 0
    %1057 = vmatprep.subr.bf16.mxu0 0
    %1058 = vmatpush1.bf16.msra.mxu0 0
    %1059 = vmatprep.subr.bf16.mxu0 0
    %1060 = vmatpush1.bf16.msra.mxu0 0
    %1061 = vmatprep.subr.bf16.mxu0 0
    %1062 = vmatpush1.bf16.msra.mxu0 0
    %1063 = vmatprep.mubr.bf16.mxu0 0
    %1064 = vmatmul.mubr.bf16.gmra.mrb[0].mxu0 %v988
    %v1065 = vpop.f32.mrb[0].mxu0
    %v1066 = vadd.f32 0.0, %v1065
    %v1067 = vpop.f32.mrb[0].mxu0
    %v1068 = vpop.f32.mrb[0].mxu0
    %v1069 = vpop.f32.mrb[0].mxu0
    %1070 = vdwg.mxu0
    %v1072 = vrot.slane %v1025, 6
    %v1073 = vrot.slane %v1025, 7
    %v1076 = vadd.f32 %v514, %v1072
    %v1077 = vadd.f32 %v517, %v1073
    %v1078 = vxor.u32 %v1076, 2147483648
    %v1079 = vxor.u32 %v1077, 2147483648
    %v1080 = vmul.f32 %v1078, 1.442695
    %v1081 = vpow.pop %v1080
    %v1082 = vmul.f32 %v1079, 1.442695
    %v1083 = vpow.pop %v1082
    %v1084 = vadd.f32 %v1081, 1.0
    %v1085 = vadd.f32 %v1083, 1.0
    %v1086 = vrcp.pop %v1084
    %v1087 = vmul.f32 1.0, %v1086
    %v1088 = vrcp.pop %v1085
    %v1089 = vmul.f32 1.0, %v1088
    %v1091 = vrot.slane %v1027, 6
    %v1092 = vrot.slane %v1027, 7
    %v1095 = vadd.f32 %v515, %v1091
    %v1096 = vadd.f32 %v518, %v1092
    %v1097 = vxor.u32 %v1095, 2147483648
    %v1098 = vxor.u32 %v1096, 2147483648
    %v1099 = vmul.f32 %v1097, 1.442695
    %v1100 = vpow.pop %v1099
    %v1101 = vmul.f32 %v1098, 1.442695
    %v1102 = vpow.pop %v1101
    %v1103 = vadd.f32 %v1100, 1.0
    %v1104 = vadd.f32 %v1102, 1.0
    %v1105 = vrcp.pop %v1103
    %v1106 = vmul.f32 1.0, %v1105
    %v1107 = vrcp.pop %v1104
    %v1108 = vmul.f32 1.0, %v1107
    %v1109 = vadd.f32 %v1066, %v802
    %v1111 = vrot.slane %v1109, 6
    %v1112 = vrot.slane %v1109, 7
    %v1115 = vmul.f32 %v1087, %v1111
    %v1116 = vmul.f32 %v1089, %v1112
    %v1117 = vadd.f32 %v516, %v1115
    %v1118 = vadd.f32 %v519, %v1116
    %v1119 = vtanh.pop %v1117
    %v1120 = vtanh.pop %v1118
    %v1121 = vsub.f32 1.0, %v1106
    %v1122 = vsub.f32 1.0, %v1108
    %v1123 = vmul.f32 %v1121, %v1119
    %v1124 = vmul.f32 %v1122, %v1120
    %v1127 = vrot.slane %v976, 7
    %v1128 = vrot.slane %v977, 7
    %v1131 = vmul.f32 %v1106, %v1127
    %v1132 = vmul.f32 %v1108, %v1128
    %v1133 = vadd.f32 %v1123, %v1131
    %v1134 = vadd.f32 %v1124, %v1132
    %1135 = vst [vmem:[#allocation2] sm:$0x4] %v1133
    %1136 = vst [vmem:[#allocation2 + $0x8] sm:$0x4] %v1134
    %v1137 = vpack.c.bf16 %v1133, %v1133
    %v1138 = vpack.c.bf16 %v1134, %v1134
    %v1141 = vunpack.c.l.b16 %v1137
    %v1142 = vunpack.c.l.b16 %v1138
    %v1143 = vrot.slane %v1141, 2
    %v1144 = vrot.slane %v1142, 1
    %v1145 = vsel %vm832, %v1144, %v1143
    %v1146 = vpack.c.b16 %v1145, %v1145
    %1148 = vmatprep.subr.bf16.mxu0 %v634
    %1149 = vmatpush1.bf16.msra.mxu0 %v633
    %1150 = vmatprep.subr.bf16.mxu0 %v637
    %1151 = vmatpush1.bf16.msra.mxu0 %v636
    %1152 = vmatprep.subr.bf16.mxu0 %v640
    %1153 = vmatpush1.bf16.msra.mxu0 %v639
    %1154 = vmatprep.subr.bf16.mxu0 %v643
    %1155 = vmatpush1.bf16.msra.mxu0 %v642
    %1156 = vmatprep.subr.bf16.mxu0 %v646
    %1157 = vmatpush1.bf16.msra.mxu0 %v645
    %1158 = vmatprep.subr.bf16.mxu0 %v649
    %1159 = vmatpush1.bf16.msra.mxu0 %v648
    %1160 = vmatprep.subr.bf16.mxu0 %v652
    %1161 = vmatpush1.bf16.msra.mxu0 %v651
    %1162 = vmatprep.subr.bf16.mxu0 %v655
    %1163 = vmatpush1.bf16.msra.mxu0 %v654
    %1164 = vmatprep.subr.bf16.mxu0 0
    %1165 = vmatpush1.bf16.msra.mxu0 0
    %1166 = vmatprep.subr.bf16.mxu0 0
    %1167 = vmatpush1.bf16.msra.mxu0 0
    %1168 = vmatprep.subr.bf16.mxu0 0
    %1169 = vmatpush1.bf16.msra.mxu0 0
    %1170 = vmatprep.subr.bf16.mxu0 0
    %1171 = vmatpush1.bf16.msra.mxu0 0
    %1172 = vmatprep.subr.bf16.mxu0 0
    %1173 = vmatpush1.bf16.msra.mxu0 0
    %1174 = vmatprep.subr.bf16.mxu0 0
    %1175 = vmatpush1.bf16.msra.mxu0 0
    %1176 = vmatprep.subr.bf16.mxu0 0
    %1177 = vmatpush1.bf16.msra.mxu0 0
    %1178 = vmatprep.subr.bf16.mxu0 0
    %1179 = vmatpush1.bf16.msra.mxu0 0
    %1180 = vmatprep.mubr.bf16.mxu0 0
    %1181 = vmatmul.mubr.bf16.gmra.mrb[0].mxu0 %v1146
    %v1182 = vpop.f32.mrb[0].mxu0
    %v1183 = vadd.f32 0.0, %v1182
    %v1184 = vpop.f32.mrb[0].mxu0
    %v1185 = vadd.f32 0.0, %v1184
    %v1186 = vpop.f32.mrb[0].mxu0
    %v1187 = vpop.f32.mrb[0].mxu0
    %1188 = vdwg.mxu0
    %1189 = vmatprep.subr.bf16.mxu0 0
    %1190 = vmatpush1.bf16.msra.mxu0 %v635
    %1191 = vmatprep.subr.bf16.mxu0 0
    %1192 = vmatpush1.bf16.msra.mxu0 %v638
    %1193 = vmatprep.subr.bf16.mxu0 0
    %1194 = vmatpush1.bf16.msra.mxu0 %v641
    %1195 = vmatprep.subr.bf16.mxu0 0
    %1196 = vmatpush1.bf16.msra.mxu0 %v644
    %1197 = vmatprep.subr.bf16.mxu0 0
    %1198 = vmatpush1.bf16.msra.mxu0 %v647
    %1199 = vmatprep.subr.bf16.mxu0 0
    %1200 = vmatpush1.bf16.msra.mxu0 %v650
    %1201 = vmatprep.subr.bf16.mxu0 0
    %1202 = vmatpush1.bf16.msra.mxu0 %v653
    %1203 = vmatprep.subr.bf16.mxu0 0
    %1204 = vmatpush1.bf16.msra.mxu0 %v656
    %1205 = vmatprep.subr.bf16.mxu0 0
    %1206 = vmatpush1.bf16.msra.mxu0 0
    %1207 = vmatprep.subr.bf16.mxu0 0
    %1208 = vmatpush1.bf16.msra.mxu0 0
    %1209 = vmatprep.subr.bf16.mxu0 0
    %1210 = vmatpush1.bf16.msra.mxu0 0
    %1211 = vmatprep.subr.bf16.mxu0 0
    %1212 = vmatpush1.bf16.msra.mxu0 0
    %1213 = vmatprep.subr.bf16.mxu0 0
    %1214 = vmatpush1.bf16.msra.mxu0 0
    %1215 = vmatprep.subr.bf16.mxu0 0
    %1216 = vmatpush1.bf16.msra.mxu0 0
    %1217 = vmatprep.subr.bf16.mxu0 0
    %1218 = vmatpush1.bf16.msra.mxu0 0
    %1219 = vmatprep.subr.bf16.mxu0 0
    %1220 = vmatpush1.bf16.msra.mxu0 0
    %1221 = vmatprep.mubr.bf16.mxu0 0
    %1222 = vmatmul.mubr.bf16.gmra.mrb[0].mxu0 %v1146
    %v1223 = vpop.f32.mrb[0].mxu0
    %v1224 = vadd.f32 0.0, %v1223
    %v1225 = vpop.f32.mrb[0].mxu0
    %v1226 = vpop.f32.mrb[0].mxu0
    %v1227 = vpop.f32.mrb[0].mxu0
    %1228 = vdwg.mxu0
    %v1230 = vrot.slane %v1183, 5
    %v1231 = vrot.slane %v1183, 6
    %v1234 = vadd.f32 %v514, %v1230
    %v1235 = vadd.f32 %v517, %v1231
    %v1236 = vxor.u32 %v1234, 2147483648
    %v1237 = vxor.u32 %v1235, 2147483648
    %v1238 = vmul.f32 %v1236, 1.442695
    %v1239 = vpow.pop %v1238
    %v1240 = vmul.f32 %v1237, 1.442695
    %v1241 = vpow.pop %v1240
    %v1242 = vadd.f32 %v1239, 1.0
    %v1243 = vadd.f32 %v1241, 1.0
    %v1244 = vrcp.pop %v1242
    %v1245 = vmul.f32 1.0, %v1244
    %v1246 = vrcp.pop %v1243
    %v1247 = vmul.f32 1.0, %v1246
    %v1249 = vrot.slane %v1185, 5
    %v1250 = vrot.slane %v1185, 6
    %v1253 = vadd.f32 %v515, %v1249
    %v1254 = vadd.f32 %v518, %v1250
    %v1255 = vxor.u32 %v1253, 2147483648
    %v1256 = vxor.u32 %v1254, 2147483648
    %v1257 = vmul.f32 %v1255, 1.442695
    %v1258 = vpow.pop %v1257
    %v1259 = vmul.f32 %v1256, 1.442695
    %v1260 = vpow.pop %v1259
    %v1261 = vadd.f32 %v1258, 1.0
    %v1262 = vadd.f32 %v1260, 1.0
    %v1263 = vrcp.pop %v1261
    %v1264 = vmul.f32 1.0, %v1263
    %v1265 = vrcp.pop %v1262
    %v1266 = vmul.f32 1.0, %v1265
    %v1267 = vadd.f32 %v1224, %v802
    %v1269 = vrot.slane %v1267, 5
    %v1270 = vrot.slane %v1267, 6
    %v1273 = vmul.f32 %v1245, %v1269
    %v1274 = vmul.f32 %v1247, %v1270
    %v1275 = vadd.f32 %v516, %v1273
    %v1276 = vadd.f32 %v519, %v1274
    %v1277 = vtanh.pop %v1275
    %v1278 = vtanh.pop %v1276
    %v1279 = vsub.f32 1.0, %v1264
    %v1280 = vsub.f32 1.0, %v1266
    %v1281 = vmul.f32 %v1279, %v1277
    %v1282 = vmul.f32 %v1280, %v1278
    %v1285 = vrot.slane %v1133, 7
    %v1286 = vrot.slane %v1134, 7
    %v1289 = vmul.f32 %v1264, %v1285
    %v1290 = vmul.f32 %v1266, %v1286
    %v1291 = vadd.f32 %v1281, %v1289
    %v1292 = vadd.f32 %v1282, %v1290
    %1293 = vst [vmem:[#allocation2] sm:$0x8] %v1291
    %1294 = vst [vmem:[#allocation2 + $0x8] sm:$0x8] %v1292
    %v1295 = vpack.c.bf16 %v1291, %v1291
    %v1296 = vpack.c.bf16 %v1292, %v1292
    %v1299 = vunpack.c.l.b16 %v1295
    %v1300 = vunpack.c.l.b16 %v1296
    %v1301 = vrot.slane %v1299, 3
    %v1302 = vrot.slane %v1300, 2
    %v1303 = vsel %vm832, %v1302, %v1301
    %v1304 = vpack.c.b16 %v1303, %v1303
    %1306 = vmatprep.subr.bf16.mxu0 %v634
    %1307 = vmatpush1.bf16.msra.mxu0 %v633
    %1308 = vmatprep.subr.bf16.mxu0 %v637
    %1309 = vmatpush1.bf16.msra.mxu0 %v636
    %1310 = vmatprep.subr.bf16.mxu0 %v640
    %1311 = vmatpush1.bf16.msra.mxu0 %v639
    %1312 = vmatprep.subr.bf16.mxu0 %v643
    %1313 = vmatpush1.bf16.msra.mxu0 %v642
    %1314 = vmatprep.subr.bf16.mxu0 %v646
    %1315 = vmatpush1.bf16.msra.mxu0 %v645
    %1316 = vmatprep.subr.bf16.mxu0 %v649
    %1317 = vmatpush1.bf16.msra.mxu0 %v648
    %1318 = vmatprep.subr.bf16.mxu0 %v652
    %1319 = vmatpush1.bf16.msra.mxu0 %v651
    %1320 = vmatprep.subr.bf16.mxu0 %v655
    %1321 = vmatpush1.bf16.msra.mxu0 %v654
    %1322 = vmatprep.subr.bf16.mxu0 0
    %1323 = vmatpush1.bf16.msra.mxu0 0
    %1324 = vmatprep.subr.bf16.mxu0 0
    %1325 = vmatpush1.bf16.msra.mxu0 0
    %1326 = vmatprep.subr.bf16.mxu0 0
    %1327 = vmatpush1.bf16.msra.mxu0 0
    %1328 = vmatprep.subr.bf16.mxu0 0
    %1329 = vmatpush1.bf16.msra.mxu0 0
    %1330 = vmatprep.subr.bf16.mxu0 0
    %1331 = vmatpush1.bf16.msra.mxu0 0
    %1332 = vmatprep.subr.bf16.mxu0 0
    %1333 = vmatpush1.bf16.msra.mxu0 0
    %1334 = vmatprep.subr.bf16.mxu0 0
    %1335 = vmatpush1.bf16.msra.mxu0 0
    %1336 = vmatprep.subr.bf16.mxu0 0
    %1337 = vmatpush1.bf16.msra.mxu0 0
    %1338 = vmatprep.mubr.bf16.mxu0 0
    %1339 = vmatmul.mubr.bf16.gmra.mrb[0].mxu0 %v1304
    %v1340 = vpop.f32.mrb[0].mxu0
    %v1341 = vadd.f32 0.0, %v1340
    %v1342 = vpop.f32.mrb[0].mxu0
    %v1343 = vadd.f32 0.0, %v1342
    %v1344 = vpop.f32.mrb[0].mxu0
    %v1345 = vpop.f32.mrb[0].mxu0
    %1346 = vdwg.mxu0
    %1347 = vmatprep.subr.bf16.mxu0 0
    %1348 = vmatpush1.bf16.msra.mxu0 %v635
    %1349 = vmatprep.subr.bf16.mxu0 0
    %1350 = vmatpush1.bf16.msra.mxu0 %v638
    %1351 = vmatprep.subr.bf16.mxu0 0
    %1352 = vmatpush1.bf16.msra.mxu0 %v641
    %1353 = vmatprep.subr.bf16.mxu0 0
    %1354 = vmatpush1.bf16.msra.mxu0 %v644
    %1355 = vmatprep.subr.bf16.mxu0 0
    %1356 = vmatpush1.bf16.msra.mxu0 %v647
    %1357 = vmatprep.subr.bf16.mxu0 0
    %1358 = vmatpush1.bf16.msra.mxu0 %v650
    %1359 = vmatprep.subr.bf16.mxu0 0
    %1360 = vmatpush1.bf16.msra.mxu0 %v653
    %1361 = vmatprep.subr.bf16.mxu0 0
    %1362 = vmatpush1.bf16.msra.mxu0 %v656
    %1363 = vmatprep.subr.bf16.mxu0 0
    %1364 = vmatpush1.bf16.msra.mxu0 0
    %1365 = vmatprep.subr.bf16.mxu0 0
    %1366 = vmatpush1.bf16.msra.mxu0 0
    %1367 = vmatprep.subr.bf16.mxu0 0
    %1368 = vmatpush1.bf16.msra.mxu0 0
    %1369 = vmatprep.subr.bf16.mxu0 0
    %1370 = vmatpush1.bf16.msra.mxu0 0
    %1371 = vmatprep.subr.bf16.mxu0 0
    %1372 = vmatpush1.bf16.msra.mxu0 0
    %1373 = vmatprep.subr.bf16.mxu0 0
    %1374 = vmatpush1.bf16.msra.mxu0 0
    %1375 = vmatprep.subr.bf16.mxu0 0
    %1376 = vmatpush1.bf16.msra.mxu0 0
    %1377 = vmatprep.subr.bf16.mxu0 0
    %1378 = vmatpush1.bf16.msra.mxu0 0
    %1379 = vmatprep.mubr.bf16.mxu0 0
    %1380 = vmatmul.mubr.bf16.gmra.mrb[0].mxu0 %v1304
    %v1381 = vpop.f32.mrb[0].mxu0
    %v1382 = vadd.f32 0.0, %v1381
    %v1383 = vpop.f32.mrb[0].mxu0
    %v1384 = vpop.f32.mrb[0].mxu0
    %v1385 = vpop.f32.mrb[0].mxu0
    %1386 = vdwg.mxu0
    %v1388 = vrot.slane %v1341, 4
    %v1389 = vrot.slane %v1341, 5
    %v1392 = vadd.f32 %v514, %v1388
    %v1393 = vadd.f32 %v517, %v1389
    %v1394 = vxor.u32 %v1392, 2147483648
    %v1395 = vxor.u32 %v1393, 2147483648
    %v1396 = vmul.f32 %v1394, 1.442695
    %v1397 = vpow.pop %v1396
    %v1398 = vmul.f32 %v1395, 1.442695
    %v1399 = vpow.pop %v1398
    %v1400 = vadd.f32 %v1397, 1.0
    %v1401 = vadd.f32 %v1399, 1.0
    %v1402 = vrcp.pop %v1400
    %v1403 = vmul.f32 1.0, %v1402
    %v1404 = vrcp.pop %v1401
    %v1405 = vmul.f32 1.0, %v1404
    %v1407 = vrot.slane %v1343, 4
    %v1408 = vrot.slane %v1343, 5
    %v1411 = vadd.f32 %v515, %v1407
    %v1412 = vadd.f32 %v518, %v1408
    %v1413 = vxor.u32 %v1411, 2147483648
    %v1414 = vxor.u32 %v1412, 2147483648
    %v1415 = vmul.f32 %v1413, 1.442695
    %v1416 = vpow.pop %v1415
    %v1417 = vmul.f32 %v1414, 1.442695
    %v1418 = vpow.pop %v1417
    %v1419 = vadd.f32 %v1416, 1.0
    %v1420 = vadd.f32 %v1418, 1.0
    %v1421 = vrcp.pop %v1419
    %v1422 = vmul.f32 1.0, %v1421
    %v1423 = vrcp.pop %v1420
    %v1424 = vmul.f32 1.0, %v1423
    %v1425 = vadd.f32 %v1382, %v802
    %v1427 = vrot.slane %v1425, 4
    %v1428 = vrot.slane %v1425, 5
    %v1431 = vmul.f32 %v1403, %v1427
    %v1432 = vmul.f32 %v1405, %v1428
    %v1433 = vadd.f32 %v516, %v1431
    %v1434 = vadd.f32 %v519, %v1432
    %v1435 = vtanh.pop %v1433
    %v1436 = vtanh.pop %v1434
    %v1437 = vsub.f32 1.0, %v1422
    %v1438 = vsub.f32 1.0, %v1424
    %v1439 = vmul.f32 %v1437, %v1435
    %v1440 = vmul.f32 %v1438, %v1436
    %v1443 = vrot.slane %v1291, 7
    %v1444 = vrot.slane %v1292, 7
    %v1447 = vmul.f32 %v1422, %v1443
    %v1448 = vmul.f32 %v1424, %v1444
    %v1449 = vadd.f32 %v1439, %v1447
    %v1450 = vadd.f32 %v1440, %v1448
    %1451 = vst [vmem:[#allocation2] sm:$0x10] %v1449
    %1452 = vst [vmem:[#allocation2 + $0x8] sm:$0x10] %v1450
    %v1453 = vpack.c.bf16 %v1449, %v1449
    %v1454 = vpack.c.bf16 %v1450, %v1450
    %v1457 = vunpack.c.l.b16 %v1453
    %v1458 = vunpack.c.l.b16 %v1454
    %v1459 = vrot.slane %v1457, 4
    %v1460 = vrot.slane %v1458, 3
    %v1461 = vsel %vm832, %v1460, %v1459
    %v1462 = vpack.c.b16 %v1461, %v1461
    %1464 = vmatprep.subr.bf16.mxu0 %v634
    %1465 = vmatpush1.bf16.msra.mxu0 %v633
    %1466 = vmatprep.subr.bf16.mxu0 %v637
    %1467 = vmatpush1.bf16.msra.mxu0 %v636
    %1468 = vmatprep.subr.bf16.mxu0 %v640
    %1469 = vmatpush1.bf16.msra.mxu0 %v639
    %1470 = vmatprep.subr.bf16.mxu0 %v643
    %1471 = vmatpush1.bf16.msra.mxu0 %v642
    %1472 = vmatprep.subr.bf16.mxu0 %v646
    %1473 = vmatpush1.bf16.msra.mxu0 %v645
    %1474 = vmatprep.subr.bf16.mxu0 %v649
    %1475 = vmatpush1.bf16.msra.mxu0 %v648
    %1476 = vmatprep.subr.bf16.mxu0 %v652
    %1477 = vmatpush1.bf16.msra.mxu0 %v651
    %1478 = vmatprep.subr.bf16.mxu0 %v655
    %1479 = vmatpush1.bf16.msra.mxu0 %v654
    %1480 = vmatprep.subr.bf16.mxu0 0
    %1481 = vmatpush1.bf16.msra.mxu0 0
    %1482 = vmatprep.subr.bf16.mxu0 0
    %1483 = vmatpush1.bf16.msra.mxu0 0
    %1484 = vmatprep.subr.bf16.mxu0 0
    %1485 = vmatpush1.bf16.msra.mxu0 0
    %1486 = vmatprep.subr.bf16.mxu0 0
    %1487 = vmatpush1.bf16.msra.mxu0 0
    %1488 = vmatprep.subr.bf16.mxu0 0
    %1489 = vmatpush1.bf16.msra.mxu0 0
    %1490 = vmatprep.subr.bf16.mxu0 0
    %1491 = vmatpush1.bf16.msra.mxu0 0
    %1492 = vmatprep.subr.bf16.mxu0 0
    %1493 = vmatpush1.bf16.msra.mxu0 0
    %1494 = vmatprep.subr.bf16.mxu0 0
    %1495 = vmatpush1.bf16.msra.mxu0 0
    %1496 = vmatprep.mubr.bf16.mxu0 0
    %1497 = vmatmul.mubr.bf16.gmra.mrb[0].mxu0 %v1462
    %v1498 = vpop.f32.mrb[0].mxu0
    %v1499 = vadd.f32 0.0, %v1498
    %v1500 = vpop.f32.mrb[0].mxu0
    %v1501 = vadd.f32 0.0, %v1500
    %v1502 = vpop.f32.mrb[0].mxu0
    %v1503 = vpop.f32.mrb[0].mxu0
    %1504 = vdwg.mxu0
    %1505 = vmatprep.subr.bf16.mxu0 0
    %1506 = vmatpush1.bf16.msra.mxu0 %v635
    %1507 = vmatprep.subr.bf16.mxu0 0
    %1508 = vmatpush1.bf16.msra.mxu0 %v638
    %1509 = vmatprep.subr.bf16.mxu0 0
    %1510 = vmatpush1.bf16.msra.mxu0 %v641
    %1511 = vmatprep.subr.bf16.mxu0 0
    %1512 = vmatpush1.bf16.msra.mxu0 %v644
    %1513 = vmatprep.subr.bf16.mxu0 0
    %1514 = vmatpush1.bf16.msra.mxu0 %v647
    %1515 = vmatprep.subr.bf16.mxu0 0
    %1516 = vmatpush1.bf16.msra.mxu0 %v650
    %1517 = vmatprep.subr.bf16.mxu0 0
    %1518 = vmatpush1.bf16.msra.mxu0 %v653
    %1519 = vmatprep.subr.bf16.mxu0 0
    %1520 = vmatpush1.bf16.msra.mxu0 %v656
    %1521 = vmatprep.subr.bf16.mxu0 0
    %1522 = vmatpush1.bf16.msra.mxu0 0
    %1523 = vmatprep.subr.bf16.mxu0 0
    %1524 = vmatpush1.bf16.msra.mxu0 0
    %1525 = vmatprep.subr.bf16.mxu0 0
    %1526 = vmatpush1.bf16.msra.mxu0 0
    %1527 = vmatprep.subr.bf16.mxu0 0
    %1528 = vmatpush1.bf16.msra.mxu0 0
    %1529 = vmatprep.subr.bf16.mxu0 0
    %1530 = vmatpush1.bf16.msra.mxu0 0
    %1531 = vmatprep.subr.bf16.mxu0 0
    %1532 = vmatpush1.bf16.msra.mxu0 0
    %1533 = vmatprep.subr.bf16.mxu0 0
    %1534 = vmatpush1.bf16.msra.mxu0 0
    %1535 = vmatprep.subr.bf16.mxu0 0
    %1536 = vmatpush1.bf16.msra.mxu0 0
    %1537 = vmatprep.mubr.bf16.mxu0 0
    %1538 = vmatmul.mubr.bf16.gmra.mrb[0].mxu0 %v1462
    %v1539 = vpop.f32.mrb[0].mxu0
    %v1540 = vadd.f32 0.0, %v1539
    %v1541 = vpop.f32.mrb[0].mxu0
    %v1542 = vpop.f32.mrb[0].mxu0
    %v1543 = vpop.f32.mrb[0].mxu0
    %1544 = vdwg.mxu0
    %v1546 = vrot.slane %v1499, 3
    %v1547 = vrot.slane %v1499, 4
    %v1550 = vadd.f32 %v514, %v1546
    %v1551 = vadd.f32 %v517, %v1547
    %v1552 = vxor.u32 %v1550, 2147483648
    %v1553 = vxor.u32 %v1551, 2147483648
    %v1554 = vmul.f32 %v1552, 1.442695
    %v1555 = vpow.pop %v1554
    %v1556 = vmul.f32 %v1553, 1.442695
    %v1557 = vpow.pop %v1556
    %v1558 = vadd.f32 %v1555, 1.0
    %v1559 = vadd.f32 %v1557, 1.0
    %v1560 = vrcp.pop %v1558
    %v1561 = vmul.f32 1.0, %v1560
    %v1562 = vrcp.pop %v1559
    %v1563 = vmul.f32 1.0, %v1562
    %v1565 = vrot.slane %v1501, 3
    %v1566 = vrot.slane %v1501, 4
    %v1569 = vadd.f32 %v515, %v1565
    %v1570 = vadd.f32 %v518, %v1566
    %v1571 = vxor.u32 %v1569, 2147483648
    %v1572 = vxor.u32 %v1570, 2147483648
    %v1573 = vmul.f32 %v1571, 1.442695
    %v1574 = vpow.pop %v1573
    %v1575 = vmul.f32 %v1572, 1.442695
    %v1576 = vpow.pop %v1575
    %v1577 = vadd.f32 %v1574, 1.0
    %v1578 = vadd.f32 %v1576, 1.0
    %v1579 = vrcp.pop %v1577
    %v1580 = vmul.f32 1.0, %v1579
    %v1581 = vrcp.pop %v1578
    %v1582 = vmul.f32 1.0, %v1581
    %v1583 = vadd.f32 %v1540, %v802
    %v1585 = vrot.slane %v1583, 3
    %v1586 = vrot.slane %v1583, 4
    %v1589 = vmul.f32 %v1561, %v1585
    %v1590 = vmul.f32 %v1563, %v1586
    %v1591 = vadd.f32 %v516, %v1589
    %v1592 = vadd.f32 %v519, %v1590
    %v1593 = vtanh.pop %v1591
    %v1594 = vtanh.pop %v1592
    %v1595 = vsub.f32 1.0, %v1580
    %v1596 = vsub.f32 1.0, %v1582
    %v1597 = vmul.f32 %v1595, %v1593
    %v1598 = vmul.f32 %v1596, %v1594
    %v1601 = vrot.slane %v1449, 7
    %v1602 = vrot.slane %v1450, 7
    %v1605 = vmul.f32 %v1580, %v1601
    %v1606 = vmul.f32 %v1582, %v1602
    %v1607 = vadd.f32 %v1597, %v1605
    %v1608 = vadd.f32 %v1598, %v1606
    %1609 = vst [vmem:[#allocation2] sm:$0x20] %v1607
    %1610 = vst [vmem:[#allocation2 + $0x8] sm:$0x20] %v1608
    %v1611 = vpack.c.bf16 %v1607, %v1607
    %v1612 = vpack.c.bf16 %v1608, %v1608
    %v1615 = vunpack.c.l.b16 %v1611
    %v1616 = vunpack.c.l.b16 %v1612
    %v1617 = vrot.slane %v1615, 5
    %v1618 = vrot.slane %v1616, 4
    %v1619 = vsel %vm832, %v1618, %v1617
    %v1620 = vpack.c.b16 %v1619, %v1619
    %1622 = vmatprep.subr.bf16.mxu0 %v634
    %1623 = vmatpush1.bf16.msra.mxu0 %v633
    %1624 = vmatprep.subr.bf16.mxu0 %v637
    %1625 = vmatpush1.bf16.msra.mxu0 %v636
    %1626 = vmatprep.subr.bf16.mxu0 %v640
    %1627 = vmatpush1.bf16.msra.mxu0 %v639
    %1628 = vmatprep.subr.bf16.mxu0 %v643
    %1629 = vmatpush1.bf16.msra.mxu0 %v642
    %1630 = vmatprep.subr.bf16.mxu0 %v646
    %1631 = vmatpush1.bf16.msra.mxu0 %v645
    %1632 = vmatprep.subr.bf16.mxu0 %v649
    %1633 = vmatpush1.bf16.msra.mxu0 %v648
    %1634 = vmatprep.subr.bf16.mxu0 %v652
    %1635 = vmatpush1.bf16.msra.mxu0 %v651
    %1636 = vmatprep.subr.bf16.mxu0 %v655
    %1637 = vmatpush1.bf16.msra.mxu0 %v654
    %1638 = vmatprep.subr.bf16.mxu0 0
    %1639 = vmatpush1.bf16.msra.mxu0 0
    %1640 = vmatprep.subr.bf16.mxu0 0
    %1641 = vmatpush1.bf16.msra.mxu0 0
    %1642 = vmatprep.subr.bf16.mxu0 0
    %1643 = vmatpush1.bf16.msra.mxu0 0
    %1644 = vmatprep.subr.bf16.mxu0 0
    %1645 = vmatpush1.bf16.msra.mxu0 0
    %1646 = vmatprep.subr.bf16.mxu0 0
    %1647 = vmatpush1.bf16.msra.mxu0 0
    %1648 = vmatprep.subr.bf16.mxu0 0
    %1649 = vmatpush1.bf16.msra.mxu0 0
    %1650 = vmatprep.subr.bf16.mxu0 0
    %1651 = vmatpush1.bf16.msra.mxu0 0
    %1652 = vmatprep.subr.bf16.mxu0 0
    %1653 = vmatpush1.bf16.msra.mxu0 0
    %1654 = vmatprep.mubr.bf16.mxu0 0
    %1655 = vmatmul.mubr.bf16.gmra.mrb[0].mxu0 %v1620
    %v1656 = vpop.f32.mrb[0].mxu0
    %v1657 = vadd.f32 0.0, %v1656
    %v1658 = vpop.f32.mrb[0].mxu0
    %v1659 = vadd.f32 0.0, %v1658
    %v1660 = vpop.f32.mrb[0].mxu0
    %v1661 = vpop.f32.mrb[0].mxu0
    %1662 = vdwg.mxu0
    %1663 = vmatprep.subr.bf16.mxu0 0
    %1664 = vmatpush1.bf16.msra.mxu0 %v635
    %1665 = vmatprep.subr.bf16.mxu0 0
    %1666 = vmatpush1.bf16.msra.mxu0 %v638
    %1667 = vmatprep.subr.bf16.mxu0 0
    %1668 = vmatpush1.bf16.msra.mxu0 %v641
    %1669 = vmatprep.subr.bf16.mxu0 0
    %1670 = vmatpush1.bf16.msra.mxu0 %v644
    %1671 = vmatprep.subr.bf16.mxu0 0
    %1672 = vmatpush1.bf16.msra.mxu0 %v647
    %1673 = vmatprep.subr.bf16.mxu0 0
    %1674 = vmatpush1.bf16.msra.mxu0 %v650
    %1675 = vmatprep.subr.bf16.mxu0 0
    %1676 = vmatpush1.bf16.msra.mxu0 %v653
    %1677 = vmatprep.subr.bf16.mxu0 0
    %1678 = vmatpush1.bf16.msra.mxu0 %v656
    %1679 = vmatprep.subr.bf16.mxu0 0
    %1680 = vmatpush1.bf16.msra.mxu0 0
    %1681 = vmatprep.subr.bf16.mxu0 0
    %1682 = vmatpush1.bf16.msra.mxu0 0
    %1683 = vmatprep.subr.bf16.mxu0 0
    %1684 = vmatpush1.bf16.msra.mxu0 0
    %1685 = vmatprep.subr.bf16.mxu0 0
    %1686 = vmatpush1.bf16.msra.mxu0 0
    %1687 = vmatprep.subr.bf16.mxu0 0
    %1688 = vmatpush1.bf16.msra.mxu0 0
    %1689 = vmatprep.subr.bf16.mxu0 0
    %1690 = vmatpush1.bf16.msra.mxu0 0
    %1691 = vmatprep.subr.bf16.mxu0 0
    %1692 = vmatpush1.bf16.msra.mxu0 0
    %1693 = vmatprep.subr.bf16.mxu0 0
    %1694 = vmatpush1.bf16.msra.mxu0 0
    %1695 = vmatprep.mubr.bf16.mxu0 0
    %1696 = vmatmul.mubr.bf16.gmra.mrb[0].mxu0 %v1620
    %v1697 = vpop.f32.mrb[0].mxu0
    %v1698 = vadd.f32 0.0, %v1697
    %v1699 = vpop.f32.mrb[0].mxu0
    %v1700 = vpop.f32.mrb[0].mxu0
    %v1701 = vpop.f32.mrb[0].mxu0
    %1702 = vdwg.mxu0
    %v1704 = vrot.slane %v1657, 2
    %v1705 = vrot.slane %v1657, 3
    %v1708 = vadd.f32 %v514, %v1704
    %v1709 = vadd.f32 %v517, %v1705
    %v1710 = vxor.u32 %v1708, 2147483648
    %v1711 = vxor.u32 %v1709, 2147483648
    %v1712 = vmul.f32 %v1710, 1.442695
    %v1713 = vpow.pop %v1712
    %v1714 = vmul.f32 %v1711, 1.442695
    %v1715 = vpow.pop %v1714
    %v1716 = vadd.f32 %v1713, 1.0
    %v1717 = vadd.f32 %v1715, 1.0
    %v1718 = vrcp.pop %v1716
    %v1719 = vmul.f32 1.0, %v1718
    %v1720 = vrcp.pop %v1717
    %v1721 = vmul.f32 1.0, %v1720
    %v1723 = vrot.slane %v1659, 2
    %v1724 = vrot.slane %v1659, 3
    %v1727 = vadd.f32 %v515, %v1723
    %v1728 = vadd.f32 %v518, %v1724
    %v1729 = vxor.u32 %v1727, 2147483648
    %v1730 = vxor.u32 %v1728, 2147483648
    %v1731 = vmul.f32 %v1729, 1.442695
    %v1732 = vpow.pop %v1731
    %v1733 = vmul.f32 %v1730, 1.442695
    %v1734 = vpow.pop %v1733
    %v1735 = vadd.f32 %v1732, 1.0
    %v1736 = vadd.f32 %v1734, 1.0
    %v1737 = vrcp.pop %v1735
    %v1738 = vmul.f32 1.0, %v1737
    %v1739 = vrcp.pop %v1736
    %v1740 = vmul.f32 1.0, %v1739
    %v1741 = vadd.f32 %v1698, %v802
    %v1743 = vrot.slane %v1741, 2
    %v1744 = vrot.slane %v1741, 3
    %v1747 = vmul.f32 %v1719, %v1743
    %v1748 = vmul.f32 %v1721, %v1744
    %v1749 = vadd.f32 %v516, %v1747
    %v1750 = vadd.f32 %v519, %v1748
    %v1751 = vtanh.pop %v1749
    %v1752 = vtanh.pop %v1750
    %v1753 = vsub.f32 1.0, %v1738
    %v1754 = vsub.f32 1.0, %v1740
    %v1755 = vmul.f32 %v1753, %v1751
    %v1756 = vmul.f32 %v1754, %v1752
    %v1759 = vrot.slane %v1607, 7
    %v1760 = vrot.slane %v1608, 7
    %v1763 = vmul.f32 %v1738, %v1759
    %v1764 = vmul.f32 %v1740, %v1760
    %v1765 = vadd.f32 %v1755, %v1763
    %v1766 = vadd.f32 %v1756, %v1764
    %1767 = vst [vmem:[#allocation2] sm:$0x40] %v1765
    %1768 = vst [vmem:[#allocation2 + $0x8] sm:$0x40] %v1766
    %v1769 = vpack.c.bf16 %v1765, %v1765
    %v1770 = vpack.c.bf16 %v1766, %v1766
    %v1773 = vunpack.c.l.b16 %v1769
    %v1774 = vunpack.c.l.b16 %v1770
    %v1775 = vrot.slane %v1773, 6
    %v1776 = vrot.slane %v1774, 5
    %v1777 = vsel %vm832, %v1776, %v1775
    %v1778 = vpack.c.b16 %v1777, %v1777
    %1780 = vmatprep.subr.bf16.mxu0 %v634
    %1781 = vmatpush1.bf16.msra.mxu0 %v633
    %1782 = vmatprep.subr.bf16.mxu0 %v637
    %1783 = vmatpush1.bf16.msra.mxu0 %v636
    %1784 = vmatprep.subr.bf16.mxu0 %v640
    %1785 = vmatpush1.bf16.msra.mxu0 %v639
    %1786 = vmatprep.subr.bf16.mxu0 %v643
    %1787 = vmatpush1.bf16.msra.mxu0 %v642
    %1788 = vmatprep.subr.bf16.mxu0 %v646
    %1789 = vmatpush1.bf16.msra.mxu0 %v645
    %1790 = vmatprep.subr.bf16.mxu0 %v649
    %1791 = vmatpush1.bf16.msra.mxu0 %v648
    %1792 = vmatprep.subr.bf16.mxu0 %v652
    %1793 = vmatpush1.bf16.msra.mxu0 %v651
    %1794 = vmatprep.subr.bf16.mxu0 %v655
    %1795 = vmatpush1.bf16.msra.mxu0 %v654
    %1796 = vmatprep.subr.bf16.mxu0 0
    %1797 = vmatpush1.bf16.msra.mxu0 0
    %1798 = vmatprep.subr.bf16.mxu0 0
    %1799 = vmatpush1.bf16.msra.mxu0 0
    %1800 = vmatprep.subr.bf16.mxu0 0
    %1801 = vmatpush1.bf16.msra.mxu0 0
    %1802 = vmatprep.subr.bf16.mxu0 0
    %1803 = vmatpush1.bf16.msra.mxu0 0
    %1804 = vmatprep.subr.bf16.mxu0 0
    %1805 = vmatpush1.bf16.msra.mxu0 0
    %1806 = vmatprep.subr.bf16.mxu0 0
    %1807 = vmatpush1.bf16.msra.mxu0 0
    %1808 = vmatprep.subr.bf16.mxu0 0
    %1809 = vmatpush1.bf16.msra.mxu0 0
    %1810 = vmatprep.subr.bf16.mxu0 0
    %1811 = vmatpush1.bf16.msra.mxu0 0
    %1812 = vmatprep.mubr.bf16.mxu0 0
    %1813 = vmatmul.mubr.bf16.gmra.mrb[0].mxu0 %v1778
    %v1814 = vpop.f32.mrb[0].mxu0
    %v1815 = vadd.f32 0.0, %v1814
    %v1816 = vpop.f32.mrb[0].mxu0
    %v1817 = vadd.f32 0.0, %v1816
    %v1818 = vpop.f32.mrb[0].mxu0
    %v1819 = vpop.f32.mrb[0].mxu0
    %1820 = vdwg.mxu0
    %1821 = vmatprep.subr.bf16.mxu0 0
    %1822 = vmatpush1.bf16.msra.mxu0 %v635
    %1823 = vmatprep.subr.bf16.mxu0 0
    %1824 = vmatpush1.bf16.msra.mxu0 %v638
    %1825 = vmatprep.subr.bf16.mxu0 0
    %1826 = vmatpush1.bf16.msra.mxu0 %v641
    %1827 = vmatprep.subr.bf16.mxu0 0
    %1828 = vmatpush1.bf16.msra.mxu0 %v644
    %1829 = vmatprep.subr.bf16.mxu0 0
    %1830 = vmatpush1.bf16.msra.mxu0 %v647
    %1831 = vmatprep.subr.bf16.mxu0 0
    %1832 = vmatpush1.bf16.msra.mxu0 %v650
    %1833 = vmatprep.subr.bf16.mxu0 0
    %1834 = vmatpush1.bf16.msra.mxu0 %v653
    %1835 = vmatprep.subr.bf16.mxu0 0
    %1836 = vmatpush1.bf16.msra.mxu0 %v656
    %1837 = vmatprep.subr.bf16.mxu0 0
    %1838 = vmatpush1.bf16.msra.mxu0 0
    %1839 = vmatprep.subr.bf16.mxu0 0
    %1840 = vmatpush1.bf16.msra.mxu0 0
    %1841 = vmatprep.subr.bf16.mxu0 0
    %1842 = vmatpush1.bf16.msra.mxu0 0
    %1843 = vmatprep.subr.bf16.mxu0 0
    %1844 = vmatpush1.bf16.msra.mxu0 0
    %1845 = vmatprep.subr.bf16.mxu0 0
    %1846 = vmatpush1.bf16.msra.mxu0 0
    %1847 = vmatprep.subr.bf16.mxu0 0
    %1848 = vmatpush1.bf16.msra.mxu0 0
    %1849 = vmatprep.subr.bf16.mxu0 0
    %1850 = vmatpush1.bf16.msra.mxu0 0
    %1851 = vmatprep.subr.bf16.mxu0 0
    %1852 = vmatpush1.bf16.msra.mxu0 0
    %1853 = vmatprep.mubr.bf16.mxu0 0
    %1854 = vmatmul.mubr.bf16.gmra.mrb[0].mxu0 %v1778
    %v1855 = vpop.f32.mrb[0].mxu0
    %v1856 = vadd.f32 0.0, %v1855
    %v1857 = vpop.f32.mrb[0].mxu0
    %v1858 = vpop.f32.mrb[0].mxu0
    %v1859 = vpop.f32.mrb[0].mxu0
    %1860 = vdwg.mxu0
    %v1862 = vrot.slane %v1815, 1
    %v1863 = vrot.slane %v1815, 2
    %v1866 = vadd.f32 %v514, %v1862
    %v1867 = vadd.f32 %v517, %v1863
    %v1868 = vxor.u32 %v1866, 2147483648
    %v1869 = vxor.u32 %v1867, 2147483648
    %v1870 = vmul.f32 %v1868, 1.442695
    %v1871 = vpow.pop %v1870
    %v1872 = vmul.f32 %v1869, 1.442695
    %v1873 = vpow.pop %v1872
    %v1874 = vadd.f32 %v1871, 1.0
    %v1875 = vadd.f32 %v1873, 1.0
    %v1876 = vrcp.pop %v1874
    %v1877 = vmul.f32 1.0, %v1876
    %v1878 = vrcp.pop %v1875
    %v1879 = vmul.f32 1.0, %v1878
    %v1881 = vrot.slane %v1817, 1
    %v1882 = vrot.slane %v1817, 2
    %v1885 = vadd.f32 %v515, %v1881
    %v1886 = vadd.f32 %v518, %v1882
    %v1887 = vxor.u32 %v1885, 2147483648
    %v1888 = vxor.u32 %v1886, 2147483648
    %v1889 = vmul.f32 %v1887, 1.442695
    %v1890 = vpow.pop %v1889
    %v1891 = vmul.f32 %v1888, 1.442695
    %v1892 = vpow.pop %v1891
    %v1893 = vadd.f32 %v1890, 1.0
    %v1894 = vadd.f32 %v1892, 1.0
    %v1895 = vrcp.pop %v1893
    %v1896 = vmul.f32 1.0, %v1895
    %v1897 = vrcp.pop %v1894
    %v1898 = vmul.f32 1.0, %v1897
    %v1899 = vadd.f32 %v1856, %v802
    %v1901 = vrot.slane %v1899, 1
    %v1902 = vrot.slane %v1899, 2
    %v1905 = vmul.f32 %v1877, %v1901
    %v1906 = vmul.f32 %v1879, %v1902
    %v1907 = vadd.f32 %v516, %v1905
    %v1908 = vadd.f32 %v519, %v1906
    %v1909 = vtanh.pop %v1907
    %v1910 = vtanh.pop %v1908
    %v1911 = vsub.f32 1.0, %v1896
    %v1912 = vsub.f32 1.0, %v1898
    %v1913 = vmul.f32 %v1911, %v1909
    %v1914 = vmul.f32 %v1912, %v1910
    %v1917 = vrot.slane %v1765, 7
    %v1918 = vrot.slane %v1766, 7
    %v1921 = vmul.f32 %v1896, %v1917
    %v1922 = vmul.f32 %v1898, %v1918
    %v1923 = vadd.f32 %v1913, %v1921
    %v1924 = vadd.f32 %v1914, %v1922
    %1925 = vst [vmem:[#allocation2] sm:$0x80] %v1923
    %1926 = vst [vmem:[#allocation2 + $0x8] sm:$0x80] %v1924
    %v1927 = vld [vmem:[#allocation2] sm:$0xff]
    %v1928 = vld [vmem:[#allocation2 + $0x8] sm:$0xff]
    %1929 = vmatprep.subr.mxu0 0.0
    %1930 = vmatpush1.xpose.msra.mxu0 %v489
    %1931 = vmatprep.subr.mxu0 0.0
    %1932 = vmatpush1.xpose.msra.mxu0 0.0
    %1933 = vmatprep.subr.mxu0 0.0
    %1934 = vmatpush1.xpose.msra.mxu0 0.0
    %1935 = vmatprep.subr.mxu0 0.0
    %1936 = vmatpush1.xpose.msra.mxu0 0.0
    %1937 = vmatprep.subr.mxu0 0.0
    %1938 = vmatpush1.xpose.msra.mxu0 0.0
    %1939 = vmatprep.subr.mxu0 0.0
    %1940 = vmatpush1.xpose.msra.mxu0 0.0
    %1941 = vmatprep.subr.mxu0 0.0
    %1942 = vmatpush1.xpose.msra.mxu0 0.0
    %1943 = vmatprep.subr.mxu0 0.0
    %1944 = vmatpush1.xpose.msra.mxu0 0.0
    %1945 = vmatprep.subr.mxu0 0.0
    %1946 = vmatpush1.xpose.msra.mxu0 0.0
    %1947 = vmatprep.subr.mxu0 0.0
    %1948 = vmatpush1.xpose.msra.mxu0 0.0
    %1949 = vmatprep.subr.mxu0 0.0
    %1950 = vmatpush1.xpose.msra.mxu0 0.0
    %1951 = vmatprep.subr.mxu0 0.0
    %1952 = vmatpush1.xpose.msra.mxu0 0.0
    %1953 = vmatprep.subr.mxu0 0.0
    %1954 = vmatpush1.xpose.msra.mxu0 0.0
    %1955 = vmatprep.subr.mxu0 0.0
    %1956 = vmatpush1.xpose.msra.mxu0 0.0
    %1957 = vmatprep.subr.mxu0 0.0
    %1958 = vmatpush1.xpose.msra.mxu0 0.0
    %1959 = vmatprep.subr.mxu0 0.0
    %1960 = vmatpush1.xpose.msra.mxu0 0.0
    %1961 = vmatprep.subr.mxu0 0.0
    %1962 = vmatpush1.xpose.msra.mxu0 0.0
    %1963 = vmatprep.subr.mxu0 0.0
    %1964 = vmatpush1.xpose.msra.mxu0 0.0
    %1965 = vmatprep.subr.mxu0 0.0
    %1966 = vmatpush1.xpose.msra.mxu0 0.0
    %1967 = vmatprep.subr.mxu0 0.0
    %1968 = vmatpush1.xpose.msra.mxu0 0.0
    %1969 = vmatprep.subr.mxu0 0.0
    %1970 = vmatpush1.xpose.msra.mxu0 0.0
    %1971 = vmatprep.subr.mxu0 0.0
    %1972 = vmatpush1.xpose.msra.mxu0 0.0
    %1973 = vmatprep.subr.mxu0 0.0
    %1974 = vmatpush1.xpose.msra.mxu0 0.0
    %1975 = vmatprep.subr.mxu0 0.0
    %1976 = vmatpush1.xpose.msra.mxu0 0.0
    %1977 = vmatprep.subr.mxu0 0.0
    %1978 = vmatpush1.xpose.msra.mxu0 0.0
    %1979 = vmatprep.subr.mxu0 0.0
    %1980 = vmatpush1.xpose.msra.mxu0 0.0
    %1981 = vmatprep.subr.mxu0 0.0
    %1982 = vmatpush1.xpose.msra.mxu0 0.0
    %1983 = vmatprep.subr.mxu0 0.0
    %1984 = vmatpush1.xpose.msra.mxu0 0.0
    %1985 = vmatprep.subr.mxu0 0.0
    %1986 = vmatpush1.xpose.msra.mxu0 0.0
    %1987 = vmatprep.subr.mxu0 0.0
    %1988 = vmatpush1.xpose.msra.mxu0 0.0
    %1989 = vmatprep.subr.mxu0 0.0
    %1990 = vmatpush1.xpose.msra.mxu0 0.0
    %1991 = vmatprep.subr.mxu0 0.0
    %1992 = vmatpush1.xpose.msra.mxu0 0.0
    %1993 = vmatprep.mubr.f32.mxu0 0.0
    %1994 = vmatmul.mubr.f32.gmra.mrb[0].mxu0 %v448
    %v1995 = vpop.f32.mrb[0].mxu0
    %v1996 = vadd.f32 0.0, %v1995
    %v1997 = vpop.f32.mrb[0].mxu0
    %1998 = vdwg.mxu0
    %1999 = vmatprep.subr.mxu0 0.0
    %2000 = vmatpush1.xpose.msra.mxu0 %v493
    %2001 = vmatprep.subr.mxu0 0.0
    %2002 = vmatpush1.xpose.msra.mxu0 0.0
    %2003 = vmatprep.subr.mxu0 0.0
    %2004 = vmatpush1.xpose.msra.mxu0 0.0
    %2005 = vmatprep.subr.mxu0 0.0
    %2006 = vmatpush1.xpose.msra.mxu0 0.0
    %2007 = vmatprep.subr.mxu0 0.0
    %2008 = vmatpush1.xpose.msra.mxu0 0.0
    %2009 = vmatprep.subr.mxu0 0.0
    %2010 = vmatpush1.xpose.msra.mxu0 0.0
    %2011 = vmatprep.subr.mxu0 0.0
    %2012 = vmatpush1.xpose.msra.mxu0 0.0
    %2013 = vmatprep.subr.mxu0 0.0
    %2014 = vmatpush1.xpose.msra.mxu0 0.0
    %2015 = vmatprep.subr.mxu0 0.0
    %2016 = vmatpush1.xpose.msra.mxu0 0.0
    %2017 = vmatprep.subr.mxu0 0.0
    %2018 = vmatpush1.xpose.msra.mxu0 0.0
    %2019 = vmatprep.subr.mxu0 0.0
    %2020 = vmatpush1.xpose.msra.mxu0 0.0
    %2021 = vmatprep.subr.mxu0 0.0
    %2022 = vmatpush1.xpose.msra.mxu0 0.0
    %2023 = vmatprep.subr.mxu0 0.0
    %2024 = vmatpush1.xpose.msra.mxu0 0.0
    %2025 = vmatprep.subr.mxu0 0.0
    %2026 = vmatpush1.xpose.msra.mxu0 0.0
    %2027 = vmatprep.subr.mxu0 0.0
    %2028 = vmatpush1.xpose.msra.mxu0 0.0
    %2029 = vmatprep.subr.mxu0 0.0
    %2030 = vmatpush1.xpose.msra.mxu0 0.0
    %2031 = vmatprep.subr.mxu0 0.0
    %2032 = vmatpush1.xpose.msra.mxu0 0.0
    %2033 = vmatprep.subr.mxu0 0.0
    %2034 = vmatpush1.xpose.msra.mxu0 0.0
    %2035 = vmatprep.subr.mxu0 0.0
    %2036 = vmatpush1.xpose.msra.mxu0 0.0
    %2037 = vmatprep.subr.mxu0 0.0
    %2038 = vmatpush1.xpose.msra.mxu0 0.0
    %2039 = vmatprep.subr.mxu0 0.0
    %2040 = vmatpush1.xpose.msra.mxu0 0.0
    %2041 = vmatprep.subr.mxu0 0.0
    %2042 = vmatpush1.xpose.msra.mxu0 0.0
    %2043 = vmatprep.subr.mxu0 0.0
    %2044 = vmatpush1.xpose.msra.mxu0 0.0
    %2045 = vmatprep.subr.mxu0 0.0
    %2046 = vmatpush1.xpose.msra.mxu0 0.0
    %2047 = vmatprep.subr.mxu0 0.0
    %2048 = vmatpush1.xpose.msra.mxu0 0.0
    %2049 = vmatprep.subr.mxu0 0.0
    %2050 = vmatpush1.xpose.msra.mxu0 0.0
    %2051 = vmatprep.subr.mxu0 0.0
    %2052 = vmatpush1.xpose.msra.mxu0 0.0
    %2053 = vmatprep.subr.mxu0 0.0
    %2054 = vmatpush1.xpose.msra.mxu0 0.0
    %2055 = vmatprep.subr.mxu0 0.0
    %2056 = vmatpush1.xpose.msra.mxu0 0.0
    %2057 = vmatprep.subr.mxu0 0.0
    %2058 = vmatpush1.xpose.msra.mxu0 0.0
    %2059 = vmatprep.subr.mxu0 0.0
    %2060 = vmatpush1.xpose.msra.mxu0 0.0
    %2061 = vmatprep.subr.mxu0 0.0
    %2062 = vmatpush1.xpose.msra.mxu0 0.0
    %2063 = vmatprep.mubr.f32.mxu0 0.0
    %2064 = vmatmul.mubr.f32.gmra.mrb[0].mxu0 %v452
    %v2065 = vpop.f32.mrb[0].mxu0
    %v2066 = vadd.f32 0.0, %v2065
    %v2067 = vpop.f32.mrb[0].mxu0
    %2068 = vdwg.mxu0
    %v2069 = vmul.f32 %v1996, 0.1
    %v2070 = vmul.f32 %v2066, 0.1
    %vm2071 = vcmask 64512
    %v2072 = vsel %vm2071, %v2069, -inf
    %2073 = vmax.xlane.f32.xlu0 %v2072
    %v2074 = vpop.xlane.xlu0 %2073
    %v2075 = vsel %vm2071, %v2070, -inf
    %2076 = vmax.xlane.f32.xlu0 %v2075
    %v2077 = vpop.xlane.xlu0 %2076
    %v2078 = vsub.f32 %v2069, %v2074
    %v2079 = vsub.f32 %v2070, %v2077
    %v2080 = vmul.f32 %v2078, 1.442695
    %v2081 = vpow.pop %v2080
    %v2082 = vmul.f32 %v2079, 1.442695
    %v2083 = vpow.pop %v2082
    %v2084 = vsel %vm2071, %v2081, 0.0
    %2085 = vadd.xlane.f32.xlu0 %v2084
    %v2086 = vpop.xlane.xlu0 %2085
    %v2087 = vsel %vm2071, %v2083, 0.0
    %2088 = vadd.xlane.f32.xlu0 %v2087
    %v2089 = vpop.xlane.xlu0 %2088
    %v2090 = vrcp.pop %v2086
    %v2091 = vrcp.pop %v2089
    %v2092 = vmul.f32 %v2081, %v2090
    %v2093 = vmul.f32 %v2083, %v2091
    %v2095 = vsel %vm2071, %v2092, 0
    %2097 = vmatprep.subr.mxu0 0.0
    %2098 = vmatpush1.msra.mxu0 %v491
    %2099 = vmatprep.subr.mxu0 0.0
    %2100 = vmatpush1.msra.mxu0 0.0
    %2101 = vmatprep.subr.mxu0 0.0
    %2102 = vmatpush1.msra.mxu0 0.0
    %2103 = vmatprep.subr.mxu0 0.0
    %2104 = vmatpush1.msra.mxu0 0.0
    %2105 = vmatprep.subr.mxu0 0.0
    %2106 = vmatpush1.msra.mxu0 0.0
    %2107 = vmatprep.subr.mxu0 0.0
    %2108 = vmatpush1.msra.mxu0 0.0
    %2109 = vmatprep.subr.mxu0 0.0
    %2110 = vmatpush1.msra.mxu0 0.0
    %2111 = vmatprep.subr.mxu0 0.0
    %2112 = vmatpush1.msra.mxu0 0.0
    %2113 = vmatprep.subr.mxu0 0.0
    %2114 = vmatpush1.msra.mxu0 0.0
    %2115 = vmatprep.subr.mxu0 0.0
    %2116 = vmatpush1.msra.mxu0 0.0
    %2117 = vmatprep.subr.mxu0 0.0
    %2118 = vmatpush1.msra.mxu0 0.0
    %2119 = vmatprep.subr.mxu0 0.0
    %2120 = vmatpush1.msra.mxu0 0.0
    %2121 = vmatprep.subr.mxu0 0.0
    %2122 = vmatpush1.msra.mxu0 0.0
    %2123 = vmatprep.subr.mxu0 0.0
    %2124 = vmatpush1.msra.mxu0 0.0
    %2125 = vmatprep.subr.mxu0 0.0
    %2126 = vmatpush1.msra.mxu0 0.0
    %2127 = vmatprep.subr.mxu0 0.0
    %2128 = vmatpush1.msra.mxu0 0.0
    %2129 = vmatprep.subr.mxu0 0.0
    %2130 = vmatpush1.msra.mxu0 0.0
    %2131 = vmatprep.subr.mxu0 0.0
    %2132 = vmatpush1.msra.mxu0 0.0
    %2133 = vmatprep.subr.mxu0 0.0
    %2134 = vmatpush1.msra.mxu0 0.0
    %2135 = vmatprep.subr.mxu0 0.0
    %2136 = vmatpush1.msra.mxu0 0.0
    %2137 = vmatprep.subr.mxu0 0.0
    %2138 = vmatpush1.msra.mxu0 0.0
    %2139 = vmatprep.subr.mxu0 0.0
    %2140 = vmatpush1.msra.mxu0 0.0
    %2141 = vmatprep.subr.mxu0 0.0
    %2142 = vmatpush1.msra.mxu0 0.0
    %2143 = vmatprep.subr.mxu0 0.0
    %2144 = vmatpush1.msra.mxu0 0.0
    %2145 = vmatprep.subr.mxu0 0.0
    %2146 = vmatpush1.msra.mxu0 0.0
    %2147 = vmatprep.subr.mxu0 0.0
    %2148 = vmatpush1.msra.mxu0 0.0
    %2149 = vmatprep.subr.mxu0 0.0
    %2150 = vmatpush1.msra.mxu0 0.0
    %2151 = vmatprep.subr.mxu0 0.0
    %2152 = vmatpush1.msra.mxu0 0.0
    %2153 = vmatprep.subr.mxu0 0.0
    %2154 = vmatpush1.msra.mxu0 0.0
    %2155 = vmatprep.subr.mxu0 0.0
    %2156 = vmatpush1.msra.mxu0 0.0
    %2157 = vmatprep.subr.mxu0 0.0
    %2158 = vmatpush1.msra.mxu0 0.0
    %2159 = vmatprep.subr.mxu0 0.0
    %2160 = vmatpush1.msra.mxu0 0.0
    %2161 = vmatprep.mubr.f32.mxu0 0.0
    %2162 = vmatmul.mubr.f32.gmra.mrb[0].mxu0 %v2095
    %v2163 = vpop.f32.mrb[0].mxu0
    %v2164 = vadd.f32 0.0, %v2163
    %v2165 = vpop.f32.mrb[0].mxu0
    %2166 = vdwg.mxu0
    %v2168 = vsel %vm2071, %v2093, 0
    %2170 = vmatprep.subr.mxu0 0.0
    %2171 = vmatpush1.msra.mxu0 %v495
    %2172 = vmatprep.subr.mxu0 0.0
    %2173 = vmatpush1.msra.mxu0 0.0
    %2174 = vmatprep.subr.mxu0 0.0
    %2175 = vmatpush1.msra.mxu0 0.0
    %2176 = vmatprep.subr.mxu0 0.0
    %2177 = vmatpush1.msra.mxu0 0.0
    %2178 = vmatprep.subr.mxu0 0.0
    %2179 = vmatpush1.msra.mxu0 0.0
    %2180 = vmatprep.subr.mxu0 0.0
    %2181 = vmatpush1.msra.mxu0 0.0
    %2182 = vmatprep.subr.mxu0 0.0
    %2183 = vmatpush1.msra.mxu0 0.0
    %2184 = vmatprep.subr.mxu0 0.0
    %2185 = vmatpush1.msra.mxu0 0.0
    %2186 = vmatprep.subr.mxu0 0.0
    %2187 = vmatpush1.msra.mxu0 0.0
    %2188 = vmatprep.subr.mxu0 0.0
    %2189 = vmatpush1.msra.mxu0 0.0
    %2190 = vmatprep.subr.mxu0 0.0
    %2191 = vmatpush1.msra.mxu0 0.0
    %2192 = vmatprep.subr.mxu0 0.0
    %2193 = vmatpush1.msra.mxu0 0.0
    %2194 = vmatprep.subr.mxu0 0.0
    %2195 = vmatpush1.msra.mxu0 0.0
    %2196 = vmatprep.subr.mxu0 0.0
    %2197 = vmatpush1.msra.mxu0 0.0
    %2198 = vmatprep.subr.mxu0 0.0
    %2199 = vmatpush1.msra.mxu0 0.0
    %2200 = vmatprep.subr.mxu0 0.0
    %2201 = vmatpush1.msra.mxu0 0.0
    %2202 = vmatprep.subr.mxu0 0.0
    %2203 = vmatpush1.msra.mxu0 0.0
    %2204 = vmatprep.subr.mxu0 0.0
    %2205 = vmatpush1.msra.mxu0 0.0
    %2206 = vmatprep.subr.mxu0 0.0
    %2207 = vmatpush1.msra.mxu0 0.0
    %2208 = vmatprep.subr.mxu0 0.0
    %2209 = vmatpush1.msra.mxu0 0.0
    %2210 = vmatprep.subr.mxu0 0.0
    %2211 = vmatpush1.msra.mxu0 0.0
    %2212 = vmatprep.subr.mxu0 0.0
    %2213 = vmatpush1.msra.mxu0 0.0
    %2214 = vmatprep.subr.mxu0 0.0
    %2215 = vmatpush1.msra.mxu0 0.0
    %2216 = vmatprep.subr.mxu0 0.0
    %2217 = vmatpush1.msra.mxu0 0.0
    %2218 = vmatprep.subr.mxu0 0.0
    %2219 = vmatpush1.msra.mxu0 0.0
    %2220 = vmatprep.subr.mxu0 0.0
    %2221 = vmatpush1.msra.mxu0 0.0
    %2222 = vmatprep.subr.mxu0 0.0
    %2223 = vmatpush1.msra.mxu0 0.0
    %2224 = vmatprep.subr.mxu0 0.0
    %2225 = vmatpush1.msra.mxu0 0.0
    %2226 = vmatprep.subr.mxu0 0.0
    %2227 = vmatpush1.msra.mxu0 0.0
    %2228 = vmatprep.subr.mxu0 0.0
    %2229 = vmatpush1.msra.mxu0 0.0
    %2230 = vmatprep.subr.mxu0 0.0
    %2231 = vmatpush1.msra.mxu0 0.0
    %2232 = vmatprep.subr.mxu0 0.0
    %2233 = vmatpush1.msra.mxu0 0.0
    %2234 = vmatprep.mubr.f32.mxu0 0.0
    %2235 = vmatmul.mubr.f32.gmra.mrb[0].mxu0 %v2168
    %v2236 = vpop.f32.mrb[0].mxu0
    %v2237 = vadd.f32 0.0, %v2236
    %v2238 = vpop.f32.mrb[0].mxu0
    %2239 = vdwg.mxu0
    %v2240 = vld [vmem:[%s5] sm:$0x1]
    %v2242 = vlaneseq
    %v2243 = vshrl.u32 %v2242, 7
    %v2244 = vsub.s32 0, %v2243
    %v2245 = vrot.slane %v2240, %v2244
    %v2247 = vmul.f32 %v2164, %v2245
    %v2248 = vmul.f32 %v2237, %v2245
    %2249 = vadd.xlane.f32.xlu0 %v2247
    %v2250 = vpop.xlane.xlu0 %2249
    %2251 = vadd.xlane.f32.xlu0 %v2248
    %v2252 = vpop.xlane.xlu0 %2251
    %v2253 = vld [vmem:[#allocation3] sm:$0x1]
    %v2255 = vlaneseq
    %v2256 = vshrl.u32 %v2255, 7
    %v2257 = vsub.s32 0, %v2256
    %v2258 = vrot.slane %v2253, %v2257
    %v2260 = vadd.f32 %v2250, %v2258
    %v2261 = vadd.f32 %v2252, %v2258
    %v2262 = vxor.u32 %v2260, 2147483648
    %v2263 = vxor.u32 %v2261, 2147483648
    %v2264 = vmul.f32 %v2262, 1.442695
    %v2265 = vpow.pop %v2264
    %v2266 = vmul.f32 %v2263, 1.442695
    %v2267 = vpow.pop %v2266
    %v2268 = vadd.f32 %v2265, 1.0
    %v2269 = vadd.f32 %v2267, 1.0
    %v2270 = vrcp.pop %v2268
    %v2271 = vmul.f32 1.0, %v2270
    %v2272 = vrcp.pop %v2269
    %v2273 = vmul.f32 1.0, %v2272
    %v2274 = vld [vmem:[%s8] sm:$0xff]
    %v2275 = vld [vmem:[%s8 + $0x8] sm:$0xff]
    %v2276 = vmul.f32 %v2271, 2.0
    %v2277 = vmul.f32 %v2273, 2.0
    %v2278 = vsub.f32 %v2276, 1.0
    %v2279 = vsub.f32 %v2277, 1.0
    %v2280 = vadd.f32 %v2278, %v2274
    %v2281 = vadd.f32 %v2279, %v2275
    %v2282 = vxor.u32 %v2280, 2147483648
    %v2283 = vxor.u32 %v2281, 2147483648
    %v2284 = vmul.f32 %v2282, 1.442695
    %v2285 = vpow.pop %v2284
    %v2286 = vmul.f32 %v2283, 1.442695
    %v2287 = vpow.pop %v2286
    %v2288 = vadd.f32 %v2285, 1.0
    %v2289 = vadd.f32 %v2287, 1.0
    %v2290 = vrcp.pop %v2288
    %v2291 = vmul.f32 1.0, %v2290
    %v2292 = vrcp.pop %v2289
    %v2293 = vmul.f32 1.0, %v2292
    %vm2294 = vcmp.gt.f32.partialorder %v2291, 0.2
    %vm2295 = vcmp.gt.f32.partialorder %v2293, 0.2
    %v2296 = vsel %vm2294, 1.0, 0.0
    %v2297 = vsel %vm2295, 1.0, 0.0
    %v2298 = vpack.c.bf16 %v1928, %v1927
    %v2299 = vld [vmem:[#allocation9] sm:$0xff]
    %v2300 = vld [vmem:[#allocation9 + $0x8] sm:$0xf]
    %v2301 = vld [vmem:[#allocation9 + $0xc] sm:$0xff]
    %v2302 = vld [vmem:[#allocation9 + $0x14] sm:$0xf]
    %v2303 = vld [vmem:[#allocation9 + $0x18] sm:$0xff]
    %v2304 = vld [vmem:[#allocation9 + $0x20] sm:$0xf]
    %v2305 = vld [vmem:[#allocation9 + $0x24] sm:$0xff]
    %v2306 = vld [vmem:[#allocation9 + $0x2c] sm:$0xf]
    %v2307 = vld [vmem:[#allocation9 + $0x30] sm:$0xff]
    %v2308 = vld [vmem:[#allocation9 + $0x38] sm:$0xf]
    %v2309 = vld [vmem:[#allocation9 + $0x3c] sm:$0xff]
    %v2310 = vld [vmem:[#allocation9 + $0x44] sm:$0xf]
    %v2311 = vld [vmem:[#allocation9 + $0x48] sm:$0xff]
    %v2312 = vld [vmem:[#allocation9 + $0x50] sm:$0xf]
    %v2313 = vld [vmem:[#allocation9 + $0x54] sm:$0xff]
    %v2314 = vld [vmem:[#allocation9 + $0x5c] sm:$0xf]
    %v2315 = vld [vmem:[#allocation9 + $0x60] sm:$0xff]
    %v2316 = vld [vmem:[#allocation9 + $0x68] sm:$0xf]
    %v2317 = vld [vmem:[#allocation9 + $0x6c] sm:$0xff]
    %v2318 = vld [vmem:[#allocation9 + $0x74] sm:$0xf]
    %v2319 = vld [vmem:[#allocation9 + $0x78] sm:$0xff]
    %v2320 = vld [vmem:[#allocation9 + $0x80] sm:$0xf]
    %v2321 = vld [vmem:[#allocation9 + $0x84] sm:$0xff]
    %v2322 = vld [vmem:[#allocation9 + $0x8c] sm:$0xf]
    %v2323 = vld [vmem:[#allocation9 + $0x90] sm:$0xff]
    %v2324 = vld [vmem:[#allocation9 + $0x98] sm:$0xf]
    %v2325 = vld [vmem:[#allocation9 + $0x9c] sm:$0xff]
    %v2326 = vld [vmem:[#allocation9 + $0xa4] sm:$0xf]
    %v2327 = vld [vmem:[#allocation9 + $0xa8] sm:$0xff]
    %v2328 = vld [vmem:[#allocation9 + $0xb0] sm:$0xf]
    %v2329 = vld [vmem:[#allocation9 + $0xb4] sm:$0xff]
    %v2330 = vld [vmem:[#allocation9 + $0xbc] sm:$0xf]
    %v2363 = vunpack.c.l.b16 %v2299
    %v2364 = vunpack.c.h.b16 %v2299
    %v2365 = vunpack.c.l.b16 %v2300
    %v2366 = vunpack.c.l.b16 %v2301
    %v2367 = vunpack.c.h.b16 %v2301
    %v2368 = vunpack.c.l.b16 %v2302
    %v2369 = vunpack.c.l.b16 %v2303
    %v2370 = vunpack.c.h.b16 %v2303
    %v2371 = vunpack.c.l.b16 %v2304
    %v2372 = vunpack.c.l.b16 %v2305
    %v2373 = vunpack.c.h.b16 %v2305
    %v2374 = vunpack.c.l.b16 %v2306
    %v2375 = vunpack.c.l.b16 %v2307
    %v2376 = vunpack.c.h.b16 %v2307
    %v2377 = vunpack.c.l.b16 %v2308
    %v2378 = vunpack.c.l.b16 %v2309
    %v2379 = vunpack.c.h.b16 %v2309
    %v2380 = vunpack.c.l.b16 %v2310
    %v2381 = vunpack.c.l.b16 %v2311
    %v2382 = vunpack.c.h.b16 %v2311
    %v2383 = vunpack.c.l.b16 %v2312
    %v2384 = vunpack.c.l.b16 %v2313
    %v2385 = vunpack.c.h.b16 %v2313
    %v2386 = vunpack.c.l.b16 %v2314
    %v2387 = vunpack.c.l.b16 %v2315
    %v2388 = vunpack.c.h.b16 %v2315
    %v2389 = vunpack.c.l.b16 %v2316
    %v2390 = vunpack.c.l.b16 %v2317
    %v2391 = vunpack.c.h.b16 %v2317
    %v2392 = vunpack.c.l.b16 %v2318
    %v2393 = vunpack.c.l.b16 %v2319
    %v2394 = vunpack.c.h.b16 %v2319
    %v2395 = vunpack.c.l.b16 %v2320
    %v2396 = vunpack.c.l.b16 %v2321
    %v2397 = vunpack.c.h.b16 %v2321
    %v2398 = vunpack.c.l.b16 %v2322
    %v2399 = vunpack.c.l.b16 %v2323
    %v2400 = vunpack.c.h.b16 %v2323
    %v2401 = vunpack.c.l.b16 %v2324
    %v2402 = vunpack.c.l.b16 %v2325
    %v2403 = vunpack.c.h.b16 %v2325
    %v2404 = vunpack.c.l.b16 %v2326
    %v2405 = vunpack.c.l.b16 %v2327
    %v2406 = vunpack.c.h.b16 %v2327
    %v2407 = vunpack.c.l.b16 %v2328
    %v2408 = vunpack.c.l.b16 %v2329
    %v2409 = vunpack.c.h.b16 %v2329
    %v2410 = vunpack.c.l.b16 %v2330
    %v2411 = vpack.c.b16 %v2366, %v2363
    %v2412 = vpack.c.b16 %v2367, %v2364
    %v2413 = vpack.c.b16 %v2368, %v2365
    %v2414 = vpack.c.b16 %v2372, %v2369
    %v2415 = vpack.c.b16 %v2373, %v2370
    %v2416 = vpack.c.b16 %v2374, %v2371
    %v2417 = vpack.c.b16 %v2378, %v2375
    %v2418 = vpack.c.b16 %v2379, %v2376
    %v2419 = vpack.c.b16 %v2380, %v2377
    %v2420 = vpack.c.b16 %v2384, %v2381
    %v2421 = vpack.c.b16 %v2385, %v2382
    %v2422 = vpack.c.b16 %v2386, %v2383
    %v2423 = vpack.c.b16 %v2390, %v2387
    %v2424 = vpack.c.b16 %v2391, %v2388
    %v2425 = vpack.c.b16 %v2392, %v2389
    %v2426 = vpack.c.b16 %v2396, %v2393
    %v2427 = vpack.c.b16 %v2397, %v2394
    %v2428 = vpack.c.b16 %v2398, %v2395
    %v2429 = vpack.c.b16 %v2402, %v2399
    %v2430 = vpack.c.b16 %v2403, %v2400
    %v2431 = vpack.c.b16 %v2404, %v2401
    %v2432 = vpack.c.b16 %v2408, %v2405
    %v2433 = vpack.c.b16 %v2409, %v2406
    %v2434 = vpack.c.b16 %v2410, %v2407
    %2459 = vmatprep.subr.bf16.mxu0 %v2412
    %2460 = vmatpush1.bf16.msra.mxu0 %v2411
    %2461 = vmatprep.subr.bf16.mxu0 %v2415
    %2462 = vmatpush1.bf16.msra.mxu0 %v2414
    %2463 = vmatprep.subr.bf16.mxu0 %v2418
    %2464 = vmatpush1.bf16.msra.mxu0 %v2417
    %2465 = vmatprep.subr.bf16.mxu0 %v2421
    %2466 = vmatpush1.bf16.msra.mxu0 %v2420
    %2467 = vmatprep.subr.bf16.mxu0 %v2424
    %2468 = vmatpush1.bf16.msra.mxu0 %v2423
    %2469 = vmatprep.subr.bf16.mxu0 %v2427
    %2470 = vmatpush1.bf16.msra.mxu0 %v2426
    %2471 = vmatprep.subr.bf16.mxu0 %v2430
    %2472 = vmatpush1.bf16.msra.mxu0 %v2429
    %2473 = vmatprep.subr.bf16.mxu0 %v2433
    %2474 = vmatpush1.bf16.msra.mxu0 %v2432
    %2475 = vmatprep.subr.bf16.mxu0 0
    %2476 = vmatpush1.bf16.msra.mxu0 0
    %2477 = vmatprep.subr.bf16.mxu0 0
    %2478 = vmatpush1.bf16.msra.mxu0 0
    %2479 = vmatprep.subr.bf16.mxu0 0
    %2480 = vmatpush1.bf16.msra.mxu0 0
    %2481 = vmatprep.subr.bf16.mxu0 0
    %2482 = vmatpush1.bf16.msra.mxu0 0
    %2483 = vmatprep.subr.bf16.mxu0 0
    %2484 = vmatpush1.bf16.msra.mxu0 0
    %2485 = vmatprep.subr.bf16.mxu0 0
    %2486 = vmatpush1.bf16.msra.mxu0 0
    %2487 = vmatprep.subr.bf16.mxu0 0
    %2488 = vmatpush1.bf16.msra.mxu0 0
    %2489 = vmatprep.subr.bf16.mxu0 0
    %2490 = vmatpush1.bf16.msra.mxu0 0
    %2491 = vmatprep.mubr.bf16.mxu0 0
    %2492 = vmatmul.mubr.bf16.gmra.mrb[0].mxu0 %v2298
    %v2493 = vpop.f32.mrb[0].mxu0
    %v2494 = vadd.f32 0.0, %v2493
    %v2495 = vpop.f32.mrb[0].mxu0
    %v2496 = vadd.f32 0.0, %v2495
    %v2497 = vpop.f32.mrb[0].mxu0
    %v2498 = vadd.f32 0.0, %v2497
    %v2499 = vpop.f32.mrb[0].mxu0
    %v2500 = vadd.f32 0.0, %v2499
    %2501 = vdwg.mxu0
    %2502 = vmatprep.subr.bf16.mxu0 0
    %2503 = vmatpush1.bf16.msra.mxu0 %v2413
    %2504 = vmatprep.subr.bf16.mxu0 0
    %2505 = vmatpush1.bf16.msra.mxu0 %v2416
    %2506 = vmatprep.subr.bf16.mxu0 0
    %2507 = vmatpush1.bf16.msra.mxu0 %v2419
    %2508 = vmatprep.subr.bf16.mxu0 0
    %2509 = vmatpush1.bf16.msra.mxu0 %v2422
    %2510 = vmatprep.subr.bf16.mxu0 0
    %2511 = vmatpush1.bf16.msra.mxu0 %v2425
    %2512 = vmatprep.subr.bf16.mxu0 0
    %2513 = vmatpush1.bf16.msra.mxu0 %v2428
    %2514 = vmatprep.subr.bf16.mxu0 0
    %2515 = vmatpush1.bf16.msra.mxu0 %v2431
    %2516 = vmatprep.subr.bf16.mxu0 0
    %2517 = vmatpush1.bf16.msra.mxu0 %v2434
    %2518 = vmatprep.subr.bf16.mxu0 0
    %2519 = vmatpush1.bf16.msra.mxu0 0
    %2520 = vmatprep.subr.bf16.mxu0 0
    %2521 = vmatpush1.bf16.msra.mxu0 0
    %2522 = vmatprep.subr.bf16.mxu0 0
    %2523 = vmatpush1.bf16.msra.mxu0 0
    %2524 = vmatprep.subr.bf16.mxu0 0
    %2525 = vmatpush1.bf16.msra.mxu0 0
    %2526 = vmatprep.subr.bf16.mxu0 0
    %2527 = vmatpush1.bf16.msra.mxu0 0
    %2528 = vmatprep.subr.bf16.mxu0 0
    %2529 = vmatpush1.bf16.msra.mxu0 0
    %2530 = vmatprep.subr.bf16.mxu0 0
    %2531 = vmatpush1.bf16.msra.mxu0 0
    %2532 = vmatprep.subr.bf16.mxu0 0
    %2533 = vmatpush1.bf16.msra.mxu0 0
    %2534 = vmatprep.mubr.bf16.mxu0 0
    %2535 = vmatmul.mubr.bf16.gmra.mrb[0].mxu0 %v2298
    %v2536 = vpop.f32.mrb[0].mxu0
    %v2537 = vadd.f32 0.0, %v2536
    %v2538 = vpop.f32.mrb[0].mxu0
    %v2539 = vpop.f32.mrb[0].mxu0
    %v2540 = vadd.f32 0.0, %v2539
    %v2541 = vpop.f32.mrb[0].mxu0
    %2542 = vdwg.mxu0
    %2544 = vset.pattern.permute.xlu0 0
    %2545 = vperm.xlu0 %2544, %v2296
    %v2546 = vpop.permute.xlu0 %2545
    %2549 = vset.pattern.permute.xlu0 0
    %2550 = vperm.xlu0 %2549, %v2297
    %v2551 = vpop.permute.xlu0 %2550
    %v2553 = vmul.f32 %v2537, %v2546
    %v2554 = vmul.f32 %v2540, %v2551
    %2555 = vmatprep.subr.mxu0 0.0
    %2556 = vmatpush1.xpose.msra.mxu0 %v2496
    %2557 = vmatprep.subr.mxu0 0.0
    %2558 = vmatpush1.xpose.msra.mxu0 0.0
    %2559 = vmatprep.subr.mxu0 0.0
    %2560 = vmatpush1.xpose.msra.mxu0 0.0
    %2561 = vmatprep.subr.mxu0 0.0
    %2562 = vmatpush1.xpose.msra.mxu0 0.0
    %2563 = vmatprep.subr.mxu0 0.0
    %2564 = vmatpush1.xpose.msra.mxu0 0.0
    %2565 = vmatprep.subr.mxu0 0.0
    %2566 = vmatpush1.xpose.msra.mxu0 0.0
    %2567 = vmatprep.subr.mxu0 0.0
    %2568 = vmatpush1.xpose.msra.mxu0 0.0
    %2569 = vmatprep.subr.mxu0 0.0
    %2570 = vmatpush1.xpose.msra.mxu0 0.0
    %2571 = vmatprep.subr.mxu0 0.0
    %2572 = vmatpush1.xpose.msra.mxu0 0.0
    %2573 = vmatprep.subr.mxu0 0.0
    %2574 = vmatpush1.xpose.msra.mxu0 0.0
    %2575 = vmatprep.subr.mxu0 0.0
    %2576 = vmatpush1.xpose.msra.mxu0 0.0
    %2577 = vmatprep.subr.mxu0 0.0
    %2578 = vmatpush1.xpose.msra.mxu0 0.0
    %2579 = vmatprep.subr.mxu0 0.0
    %2580 = vmatpush1.xpose.msra.mxu0 0.0
    %2581 = vmatprep.subr.mxu0 0.0
    %2582 = vmatpush1.xpose.msra.mxu0 0.0
    %2583 = vmatprep.subr.mxu0 0.0
    %2584 = vmatpush1.xpose.msra.mxu0 0.0
    %2585 = vmatprep.subr.mxu0 0.0
    %2586 = vmatpush1.xpose.msra.mxu0 0.0
    %2587 = vmatprep.subr.mxu0 0.0
    %2588 = vmatpush1.xpose.msra.mxu0 0.0
    %2589 = vmatprep.subr.mxu0 0.0
    %2590 = vmatpush1.xpose.msra.mxu0 0.0
    %2591 = vmatprep.subr.mxu0 0.0
    %2592 = vmatpush1.xpose.msra.mxu0 0.0
    %2593 = vmatprep.subr.mxu0 0.0
    %2594 = vmatpush1.xpose.msra.mxu0 0.0
    %2595 = vmatprep.subr.mxu0 0.0
    %2596 = vmatpush1.xpose.msra.mxu0 0.0
    %2597 = vmatprep.subr.mxu0 0.0
    %2598 = vmatpush1.xpose.msra.mxu0 0.0
    %2599 = vmatprep.subr.mxu0 0.0
    %2600 = vmatpush1.xpose.msra.mxu0 0.0
    %2601 = vmatprep.subr.mxu0 0.0
    %2602 = vmatpush1.xpose.msra.mxu0 0.0
    %2603 = vmatprep.subr.mxu0 0.0
    %2604 = vmatpush1.xpose.msra.mxu0 0.0
    %2605 = vmatprep.subr.mxu0 0.0
    %2606 = vmatpush1.xpose.msra.mxu0 0.0
    %2607 = vmatprep.subr.mxu0 0.0
    %2608 = vmatpush1.xpose.msra.mxu0 0.0
    %2609 = vmatprep.subr.mxu0 0.0
    %2610 = vmatpush1.xpose.msra.mxu0 0.0
    %2611 = vmatprep.subr.mxu0 0.0
    %2612 = vmatpush1.xpose.msra.mxu0 0.0
    %2613 = vmatprep.subr.mxu0 0.0
    %2614 = vmatpush1.xpose.msra.mxu0 0.0
    %2615 = vmatprep.subr.mxu0 0.0
    %2616 = vmatpush1.xpose.msra.mxu0 0.0
    %2617 = vmatprep.subr.mxu0 0.0
    %2618 = vmatpush1.xpose.msra.mxu0 0.0
    %2619 = vmatprep.mubr.f32.mxu0 0.0
    %2620 = vmatmul.mubr.f32.gmra.mrb[0].mxu0 %v2494
    %v2621 = vpop.f32.mrb[0].mxu0
    %v2622 = vadd.f32 0.0, %v2621
    %v2623 = vpop.f32.mrb[0].mxu0
    %2624 = vdwg.mxu0
    %2625 = vmatprep.subr.mxu0 0.0
    %2626 = vmatpush1.xpose.msra.mxu0 %v2500
    %2627 = vmatprep.subr.mxu0 0.0
    %2628 = vmatpush1.xpose.msra.mxu0 0.0
    %2629 = vmatprep.subr.mxu0 0.0
    %2630 = vmatpush1.xpose.msra.mxu0 0.0
    %2631 = vmatprep.subr.mxu0 0.0
    %2632 = vmatpush1.xpose.msra.mxu0 0.0
    %2633 = vmatprep.subr.mxu0 0.0
    %2634 = vmatpush1.xpose.msra.mxu0 0.0
    %2635 = vmatprep.subr.mxu0 0.0
    %2636 = vmatpush1.xpose.msra.mxu0 0.0
    %2637 = vmatprep.subr.mxu0 0.0
    %2638 = vmatpush1.xpose.msra.mxu0 0.0
    %2639 = vmatprep.subr.mxu0 0.0
    %2640 = vmatpush1.xpose.msra.mxu0 0.0
    %2641 = vmatprep.subr.mxu0 0.0
    %2642 = vmatpush1.xpose.msra.mxu0 0.0
    %2643 = vmatprep.subr.mxu0 0.0
    %2644 = vmatpush1.xpose.msra.mxu0 0.0
    %2645 = vmatprep.subr.mxu0 0.0
    %2646 = vmatpush1.xpose.msra.mxu0 0.0
    %2647 = vmatprep.subr.mxu0 0.0
    %2648 = vmatpush1.xpose.msra.mxu0 0.0
    %2649 = vmatprep.subr.mxu0 0.0
    %2650 = vmatpush1.xpose.msra.mxu0 0.0
    %2651 = vmatprep.subr.mxu0 0.0
    %2652 = vmatpush1.xpose.msra.mxu0 0.0
    %2653 = vmatprep.subr.mxu0 0.0
    %2654 = vmatpush1.xpose.msra.mxu0 0.0
    %2655 = vmatprep.subr.mxu0 0.0
    %2656 = vmatpush1.xpose.msra.mxu0 0.0
    %2657 = vmatprep.subr.mxu0 0.0
    %2658 = vmatpush1.xpose.msra.mxu0 0.0
    %2659 = vmatprep.subr.mxu0 0.0
    %2660 = vmatpush1.xpose.msra.mxu0 0.0
    %2661 = vmatprep.subr.mxu0 0.0
    %2662 = vmatpush1.xpose.msra.mxu0 0.0
    %2663 = vmatprep.subr.mxu0 0.0
    %2664 = vmatpush1.xpose.msra.mxu0 0.0
    %2665 = vmatprep.subr.mxu0 0.0
    %2666 = vmatpush1.xpose.msra.mxu0 0.0
    %2667 = vmatprep.subr.mxu0 0.0
    %2668 = vmatpush1.xpose.msra.mxu0 0.0
    %2669 = vmatprep.subr.mxu0 0.0
    %2670 = vmatpush1.xpose.msra.mxu0 0.0
    %2671 = vmatprep.subr.mxu0 0.0
    %2672 = vmatpush1.xpose.msra.mxu0 0.0
    %2673 = vmatprep.subr.mxu0 0.0
    %2674 = vmatpush1.xpose.msra.mxu0 0.0
    %2675 = vmatprep.subr.mxu0 0.0
    %2676 = vmatpush1.xpose.msra.mxu0 0.0
    %2677 = vmatprep.subr.mxu0 0.0
    %2678 = vmatpush1.xpose.msra.mxu0 0.0
    %2679 = vmatprep.subr.mxu0 0.0
    %2680 = vmatpush1.xpose.msra.mxu0 0.0
    %2681 = vmatprep.subr.mxu0 0.0
    %2682 = vmatpush1.xpose.msra.mxu0 0.0
    %2683 = vmatprep.subr.mxu0 0.0
    %2684 = vmatpush1.xpose.msra.mxu0 0.0
    %2685 = vmatprep.subr.mxu0 0.0
    %2686 = vmatpush1.xpose.msra.mxu0 0.0
    %2687 = vmatprep.subr.mxu0 0.0
    %2688 = vmatpush1.xpose.msra.mxu0 0.0
    %2689 = vmatprep.mubr.f32.mxu0 0.0
    %2690 = vmatmul.mubr.f32.gmra.mrb[0].mxu0 %v2498
    %v2691 = vpop.f32.mrb[0].mxu0
    %v2692 = vadd.f32 0.0, %v2691
    %v2693 = vpop.f32.mrb[0].mxu0
    %2694 = vdwg.mxu0
    %v2695 = vmul.f32 %v2622, 0.1
    %v2696 = vmul.f32 %v2692, 0.1
    %v2697 = vsel %vm2071, %v2695, -inf
    %2698 = vmax.xlane.f32.xlu0 %v2697
    %v2699 = vpop.xlane.xlu0 %2698
    %v2700 = vsel %vm2071, %v2696, -inf
    %2701 = vmax.xlane.f32.xlu0 %v2700
    %v2702 = vpop.xlane.xlu0 %2701
    %v2703 = vsub.f32 %v2695, %v2699
    %v2704 = vsub.f32 %v2696, %v2702
    %v2705 = vmul.f32 %v2703, 1.442695
    %v2706 = vpow.pop %v2705
    %v2707 = vmul.f32 %v2704, 1.442695
    %v2708 = vpow.pop %v2707
    %v2709 = vsel %vm2071, %v2706, 0.0
    %2710 = vadd.xlane.f32.xlu0 %v2709
    %v2711 = vpop.xlane.xlu0 %2710
    %v2712 = vsel %vm2071, %v2708, 0.0
    %2713 = vadd.xlane.f32.xlu0 %v2712
    %v2714 = vpop.xlane.xlu0 %2713
    %v2715 = vrcp.pop %v2711
    %v2716 = vrcp.pop %v2714
    %v2717 = vmul.f32 %v2706, %v2715
    %v2718 = vmul.f32 %v2708, %v2716
    %v2720 = vsel %vm2071, %v2717, 0
    %2722 = vmatprep.subr.mxu0 0.0
    %2723 = vmatpush1.msra.mxu0 %v2553
    %2724 = vmatprep.subr.mxu0 0.0
    %2725 = vmatpush1.msra.mxu0 0.0
    %2726 = vmatprep.subr.mxu0 0.0
    %2727 = vmatpush1.msra.mxu0 0.0
    %2728 = vmatprep.subr.mxu0 0.0
    %2729 = vmatpush1.msra.mxu0 0.0
    %2730 = vmatprep.subr.mxu0 0.0
    %2731 = vmatpush1.msra.mxu0 0.0
    %2732 = vmatprep.subr.mxu0 0.0
    %2733 = vmatpush1.msra.mxu0 0.0
    %2734 = vmatprep.subr.mxu0 0.0
    %2735 = vmatpush1.msra.mxu0 0.0
    %2736 = vmatprep.subr.mxu0 0.0
    %2737 = vmatpush1.msra.mxu0 0.0
    %2738 = vmatprep.subr.mxu0 0.0
    %2739 = vmatpush1.msra.mxu0 0.0
    %2740 = vmatprep.subr.mxu0 0.0
    %2741 = vmatpush1.msra.mxu0 0.0
    %2742 = vmatprep.subr.mxu0 0.0
    %2743 = vmatpush1.msra.mxu0 0.0
    %2744 = vmatprep.subr.mxu0 0.0
    %2745 = vmatpush1.msra.mxu0 0.0
    %2746 = vmatprep.subr.mxu0 0.0
    %2747 = vmatpush1.msra.mxu0 0.0
    %2748 = vmatprep.subr.mxu0 0.0
    %2749 = vmatpush1.msra.mxu0 0.0
    %2750 = vmatprep.subr.mxu0 0.0
    %2751 = vmatpush1.msra.mxu0 0.0
    %2752 = vmatprep.subr.mxu0 0.0
    %2753 = vmatpush1.msra.mxu0 0.0
    %2754 = vmatprep.subr.mxu0 0.0
    %2755 = vmatpush1.msra.mxu0 0.0
    %2756 = vmatprep.subr.mxu0 0.0
    %2757 = vmatpush1.msra.mxu0 0.0
    %2758 = vmatprep.subr.mxu0 0.0
    %2759 = vmatpush1.msra.mxu0 0.0
    %2760 = vmatprep.subr.mxu0 0.0
    %2761 = vmatpush1.msra.mxu0 0.0
    %2762 = vmatprep.subr.mxu0 0.0
    %2763 = vmatpush1.msra.mxu0 0.0
    %2764 = vmatprep.subr.mxu0 0.0
    %2765 = vmatpush1.msra.mxu0 0.0
    %2766 = vmatprep.subr.mxu0 0.0
    %2767 = vmatpush1.msra.mxu0 0.0
    %2768 = vmatprep.subr.mxu0 0.0
    %2769 = vmatpush1.msra.mxu0 0.0
    %2770 = vmatprep.subr.mxu0 0.0
    %2771 = vmatpush1.msra.mxu0 0.0
    %2772 = vmatprep.subr.mxu0 0.0
    %2773 = vmatpush1.msra.mxu0 0.0
    %2774 = vmatprep.subr.mxu0 0.0
    %2775 = vmatpush1.msra.mxu0 0.0
    %2776 = vmatprep.subr.mxu0 0.0
    %2777 = vmatpush1.msra.mxu0 0.0
    %2778 = vmatprep.subr.mxu0 0.0
    %2779 = vmatpush1.msra.mxu0 0.0
    %2780 = vmatprep.subr.mxu0 0.0
    %2781 = vmatpush1.msra.mxu0 0.0
    %2782 = vmatprep.subr.mxu0 0.0
    %2783 = vmatpush1.msra.mxu0 0.0
    %2784 = vmatprep.subr.mxu0 0.0
    %2785 = vmatpush1.msra.mxu0 0.0
    %2786 = vmatprep.mubr.f32.mxu0 0.0
    %2787 = vmatmul.mubr.f32.gmra.mrb[0].mxu0 %v2720
    %v2788 = vpop.f32.mrb[0].mxu0
    %v2789 = vadd.f32 0.0, %v2788
    %v2790 = vpop.f32.mrb[0].mxu0
    %2791 = vdwg.mxu0
    %v2793 = vsel %vm2071, %v2718, 0
    %2795 = vmatprep.subr.mxu0 0.0
    %2796 = vmatpush1.msra.mxu0 %v2554
    %2797 = vmatprep.subr.mxu0 0.0
    %2798 = vmatpush1.msra.mxu0 0.0
    %2799 = vmatprep.subr.mxu0 0.0
    %2800 = vmatpush1.msra.mxu0 0.0
    %2801 = vmatprep.subr.mxu0 0.0
    %2802 = vmatpush1.msra.mxu0 0.0
    %2803 = vmatprep.subr.mxu0 0.0
    %2804 = vmatpush1.msra.mxu0 0.0
    %2805 = vmatprep.subr.mxu0 0.0
    %2806 = vmatpush1.msra.mxu0 0.0
    %2807 = vmatprep.subr.mxu0 0.0
    %2808 = vmatpush1.msra.mxu0 0.0
    %2809 = vmatprep.subr.mxu0 0.0
    %2810 = vmatpush1.msra.mxu0 0.0
    %2811 = vmatprep.subr.mxu0 0.0
    %2812 = vmatpush1.msra.mxu0 0.0
    %2813 = vmatprep.subr.mxu0 0.0
    %2814 = vmatpush1.msra.mxu0 0.0
    %2815 = vmatprep.subr.mxu0 0.0
    %2816 = vmatpush1.msra.mxu0 0.0
    %2817 = vmatprep.subr.mxu0 0.0
    %2818 = vmatpush1.msra.mxu0 0.0
    %2819 = vmatprep.subr.mxu0 0.0
    %2820 = vmatpush1.msra.mxu0 0.0
    %2821 = vmatprep.subr.mxu0 0.0
    %2822 = vmatpush1.msra.mxu0 0.0
    %2823 = vmatprep.subr.mxu0 0.0
    %2824 = vmatpush1.msra.mxu0 0.0
    %2825 = vmatprep.subr.mxu0 0.0
    %2826 = vmatpush1.msra.mxu0 0.0
    %2827 = vmatprep.subr.mxu0 0.0
    %2828 = vmatpush1.msra.mxu0 0.0
    %2829 = vmatprep.subr.mxu0 0.0
    %2830 = vmatpush1.msra.mxu0 0.0
    %2831 = vmatprep.subr.mxu0 0.0
    %2832 = vmatpush1.msra.mxu0 0.0
    %2833 = vmatprep.subr.mxu0 0.0
    %2834 = vmatpush1.msra.mxu0 0.0
    %2835 = vmatprep.subr.mxu0 0.0
    %2836 = vmatpush1.msra.mxu0 0.0
    %2837 = vmatprep.subr.mxu0 0.0
    %2838 = vmatpush1.msra.mxu0 0.0
    %2839 = vmatprep.subr.mxu0 0.0
    %2840 = vmatpush1.msra.mxu0 0.0
    %2841 = vmatprep.subr.mxu0 0.0
    %2842 = vmatpush1.msra.mxu0 0.0
    %2843 = vmatprep.subr.mxu0 0.0
    %2844 = vmatpush1.msra.mxu0 0.0
    %2845 = vmatprep.subr.mxu0 0.0
    %2846 = vmatpush1.msra.mxu0 0.0
    %2847 = vmatprep.subr.mxu0 0.0
    %2848 = vmatpush1.msra.mxu0 0.0
    %2849 = vmatprep.subr.mxu0 0.0
    %2850 = vmatpush1.msra.mxu0 0.0
    %2851 = vmatprep.subr.mxu0 0.0
    %2852 = vmatpush1.msra.mxu0 0.0
    %2853 = vmatprep.subr.mxu0 0.0
    %2854 = vmatpush1.msra.mxu0 0.0
    %2855 = vmatprep.subr.mxu0 0.0
    %2856 = vmatpush1.msra.mxu0 0.0
    %2857 = vmatprep.subr.mxu0 0.0
    %2858 = vmatpush1.msra.mxu0 0.0
    %2859 = vmatprep.mubr.f32.mxu0 0.0
    %2860 = vmatmul.mubr.f32.gmra.mrb[0].mxu0 %v2793
    %v2861 = vpop.f32.mrb[0].mxu0
    %v2862 = vadd.f32 0.0, %v2861
    %v2863 = vpop.f32.mrb[0].mxu0
    %2864 = vdwg.mxu0
    %2865 = vst [vmem:[#allocation10] sm:$0xff] %v2789
    %2866 = vst [vmem:[#allocation10 + $0x8] sm:$0xff] %v2862
    // Predicated region
    $region50: #{tpu_custom_call.1} parent=1 // pred_check
      _
    $region51: #{tpu_custom_call.1} parent=1 // pred_check_branch
      %2868 = sbr.rel (0) target = $region53
    $region52: #{tpu_custom_call.1} parent=1 // pred_region
      %s2870 = ssub.s32 256, 256
      %2871 = vsyncadd [#allocation6], %s2870
      %s2872 = sshll.u32 [#allocation10], 4
      %s2873 = int_to_ptr.vmem [resolvable:$true] %s2872
      %2878 = dma.vmem_to_hbm [thread:$0]  %s2873, 256, %s9, [#allocation6], 128, 128, 8
    $region53: #{tpu_custom_call.1} parent=1 // pred_fallthru
      _
    // Predicated region
    $region54: #{tpu_custom_call.1} parent=1 // pred_check
      _
    $region55: #{tpu_custom_call.1} parent=1 // pred_check_branch
      %2880 = sbr.rel (0) target = $region57
    $region56: #{tpu_custom_call.1} parent=1 // pred_region
      %2881 = dma.done [#allocation6], 256
    $region57: #{tpu_custom_call.1} parent=1 // pred_fallthru
      _
    %2882 = vsyncpa [#allocation5], 1
    %2883 = vsyncpa [#allocation8], 1
    %2884 = vsyncpa [#allocation6], 1

</llo_original>
